<compile_context>
chip_gen: v7x
topology: tpu7x:2x2x1
jax: 0.10.0
libtpu: 0.0.40
codegen_flags: <defaults>
</compile_context>

<pallas_src>
import functools
import math

import numpy as np
import jax
import jax.numpy as jnp
from jax import lax
from jax.experimental import pallas as pl
from jax.experimental.pallas import tpu as pltpu


# ----------------------------- configuration ------------------------------
D_MODEL = 32
N_HEADS = 4
HEAD_DIM = D_MODEL // N_HEADS
DIM_FF = 64
N_LEVELS = 2
N_POINTS = 2              # n_deformable_points
N_LAYERS = 2
MAX_TOKENS_SA = 10
MAX_TOKENS_NON_SA = 18
LAYER_FILTER_RATIO = [1.0, 0.75]
ROPE_SPATIAL_THETA = 100.0
ROPE_LEVEL_THETA = 10.0
LN_EPS = 1e-5

# level 0 is the coarse level, the LAST level is the full-scale one
LEVEL_SHAPES_PY = [(8, 8), (16, 16)]

N_OFF_COLS = N_HEADS * N_LEVELS * N_POINTS * 2   # 32
N_AW_COLS = N_HEADS * N_LEVELS * N_POINTS        # 16


# ----------------------------- static tables -------------------------------
def _build_static_tables():
    # RoPE rotate-half permutation (per head), folded into the QKV weights.
    rot = np.zeros((D_MODEL, D_MODEL), np.float32)
    hdh = HEAD_DIM // 2
    for h in range(N_HEADS):
        for j in range(hdh):
            rot[h * HEAD_DIM + hdh + j, h * HEAD_DIM + j] = 1.0
            rot[h * HEAD_DIM + j, h * HEAD_DIM + hdh + j] = 1.0
    # per-column 1/level_shape and (row/col) selector for the flattened offsets.
    inv = np.zeros((1, N_OFF_COLS), np.float32)
    col_d = np.zeros((N_OFF_COLS,), np.int32)
    for c in range(N_OFF_COLS):
        d = c % 2
        lv = (c // (2 * N_POINTS)) % N_LEVELS
        inv[0, c] = 1.0 / LEVEL_SHAPES_PY[lv][d]
        col_d[c] = d
    # group matrix for the per-head (L*P)-way softmax (group sums via one matmul).
    ng = N_LEVELS * N_POINTS
    gmat = np.zeros((N_AW_COLS, N_AW_COLS), np.float32)
    for i in range(N_AW_COLS):
        for j in range(N_AW_COLS):
            if i // ng == j // ng:
                gmat[i, j] = 1.0
    return rot, inv, col_d, gmat


_ROT_PERM_NP, _INV_SHAPE_NP, _COL_D_NP, _GROUP_MAT_NP = _build_static_tables()


# ----------------------------- Pallas kernels ------------------------------
def _sa_block_kernel(x_ref, cos_ref, sin_ref, m_ref, g_ref, b_ref,
                     w_stack_ref, w_out_ref, o_ref, *, scale):
    """Fused pre-norm multilevel self-attention block with RoPE (one batch)."""
    x = x_ref[0].astype(jnp.float32)                   # [S, D]
    cos = cos_ref[0]                                   # [S, D]
    sin = sin_ref[0]                                   # [S, D] (sign baked in)
    m = m_ref[0]                                       # [1, S] additive key mask

    mu = jnp.mean(x, axis=-1, keepdims=True)
    var = jnp.mean(jnp.square(x - mu), axis=-1, keepdims=True)
    xn = (x - mu) * lax.rsqrt(var + LN_EPS) * g_ref[...] + b_ref[...]

    q = jnp.dot(xn, w_stack_ref[0], preferred_element_type=jnp.float32)
    k = jnp.dot(xn, w_stack_ref[1], preferred_element_type=jnp.float32)
    v = jnp.dot(xn, w_stack_ref[2], preferred_element_type=jnp.float32)
    q_sw = jnp.dot(xn, w_stack_ref[3], preferred_element_type=jnp.float32)
    k_sw = jnp.dot(xn, w_stack_ref[4], preferred_element_type=jnp.float32)
    q = q * cos + q_sw * sin                           # rotate-half RoPE
    k = k * cos + k_sw * sin

    outs = []
    for h in range(N_HEADS):                           # unrolled at trace time
        sl = slice(h * HEAD_DIM, (h + 1) * HEAD_DIM)
        qh, kh, vh = q[:, sl], k[:, sl], v[:, sl]
        s = lax.dot_general(qh, kh, (((1,), (1,)), ((), ())),
                            preferred_element_type=jnp.float32) * scale + m
        s = s - jnp.max(s, axis=-1, keepdims=True)
        p = jnp.exp(s)
        p = p * pl.reciprocal(jnp.sum(p, axis=-1, keepdims=True), approx=True)
        outs.append(jnp.dot(p, vh, preferred_element_type=jnp.float32))
    o = jnp.concatenate(outs, axis=-1)                 # [S, D]
    o = jnp.dot(o, w_out_ref[...], preferred_element_type=jnp.float32)
    o_ref[0] = (x + o).astype(o_ref.dtype)             # dropout = identity (eval)


def pallas_sa_block(x, cos, sin, mask, ln_g, ln_b, w_stack, w_out):
    """x/cos/sin: [B,S,D]; mask: [B,1,S]; w_stack: [5,D,D]; w_out: [D,D]."""
    B, S, D = x.shape
    kern = functools.partial(_sa_block_kernel, scale=1.0 / math.sqrt(HEAD_DIM))
    bsd = pl.BlockSpec((1, S, D), lambda b: (b, 0, 0))
    return pl.pallas_call(
        kern,
        out_shape=jax.ShapeDtypeStruct((B, S, D), x.dtype),
        grid=(B,),
        in_specs=[bsd, bsd, bsd,
                  pl.BlockSpec((1, 1, S), lambda b: (b, 0, 0)),
                  pl.BlockSpec((1, D), lambda b: (0, 0)),
                  pl.BlockSpec((1, D), lambda b: (0, 0)),
                  pl.BlockSpec((5, D, D), lambda b: (0, 0, 0)),
                  pl.BlockSpec((D, D), lambda b: (0, 0))],
        out_specs=bsd,
        compiler_params=pltpu.CompilerParams(dimension_semantics=("parallel",)),
    )(x, cos, sin, mask, ln_g, ln_b, w_stack, w_out)


def _msd_head_kernel(q_ref, ref_ref, g_ref, b_ref, w_ref, bias_ref,
                     inv_ref, gmat_ref, o_ref):
    """Fused LN + offset/attn-weight projection + sampling-loc + grouped softmax."""
    x = q_ref[...].astype(jnp.float32)                 # [N, D]
    mu = jnp.mean(x, axis=-1, keepdims=True)
    var = jnp.mean(jnp.square(x - mu), axis=-1, keepdims=True)
    xn = (x - mu) * lax.rsqrt(var + LN_EPS) * g_ref[...] + b_ref[...]

    proj = jnp.dot(xn, w_ref[...], preferred_element_type=jnp.float32) + bias_ref[...]
    loc = ref_ref[...] + proj[:, :N_OFF_COLS] * inv_ref[...]      # normalized sample locs
    logits = proj[:, N_OFF_COLS:]                                 # [N, H*L*P]
    logits = logits - jnp.max(logits, axis=-1, keepdims=True)
    e = jnp.exp(logits)
    ssum = jnp.dot(e, gmat_ref[...], preferred_element_type=jnp.float32)
    aw = e * pl.reciprocal(ssum, approx=True)                     # per-head softmax
    o_ref[...] = jnp.concatenate([loc, aw], axis=-1).astype(o_ref.dtype)


def pallas_msd_head(qflat, ref_tile, ln_g, ln_b, w_oa, b_oa, inv_vec, gmat):
    n = qflat.shape[0]
    n_out = N_OFF_COLS + N_AW_COLS
    return pl.pallas_call(
        _msd_head_kernel,
        out_shape=jax.ShapeDtypeStruct((n, n_out), jnp.float32),
    )(qflat, ref_tile, ln_g, ln_b, w_oa, b_oa, inv_vec, gmat)


def _msd_out_ffn_kernel(ws_ref, q_ref, wvo_ref, g_ref, b_ref,
                        w1_ref, b1_ref, w2_ref, b2_ref, o_ref):
    """Fused (value-proj+head-reduce+out-proj matmul) + residual + pre-norm FFN."""
    q = q_ref[...].astype(jnp.float32)                 # [N, D]
    y1 = q + jnp.dot(ws_ref[...], wvo_ref[...], preferred_element_type=jnp.float32)

    mu = jnp.mean(y1, axis=-1, keepdims=True)
    var = jnp.mean(jnp.square(y1 - mu), axis=-1, keepdims=True)
    xn = (y1 - mu) * lax.rsqrt(var + LN_EPS) * g_ref[...] + b_ref[...]
    h = jnp.dot(xn, w1_ref[...], preferred_element_type=jnp.float32) + b1_ref[...]
    # tanh-approx GELU  # TODO(synk): torch nn.GELU default is the exact erf variant
    h = 0.5 * h * (1.0 + jnp.tanh(0.7978845608028654 * (h + 0.044715 * h * h * h)))
    y2 = y1 + jnp.dot(h, w2_ref[...], preferred_element_type=jnp.float32) + b2_ref[...]
    o_ref[...] = y2.astype(o_ref.dtype)


def pallas_msd_out_ffn(ws_flat, qflat, w_val_out, ln_g, ln_b, w1, b1, w2, b2):
    n, d = qflat.shape
    return pl.pallas_call(
        _msd_out_ffn_kernel,
        out_shape=jax.ShapeDtypeStruct((n, d), jnp.float32),
    )(ws_flat, qflat, w_val_out, ln_g, ln_b, w1, b1, w2, b2)


# ----------------------------- JAX glue ops --------------------------------
def rope_tables(pos, lvl):
    """Multilevel RoPE tables, tiled to full width with rotate-half-within-head layout.

    # TODO(synk): exact emsim frequency-group pattern unavailable; pairs are split
    #             evenly between the two spatial dims with a level rotation added."""
    n_pairs = HEAD_DIM // 2
    half = n_pairs // 2
    inv_sp = 1.0 / (ROPE_SPATIAL_THETA ** (jnp.arange(half, dtype=jnp.float32) / half))
    inv_lv = 1.0 / (ROPE_LEVEL_THETA ** (jnp.arange(n_pairs, dtype=jnp.float32) / n_pairs))
    ang_y = pos[..., 0:1] * inv_sp                        # [B,S,half]
    ang_x = pos[..., 1:2] * inv_sp
    ang = jnp.concatenate([ang_y, ang_x], -1) + lvl[..., None] * inv_lv   # [B,S,n_pairs]
    cos = jnp.cos(ang)
    sin = jnp.sin(ang)
    cos_h = jnp.concatenate([cos, cos], -1)               # [B,S,Dh]
    sin_h = jnp.concatenate([-sin, sin], -1)              # sign baked for rotate-half
    cos_full = jnp.tile(cos_h, (1, 1, N_HEADS))           # [B,S,D]
    sin_full = jnp.tile(sin_h, (1, 1, N_HEADS))
    return cos_full, sin_full


def bilinear_sample(dense, b_of_n, loc):
    """Gather raw features at bilinear corners.  loc: [N,H,L,P,2] normalized."""
    n = loc.shape[0]
    samples = []
    for l in range(N_LEVELS):
        h_l, w_l = LEVEL_SHAPES_PY[l]
        pyx = loc[:, :, l] * jnp.asarray([h_l, w_l], jnp.float32) - 0.5   # [N,H,P,2]
        y, x = pyx[..., 0], pyx[..., 1]
        y0f, x0f = jnp.floor(y), jnp.floor(x)
        wy, wx = y - y0f, x - x0f
        acc = jnp.zeros((n, N_HEADS, N_POINTS, D_MODEL), jnp.float32)
        for dy, dx in ((0, 0), (0, 1), (1, 0), (1, 1)):
            yy = y0f + dy
            xx = x0f + dx
            w = (wy if dy else (1.0 - wy)) * (wx if dx else (1.0 - wx))
            inb = ((yy >= 0) & (yy < h_l) & (xx >= 0) & (xx < w_l)).astype(jnp.float32)
            yi = jnp.clip(yy, 0, h_l - 1).astype(jnp.int32)
            xi = jnp.clip(xx, 0, w_l - 1).astype(jnp.int32)
            v = dense[b_of_n[:, None, None], yi, xi, l]                   # [N,H,P,D]
            acc = acc + v * (w * inb)[..., None]
        samples.append(acc)
    return jnp.stack(samples, axis=2)                                     # [N,H,L,P,D]


def _prep_layer(p):
    """Fold RoPE permutation / value-proj / output-proj into static weight slabs."""
    w_qkv = p["sa"]["w_qkv"]
    w_q = w_qkv[:, :D_MODEL]
    w_k = w_qkv[:, D_MODEL:2 * D_MODEL]
    w_v = w_qkv[:, 2 * D_MODEL:]
    rot = jnp.asarray(_ROT_PERM_NP)
    w_stack = jnp.stack([w_q, w_k, w_v, w_q @ rot, w_k @ rot], axis=0)    # [5,D,D]

    w_oa = jnp.concatenate([p["ms"]["w_off"], p["ms"]["w_aw"]], axis=1)   # [D,48]
    b_oa = jnp.concatenate([p["ms"]["b_off"], p["ms"]["b_aw"]])[None, :]  # [1,48]

    # Exploit linearity: apply w_val AFTER bilinear sampling, folded with w_outp.
    blocks = []
    for s in range(N_HEADS * N_LEVELS * N_POINTS):
        h = s // (N_LEVELS * N_POINTS)
        blk = jnp.zeros((D_MODEL, D_MODEL), jnp.float32)
        blk = blk.at[:, h * HEAD_DIM:(h + 1) * HEAD_DIM].set(
            p["ms"]["w_val"][:, h * HEAD_DIM:(h + 1) * HEAD_DIM])
        blocks.append(blk)
    w_val_big = jnp.concatenate(blocks, axis=0)                           # [H*L*P*D, D]
    w_val_out = w_val_big @ p["ms"]["w_outp"]                             # [H*L*P*D, D]
    return dict(w_qkv_stack=w_stack, w_oa=w_oa, b_oa=b_oa, w_val_out=w_val_out)


# ----------------------------- full encoder (jit) ---------------------------
@functools.partial(jax.jit, static_argnames=("n_tokens",))
def encoder_forward(params, dense, tok_spatial, tok_level, tok_scores, n_tokens):
    """dense: [B,Hmax,Wmax,L,D] stacked feature maps (dense stand-in for the COO tensor).
    tok_spatial/level/scores: padded per-batch arrays ([-inf]-padded scores)."""
    B, Hmax, Wmax, L, D = dense.shape
    shapes_f = jnp.asarray(LEVEL_SHAPES_PY, jnp.float32)
    inv_vec = jnp.asarray(_INV_SHAPE_NP)
    gmat = jnp.asarray(_GROUP_MAT_NP)
    col_d = jnp.asarray(_COL_D_NP)
    bb_col = jnp.arange(B, dtype=jnp.int32)[:, None]

    for layer_idx in range(N_LAYERS):
        p = params["layers"][layer_idx]
        prep = _prep_layer(p)

        # ---- per-batch top-k token selection (static k per layer) ----------
        ratio = LAYER_FILTER_RATIO[layer_idx]
        batch_k = tuple(min(int(n_tokens[b] * ratio), MAX_TOKENS_NON_SA, n_tokens[b])
                        for b in range(B))
        K = max(batch_k)
        kvals, kidx = lax.top_k(tok_scores, K)                             # [B,K]
        valid = jnp.arange(K)[None, :] < jnp.asarray(batch_k)[:, None]     # [B,K]

        rr = jnp.take_along_axis(tok_spatial[..., 0], kidx, axis=1)
        cc = jnp.take_along_axis(tok_spatial[..., 1], kidx, axis=1)
        ll = jnp.take_along_axis(tok_level, kidx, axis=1)

        # gather query features from the stacked feature maps (batch_sparse_index)
        queries = dense[bb_col, rr, cc, ll] * valid[..., None]             # [B,K,D]

        # enhance-score predictor: tiny [.,D]@[D,1]; stays in XLA (needed before
        # SA token selection, so it cannot be folded into the SA kernel).
        sp_par = params["score_predictor"]
        electron = jnp.einsum("bkd,dr->bkr", queries, sp_par["w"])[..., 0] + sp_par["b"][0]
        token_scores = jnp.where(valid, electron + kvals, -jnp.inf)        # [B,K]

        # ---- self-attention on the top-`max_tokens_sa` tokens --------------
        sa_k = tuple(min(MAX_TOKENS_SA, batch_k[b]) for b in range(B))
        S = max(sa_k)
        _, sa_sel = lax.top_k(token_scores, S)                             # [B,S] in [0,K)
        sa_valid = jnp.arange(S)[None, :] < jnp.asarray(sa_k)[:, None]
        x_sa = jnp.take_along_axis(queries, sa_sel[..., None], axis=1) * sa_valid[..., None]
        pos_sa = jnp.stack([jnp.take_along_axis(rr, sa_sel, 1),
                            jnp.take_along_axis(cc, sa_sel, 1)], -1).astype(jnp.float32)
        lvl_sa = jnp.take_along_axis(ll, sa_sel, 1).astype(jnp.float32)
        cos_f, sin_f = rope_tables(pos_sa, lvl_sa)                         # [B,S,D]
        attn_mask = jnp.where(sa_valid, 0.0, -1e9)[:, None, :]             # [B,1,S]

        sa_out = pallas_sa_block(x_sa, cos_f, sin_f, attn_mask,
                                 p["sa"]["ln_g"], p["sa"]["ln_b"],
                                 prep["w_qkv_stack"], p["sa"]["w_out"])

        sel_safe = jnp.where(sa_valid, sa_sel, K)                          # OOB -> drop
        queries = queries.at[bb_col, sel_safe].set(sa_out, mode="drop")    # index_copy

        # ---- sparse multi-scale deformable attention ------------------------
        N = B * K
        qflat = queries.reshape(N, D)
        own_shape = shapes_f[ll]                                           # [B,K,2]
        refn = (jnp.stack([rr, cc], -1).astype(jnp.float32) + 0.5) / own_shape
        ref_tile = refn[..., col_d].reshape(N, N_OFF_COLS)                 # [N,32]

        slab = pallas_msd_head(qflat, ref_tile, p["ms"]["ln_g"], p["ms"]["ln_b"],
                               prep["w_oa"], prep["b_oa"], inv_vec, gmat)  # [N,48]
        loc = slab[:, :N_OFF_COLS].reshape(N, N_HEADS, N_LEVELS, N_POINTS, 2)
        aw = slab[:, N_OFF_COLS:].reshape(N, N_HEADS, N_LEVELS, N_POINTS)

        b_of_n = jnp.repeat(jnp.arange(B, dtype=jnp.int32), K)
        sampled = bilinear_sample(dense, b_of_n, loc)                      # [N,H,L,P,D]
        ws_flat = (sampled * aw[..., None]).reshape(N, -1)                 # [N, H*L*P*D]

        # TODO(synk): SparseNeighborhoodAttentionBlock disabled (use_neighborhood_attn=False)

        # ---- ms-deform output-proj + residual + FFN (one fused kernel) ------
        qnew = pallas_msd_out_ffn(ws_flat, qflat, prep["w_val_out"],
                                  p["ffn"]["ln_g"], p["ffn"]["ln_b"],
                                  p["ffn"]["w1"], p["ffn"]["b1"].reshape(1, -1),
                                  p["ffn"]["w2"], p["ffn"]["b2"].reshape(1, -1))
        queries = qnew.reshape(B, K, D)

        # ---- scatter updated queries back (scatter_to_sparse_tensor) --------
        rr_safe = jnp.where(valid, rr, Hmax)                               # OOB -> drop
        dense = dense.at[bb_col, rr_safe, cc, ll].set(queries, mode="drop")

    return dense, None   # background_embedding disabled


# ----------------------------- parameter init ------------------------------
def init_params(key):
    def w(k, shape, scale=0.05):
        return jax.random.normal(k, shape, jnp.float32) * scale

    layers = []
    for i in range(N_LAYERS):
        lk = jax.random.fold_in(key, i)
        ks = jax.random.split(lk, 10)
        layers.append({
            "sa": {
                "ln_g": jnp.ones((1, D_MODEL), jnp.float32),
                "ln_b": jnp.zeros((1, D_MODEL), jnp.float32),
                "w_qkv": w(ks[0], (D_MODEL, 3 * D_MODEL)),     # attn_proj_bias=False
                "w_out": w(ks[1], (D_MODEL, D_MODEL)),
            },
            "ms": {
                "ln_g": jnp.ones((1, D_MODEL), jnp.float32),
                "ln_b": jnp.zeros((1, D_MODEL), jnp.float32),
                "w_off": w(ks[2], (D_MODEL, N_HEADS * N_LEVELS * N_POINTS * 2), 0.01),
                "b_off": w(ks[3], (N_HEADS * N_LEVELS * N_POINTS * 2,), 0.5),
                "w_aw": w(ks[4], (D_MODEL, N_HEADS * N_LEVELS * N_POINTS)),
                "b_aw": jnp.zeros((N_HEADS * N_LEVELS * N_POINTS,), jnp.float32),
                "w_val": w(ks[5], (D_MODEL, D_MODEL)),          # bias=False
                "w_outp": w(ks[6], (D_MODEL, D_MODEL)),         # bias=False
            },
            "ffn": {
                "ln_g": jnp.ones((1, D_MODEL), jnp.float32),
                "ln_b": jnp.zeros((1, D_MODEL), jnp.float32),
                "w1": w(ks[7], (D_MODEL, DIM_FF)),
                "b1": jnp.zeros((DIM_FF,), jnp.float32),
                "w2": w(ks[8], (DIM_FF, D_MODEL)),
                "b2": jnp.zeros((D_MODEL,), jnp.float32),
            },
        })
    spk = jax.random.fold_in(key, 1000)
    score_predictor = {"w": w(spk, (D_MODEL, 1)), "b": jnp.zeros((1,), jnp.float32)}
    return {"layers": layers, "score_predictor": score_predictor}


# ----------------------------- example inputs ------------------------------
def build_inputs(key):
    B = 2
    # deterministic, duplicate-free sparse token coordinates per (batch, level)
    sp0 = np.array([[i, (3 * i + 2) % 8] for i in range(8)]
                   + [[i, (2 * i + 1) % 16] for i in range(12)], np.int32)
    lv0 = np.array([0] * 8 + [1] * 12, np.int32)
    sp1 = np.array([[i + 1, (2 * i + 1) % 8] for i in range(6)]
                   + [[i + 2, (5 * i) % 16] for i in range(10)], np.int32)
    lv1 = np.array([0] * 6 + [1] * 10, np.int32)
    spatial = [jnp.asarray(sp0), jnp.asarray(sp1)]
    level = [jnp.asarray(lv0), jnp.asarray(lv1)]
    n_tokens = [sp0.shape[0], sp1.shape[0]]

    k_feat, k_score = jax.random.split(key)
    feats, scores = [], []
    for b in range(B):
        feats.append(jax.random.normal(jax.random.fold_in(k_feat, b),
                                       (n_tokens[b], D_MODEL), jnp.float32))
        scores.append(jax.random.normal(jax.random.fold_in(k_score, b),
                                        (n_tokens[b],), jnp.float32))

    # dense stand-in for EMTransformerEncoder.stack_sparse_tensors output
    Hmax, Wmax = LEVEL_SHAPES_PY[-1]
    dense = jnp.zeros((B, Hmax, Wmax, N_LEVELS, D_MODEL), jnp.float32)
    for b in range(B):
        dense = dense.at[b, spatial[b][:, 0], spatial[b][:, 1], level[b]].set(feats[b])
    return dense, spatial, level, scores, n_tokens


def pad_token_inputs(spatial_list, level_list, score_list):
    """Pad per-batch token lists to static [B, Nmax, ...] arrays (scores -> -inf pad)."""
    B = len(spatial_list)
    Nmax = max(int(s.shape[0]) for s in spatial_list)
    sp = jnp.zeros((B, Nmax, 2), jnp.int32)
    lv = jnp.zeros((B, Nmax), jnp.int32)
    sc = jnp.full((B, Nmax), -jnp.inf, jnp.float32)
    for b in range(B):
        n = int(spatial_list[b].shape[0])
        sp = sp.at[b, :n].set(spatial_list[b])
        lv = lv.at[b, :n].set(level_list[b])
        sc = sc.at[b, :n].set(score_list[b])
    return sp, lv, sc


# --------------------------------- main -------------------------------------
if __name__ == "__main__":
    key = jax.random.PRNGKey(0)
    params = init_params(jax.random.fold_in(key, 7))
    dense, spatial, level, scores, n_tokens = build_inputs(jax.random.fold_in(key, 11))
    tok_sp, tok_lv, tok_sc = pad_token_inputs(spatial, level, scores)

    out_maps, background = encoder_forward(params, dense, tok_sp, tok_lv, tok_sc,
                                           n_tokens=tuple(n_tokens))
    out_maps = jax.block_until_ready(out_maps)

    assert out_maps.shape == dense.shape
    assert bool(jnp.all(jnp.isfinite(out_maps)))
    print("KERNEL_OK")
</pallas_src>

<mosaic_0001>
module attributes {stable_mosaic.version = 11 : i64} {
  func.func @_sa_block_kernel(%arg0: i32, %arg1: memref<1x10x32xf32, #tpu.memory_space<vmem>>, %arg2: memref<1x10x32xf32, #tpu.memory_space<vmem>>, %arg3: memref<1x10x32xf32, #tpu.memory_space<vmem>>, %arg4: memref<1x1x10xf32, #tpu.memory_space<vmem>>, %arg5: memref<1x32xf32, #tpu.memory_space<vmem>>, %arg6: memref<1x32xf32, #tpu.memory_space<vmem>>, %arg7: memref<5x32x32xf32, #tpu.memory_space<vmem>>, %arg8: memref<32x32xf32, #tpu.memory_space<vmem>>, %arg9: memref<1x10x32xf32, #tpu.memory_space<vmem>>) attributes {dimension_semantics = [#tpu.dimension_semantics<parallel>], iteration_bounds = array<i64: 2>, scalar_prefetch = 0 : i64, scratch_operands = 0 : i64, tpu.core_type = #tpu.core_type<tc>, window_params = [{transform_indices = @transform_0, window_bounds = array<i64: 1, 10, 32>}, {transform_indices = @transform_1, window_bounds = array<i64: 1, 10, 32>}, {transform_indices = @transform_2, window_bounds = array<i64: 1, 10, 32>}, {transform_indices = @transform_3, window_bounds = array<i64: 1, 1, 10>}, {pipeline_mode = #tpu.pipeline_mode<synchronous>, transform_indices = @transform_4, window_bounds = array<i64: 1, 32>}, {pipeline_mode = #tpu.pipeline_mode<synchronous>, transform_indices = @transform_5, window_bounds = array<i64: 1, 32>}, {pipeline_mode = #tpu.pipeline_mode<synchronous>, transform_indices = @transform_6, window_bounds = array<i64: 5, 32, 32>}, {pipeline_mode = #tpu.pipeline_mode<synchronous>, transform_indices = @transform_7, window_bounds = array<i64: 32, 32>}, {transform_indices = @transform_8, window_bounds = array<i64: 1, 10, 32>}]} {
    %c0 = arith.constant 0 : index
    %c0_0 = arith.constant 0 : index
    %c0_1 = arith.constant 0 : index
    %0 = vector.load %arg1[%c0, %c0_0, %c0_1] : memref<1x10x32xf32, #tpu.memory_space<vmem>>, vector<1x10x32xf32>
    %1 = vector.shape_cast %0 : vector<1x10x32xf32> to vector<10x32xf32>
    %c0_2 = arith.constant 0 : index
    %c0_3 = arith.constant 0 : index
    %c0_4 = arith.constant 0 : index
    %2 = vector.load %arg2[%c0_2, %c0_3, %c0_4] : memref<1x10x32xf32, #tpu.memory_space<vmem>>, vector<1x10x32xf32>
    %3 = vector.shape_cast %2 : vector<1x10x32xf32> to vector<10x32xf32>
    %c0_5 = arith.constant 0 : index
    %c0_6 = arith.constant 0 : index
    %c0_7 = arith.constant 0 : index
    %4 = vector.load %arg3[%c0_5, %c0_6, %c0_7] : memref<1x10x32xf32, #tpu.memory_space<vmem>>, vector<1x10x32xf32>
    %5 = vector.shape_cast %4 : vector<1x10x32xf32> to vector<10x32xf32>
    %c0_8 = arith.constant 0 : index
    %c0_9 = arith.constant 0 : index
    %c0_10 = arith.constant 0 : index
    %6 = vector.load %arg4[%c0_8, %c0_9, %c0_10] : memref<1x1x10xf32, #tpu.memory_space<vmem>>, vector<1x1x10xf32>
    %7 = vector.shape_cast %6 : vector<1x1x10xf32> to vector<1x10xf32>
    %cst = arith.constant dense<0.000000e+00> : vector<10xf32>
    %8 = vector.multi_reduction <add>, %1, %cst [1] : vector<10x32xf32> to vector<10xf32>
    %9 = vector.shape_cast %8 : vector<10xf32> to vector<10x1xf32>
    %cst_11 = arith.constant 3.200000e+01 : f32
    %10 = vector.broadcast %cst_11 : f32 to vector<10x1xf32>
    %11 = arith.divf %9, %10 : vector<10x1xf32>
    %12 = vector.broadcast %11 : vector<10x1xf32> to vector<10x32xf32>
    %13 = arith.subf %1, %12 : vector<10x32xf32>
    %14 = arith.mulf %13, %13 : vector<10x32xf32>
    %cst_12 = arith.constant dense<0.000000e+00> : vector<10xf32>
    %15 = vector.multi_reduction <add>, %14, %cst_12 [1] : vector<10x32xf32> to vector<10xf32>
    %16 = vector.shape_cast %15 : vector<10xf32> to vector<10x1xf32>
    %cst_13 = arith.constant 3.200000e+01 : f32
    %17 = vector.broadcast %cst_13 : f32 to vector<10x1xf32>
    %18 = arith.divf %16, %17 : vector<10x1xf32>
    %19 = vector.broadcast %11 : vector<10x1xf32> to vector<10x32xf32>
    %20 = arith.subf %1, %19 : vector<10x32xf32>
    %cst_14 = arith.constant 9.99999974E-6 : f32
    %21 = vector.broadcast %cst_14 : f32 to vector<10x1xf32>
    %22 = arith.addf %18, %21 : vector<10x1xf32>
    %23 = math.rsqrt %22 : vector<10x1xf32>
    %24 = vector.broadcast %23 : vector<10x1xf32> to vector<10x32xf32>
    %25 = arith.mulf %20, %24 : vector<10x32xf32>
    %c0_15 = arith.constant 0 : index
    %c0_16 = arith.constant 0 : index
    %26 = vector.load %arg5[%c0_15, %c0_16] : memref<1x32xf32, #tpu.memory_space<vmem>>, vector<1x32xf32>
    %27 = vector.broadcast %26 : vector<1x32xf32> to vector<10x32xf32>
    %28 = arith.mulf %25, %27 : vector<10x32xf32>
    %c0_17 = arith.constant 0 : index
    %c0_18 = arith.constant 0 : index
    %29 = vector.load %arg6[%c0_17, %c0_18] : memref<1x32xf32, #tpu.memory_space<vmem>>, vector<1x32xf32>
    %30 = vector.broadcast %29 : vector<1x32xf32> to vector<10x32xf32>
    %31 = arith.addf %28, %30 : vector<10x32xf32>
    %c0_19 = arith.constant 0 : index
    %c0_20 = arith.constant 0 : index
    %c0_21 = arith.constant 0 : index
    %32 = vector.load %arg7[%c0_19, %c0_20, %c0_21] : memref<5x32x32xf32, #tpu.memory_space<vmem>>, vector<1x32x32xf32>
    %33 = vector.shape_cast %32 : vector<1x32x32xf32> to vector<32x32xf32>
    %cst_22 = arith.constant dense<0.000000e+00> : vector<10x32xf32>
    %34 = tpu.matmul %31, %33, %cst_22 {dimension_numbers = #tpu.dot_dimension_numbers<[1], [0], [0], [1], [0, 0, 1, 1], [], []>} : vector<10x32xf32>, vector<32x32xf32>, vector<10x32xf32> -> vector<10x32xf32>
    %c1 = arith.constant 1 : index
    %c0_23 = arith.constant 0 : index
    %c0_24 = arith.constant 0 : index
    %35 = vector.load %arg7[%c1, %c0_23, %c0_24] : memref<5x32x32xf32, #tpu.memory_space<vmem>>, vector<1x32x32xf32>
    %36 = vector.shape_cast %35 : vector<1x32x32xf32> to vector<32x32xf32>
    %cst_25 = arith.constant dense<0.000000e+00> : vector<10x32xf32>
    %37 = tpu.matmul %31, %36, %cst_25 {dimension_numbers = #tpu.dot_dimension_numbers<[1], [0], [0], [1], [0, 0, 1, 1], [], []>} : vector<10x32xf32>, vector<32x32xf32>, vector<10x32xf32> -> vector<10x32xf32>
    %c2 = arith.constant 2 : index
    %c0_26 = arith.constant 0 : index
    %c0_27 = arith.constant 0 : index
    %38 = vector.load %arg7[%c2, %c0_26, %c0_27] : memref<5x32x32xf32, #tpu.memory_space<vmem>>, vector<1x32x32xf32>
    %39 = vector.shape_cast %38 : vector<1x32x32xf32> to vector<32x32xf32>
    %cst_28 = arith.constant dense<0.000000e+00> : vector<10x32xf32>
    %40 = tpu.matmul %31, %39, %cst_28 {dimension_numbers = #tpu.dot_dimension_numbers<[1], [0], [0], [1], [0, 0, 1, 1], [], []>} : vector<10x32xf32>, vector<32x32xf32>, vector<10x32xf32> -> vector<10x32xf32>
    %c3 = arith.constant 3 : index
    %c0_29 = arith.constant 0 : index
    %c0_30 = arith.constant 0 : index
    %41 = vector.load %arg7[%c3, %c0_29, %c0_30] : memref<5x32x32xf32, #tpu.memory_space<vmem>>, vector<1x32x32xf32>
    %42 = vector.shape_cast %41 : vector<1x32x32xf32> to vector<32x32xf32>
    %cst_31 = arith.constant dense<0.000000e+00> : vector<10x32xf32>
    %43 = tpu.matmul %31, %42, %cst_31 {dimension_numbers = #tpu.dot_dimension_numbers<[1], [0], [0], [1], [0, 0, 1, 1], [], []>} : vector<10x32xf32>, vector<32x32xf32>, vector<10x32xf32> -> vector<10x32xf32>
    %c4 = arith.constant 4 : index
    %c0_32 = arith.constant 0 : index
    %c0_33 = arith.constant 0 : index
    %44 = vector.load %arg7[%c4, %c0_32, %c0_33] : memref<5x32x32xf32, #tpu.memory_space<vmem>>, vector<1x32x32xf32>
    %45 = vector.shape_cast %44 : vector<1x32x32xf32> to vector<32x32xf32>
    %cst_34 = arith.constant dense<0.000000e+00> : vector<10x32xf32>
    %46 = tpu.matmul %31, %45, %cst_34 {dimension_numbers = #tpu.dot_dimension_numbers<[1], [0], [0], [1], [0, 0, 1, 1], [], []>} : vector<10x32xf32>, vector<32x32xf32>, vector<10x32xf32> -> vector<10x32xf32>
    %47 = arith.mulf %34, %3 : vector<10x32xf32>
    %48 = arith.mulf %43, %5 : vector<10x32xf32>
    %49 = arith.addf %47, %48 : vector<10x32xf32>
    %50 = arith.mulf %37, %3 : vector<10x32xf32>
    %51 = arith.mulf %46, %5 : vector<10x32xf32>
    %52 = arith.addf %50, %51 : vector<10x32xf32>
    %53 = vector.extract_strided_slice %49 {offsets = [0, 0], sizes = [10, 8], strides = [1, 1]} : vector<10x32xf32> to vector<10x8xf32>
    %54 = vector.extract_strided_slice %52 {offsets = [0, 0], sizes = [10, 8], strides = [1, 1]} : vector<10x32xf32> to vector<10x8xf32>
    %55 = vector.extract_strided_slice %40 {offsets = [0, 0], sizes = [10, 8], strides = [1, 1]} : vector<10x32xf32> to vector<10x8xf32>
    %cst_35 = arith.constant dense<0.000000e+00> : vector<10x10xf32>
    %56 = tpu.matmul %53, %54, %cst_35 {dimension_numbers = #tpu.dot_dimension_numbers<[1], [1], [0], [0], [0, 0, 1, 0], [], []>} : vector<10x8xf32>, vector<10x8xf32>, vector<10x10xf32> -> vector<10x10xf32>
    %cst_36 = arith.constant 0.353553385 : f32
    %57 = vector.broadcast %cst_36 : f32 to vector<10x10xf32>
    %58 = arith.mulf %56, %57 : vector<10x10xf32>
    %59 = vector.broadcast %7 : vector<1x10xf32> to vector<10x10xf32>
    %60 = arith.addf %58, %59 : vector<10x10xf32>
    %cst_37 = arith.constant dense<0xFF800000> : vector<10xf32>
    %61 = vector.multi_reduction <maximumf>, %60, %cst_37 [1] : vector<10x10xf32> to vector<10xf32>
    %62 = vector.shape_cast %61 : vector<10xf32> to vector<10x1xf32>
    %63 = vector.broadcast %62 : vector<10x1xf32> to vector<10x10xf32>
    %64 = arith.subf %60, %63 : vector<10x10xf32>
    %65 = math.exp %64 : vector<10x10xf32>
    %cst_38 = arith.constant dense<0.000000e+00> : vector<10xf32>
    %66 = vector.multi_reduction <add>, %65, %cst_38 [1] : vector<10x10xf32> to vector<10xf32>
    %67 = vector.shape_cast %66 : vector<10xf32> to vector<10x1xf32>
    %68 = tpu.reciprocal %67 {approx = true} : vector<10x1xf32> -> vector<10x1xf32>
    %69 = vector.broadcast %68 : vector<10x1xf32> to vector<10x10xf32>
    %70 = arith.mulf %65, %69 : vector<10x10xf32>
    %cst_39 = arith.constant dense<0.000000e+00> : vector<10x8xf32>
    %71 = tpu.matmul %70, %55, %cst_39 {dimension_numbers = #tpu.dot_dimension_numbers<[1], [0], [0], [1], [0, 0, 1, 1], [], []>} : vector<10x10xf32>, vector<10x8xf32>, vector<10x8xf32> -> vector<10x8xf32>
    %72 = vector.extract_strided_slice %49 {offsets = [0, 8], sizes = [10, 8], strides = [1, 1]} : vector<10x32xf32> to vector<10x8xf32>
    %73 = vector.extract_strided_slice %52 {offsets = [0, 8], sizes = [10, 8], strides = [1, 1]} : vector<10x32xf32> to vector<10x8xf32>
    %74 = vector.extract_strided_slice %40 {offsets = [0, 8], sizes = [10, 8], strides = [1, 1]} : vector<10x32xf32> to vector<10x8xf32>
    %cst_40 = arith.constant dense<0.000000e+00> : vector<10x10xf32>
    %75 = tpu.matmul %72, %73, %cst_40 {dimension_numbers = #tpu.dot_dimension_numbers<[1], [1], [0], [0], [0, 0, 1, 0], [], []>} : vector<10x8xf32>, vector<10x8xf32>, vector<10x10xf32> -> vector<10x10xf32>
    %cst_41 = arith.constant 0.353553385 : f32
    %76 = vector.broadcast %cst_41 : f32 to vector<10x10xf32>
    %77 = arith.mulf %75, %76 : vector<10x10xf32>
    %78 = vector.broadcast %7 : vector<1x10xf32> to vector<10x10xf32>
    %79 = arith.addf %77, %78 : vector<10x10xf32>
    %cst_42 = arith.constant dense<0xFF800000> : vector<10xf32>
    %80 = vector.multi_reduction <maximumf>, %79, %cst_42 [1] : vector<10x10xf32> to vector<10xf32>
    %81 = vector.shape_cast %80 : vector<10xf32> to vector<10x1xf32>
    %82 = vector.broadcast %81 : vector<10x1xf32> to vector<10x10xf32>
    %83 = arith.subf %79, %82 : vector<10x10xf32>
    %84 = math.exp %83 : vector<10x10xf32>
    %cst_43 = arith.constant dense<0.000000e+00> : vector<10xf32>
    %85 = vector.multi_reduction <add>, %84, %cst_43 [1] : vector<10x10xf32> to vector<10xf32>
    %86 = vector.shape_cast %85 : vector<10xf32> to vector<10x1xf32>
    %87 = tpu.reciprocal %86 {approx = true} : vector<10x1xf32> -> vector<10x1xf32>
    %88 = vector.broadcast %87 : vector<10x1xf32> to vector<10x10xf32>
    %89 = arith.mulf %84, %88 : vector<10x10xf32>
    %cst_44 = arith.constant dense<0.000000e+00> : vector<10x8xf32>
    %90 = tpu.matmul %89, %74, %cst_44 {dimension_numbers = #tpu.dot_dimension_numbers<[1], [0], [0], [1], [0, 0, 1, 1], [], []>} : vector<10x10xf32>, vector<10x8xf32>, vector<10x8xf32> -> vector<10x8xf32>
    %91 = vector.extract_strided_slice %49 {offsets = [0, 16], sizes = [10, 8], strides = [1, 1]} : vector<10x32xf32> to vector<10x8xf32>
    %92 = vector.extract_strided_slice %52 {offsets = [0, 16], sizes = [10, 8], strides = [1, 1]} : vector<10x32xf32> to vector<10x8xf32>
    %93 = vector.extract_strided_slice %40 {offsets = [0, 16], sizes = [10, 8], strides = [1, 1]} : vector<10x32xf32> to vector<10x8xf32>
    %cst_45 = arith.constant dense<0.000000e+00> : vector<10x10xf32>
    %94 = tpu.matmul %91, %92, %cst_45 {dimension_numbers = #tpu.dot_dimension_numbers<[1], [1], [0], [0], [0, 0, 1, 0], [], []>} : vector<10x8xf32>, vector<10x8xf32>, vector<10x10xf32> -> vector<10x10xf32>
    %cst_46 = arith.constant 0.353553385 : f32
    %95 = vector.broadcast %cst_46 : f32 to vector<10x10xf32>
    %96 = arith.mulf %94, %95 : vector<10x10xf32>
    %97 = vector.broadcast %7 : vector<1x10xf32> to vector<10x10xf32>
    %98 = arith.addf %96, %97 : vector<10x10xf32>
    %cst_47 = arith.constant dense<0xFF800000> : vector<10xf32>
    %99 = vector.multi_reduction <maximumf>, %98, %cst_47 [1] : vector<10x10xf32> to vector<10xf32>
    %100 = vector.shape_cast %99 : vector<10xf32> to vector<10x1xf32>
    %101 = vector.broadcast %100 : vector<10x1xf32> to vector<10x10xf32>
    %102 = arith.subf %98, %101 : vector<10x10xf32>
    %103 = math.exp %102 : vector<10x10xf32>
    %cst_48 = arith.constant dense<0.000000e+00> : vector<10xf32>
    %104 = vector.multi_reduction <add>, %103, %cst_48 [1] : vector<10x10xf32> to vector<10xf32>
    %105 = vector.shape_cast %104 : vector<10xf32> to vector<10x1xf32>
    %106 = tpu.reciprocal %105 {approx = true} : vector<10x1xf32> -> vector<10x1xf32>
    %107 = vector.broadcast %106 : vector<10x1xf32> to vector<10x10xf32>
    %108 = arith.mulf %103, %107 : vector<10x10xf32>
    %cst_49 = arith.constant dense<0.000000e+00> : vector<10x8xf32>
    %109 = tpu.matmul %108, %93, %cst_49 {dimension_numbers = #tpu.dot_dimension_numbers<[1], [0], [0], [1], [0, 0, 1, 1], [], []>} : vector<10x10xf32>, vector<10x8xf32>, vector<10x8xf32> -> vector<10x8xf32>
    %110 = vector.extract_strided_slice %49 {offsets = [0, 24], sizes = [10, 8], strides = [1, 1]} : vector<10x32xf32> to vector<10x8xf32>
    %111 = vector.extract_strided_slice %52 {offsets = [0, 24], sizes = [10, 8], strides = [1, 1]} : vector<10x32xf32> to vector<10x8xf32>
    %112 = vector.extract_strided_slice %40 {offsets = [0, 24], sizes = [10, 8], strides = [1, 1]} : vector<10x32xf32> to vector<10x8xf32>
    %cst_50 = arith.constant dense<0.000000e+00> : vector<10x10xf32>
    %113 = tpu.matmul %110, %111, %cst_50 {dimension_numbers = #tpu.dot_dimension_numbers<[1], [1], [0], [0], [0, 0, 1, 0], [], []>} : vector<10x8xf32>, vector<10x8xf32>, vector<10x10xf32> -> vector<10x10xf32>
    %cst_51 = arith.constant 0.353553385 : f32
    %114 = vector.broadcast %cst_51 : f32 to vector<10x10xf32>
    %115 = arith.mulf %113, %114 : vector<10x10xf32>
    %116 = vector.broadcast %7 : vector<1x10xf32> to vector<10x10xf32>
    %117 = arith.addf %115, %116 : vector<10x10xf32>
    %cst_52 = arith.constant dense<0xFF800000> : vector<10xf32>
    %118 = vector.multi_reduction <maximumf>, %117, %cst_52 [1] : vector<10x10xf32> to vector<10xf32>
    %119 = vector.shape_cast %118 : vector<10xf32> to vector<10x1xf32>
    %120 = vector.broadcast %119 : vector<10x1xf32> to vector<10x10xf32>
    %121 = arith.subf %117, %120 : vector<10x10xf32>
    %122 = math.exp %121 : vector<10x10xf32>
    %cst_53 = arith.constant dense<0.000000e+00> : vector<10xf32>
    %123 = vector.multi_reduction <add>, %122, %cst_53 [1] : vector<10x10xf32> to vector<10xf32>
    %124 = vector.shape_cast %123 : vector<10xf32> to vector<10x1xf32>
    %125 = tpu.reciprocal %124 {approx = true} : vector<10x1xf32> -> vector<10x1xf32>
    %126 = vector.broadcast %125 : vector<10x1xf32> to vector<10x10xf32>
    %127 = arith.mulf %122, %126 : vector<10x10xf32>
    %cst_54 = arith.constant dense<0.000000e+00> : vector<10x8xf32>
    %128 = tpu.matmul %127, %112, %cst_54 {dimension_numbers = #tpu.dot_dimension_numbers<[1], [0], [0], [1], [0, 0, 1, 1], [], []>} : vector<10x10xf32>, vector<10x8xf32>, vector<10x8xf32> -> vector<10x8xf32>
    %129 = tpu.concatenate %71, %90, %109, %128 in 1 : vector<10x8xf32>, vector<10x8xf32>, vector<10x8xf32>, vector<10x8xf32> -> vector<10x32xf32>
    %c0_55 = arith.constant 0 : index
    %c0_56 = arith.constant 0 : index
    %130 = vector.load %arg8[%c0_55, %c0_56] : memref<32x32xf32, #tpu.memory_space<vmem>>, vector<32x32xf32>
    %cst_57 = arith.constant dense<0.000000e+00> : vector<10x32xf32>
    %131 = tpu.matmul %129, %130, %cst_57 {dimension_numbers = #tpu.dot_dimension_numbers<[1], [0], [0], [1], [0, 0, 1, 1], [], []>} : vector<10x32xf32>, vector<32x32xf32>, vector<10x32xf32> -> vector<10x32xf32>
    %132 = arith.addf %1, %131 : vector<10x32xf32>
    %c0_58 = arith.constant 0 : index
    %c0_59 = arith.constant 0 : index
    %c0_60 = arith.constant 0 : index
    %133 = vector.load %arg9[%c0_58, %c0_59, %c0_60] : memref<1x10x32xf32, #tpu.memory_space<vmem>>, vector<1x10x32xf32>
    %134 = vector.shape_cast %133 : vector<1x10x32xf32> to vector<10x32xf32>
    %135 = vector.shape_cast %132 : vector<10x32xf32> to vector<1x10x32xf32>
    tpu.vector_store %arg9[%c0_58, %c0_59, %c0_60], %135 {strides = array<i32>} : memref<1x10x32xf32, #tpu.memory_space<vmem>>, vector<1x10x32xf32>,
    return
  }
  func.func @transform_0(%arg0: i32) -> (i32, i32, i32) {
    %c0_i32 = arith.constant 0 : i32
    %c0_i32_0 = arith.constant 0 : i32
    %c0_i32_1 = arith.constant 0 : i32
    return %arg0, %c0_i32, %c0_i32_0 : i32, i32, i32
  }
  func.func @transform_1(%arg0: i32) -> (i32, i32, i32) {
    %c0_i32 = arith.constant 0 : i32
    %c0_i32_0 = arith.constant 0 : i32
    %c0_i32_1 = arith.constant 0 : i32
    return %arg0, %c0_i32, %c0_i32_0 : i32, i32, i32
  }
  func.func @transform_2(%arg0: i32) -> (i32, i32, i32) {
    %c0_i32 = arith.constant 0 : i32
    %c0_i32_0 = arith.constant 0 : i32
    %c0_i32_1 = arith.constant 0 : i32
    return %arg0, %c0_i32, %c0_i32_0 : i32, i32, i32
  }
  func.func @transform_3(%arg0: i32) -> (i32, i32, i32) {
    %c0_i32 = arith.constant 0 : i32
    %c0_i32_0 = arith.constant 0 : i32
    %c0_i32_1 = arith.constant 0 : i32
    return %arg0, %c0_i32, %c0_i32_0 : i32, i32, i32
  }
  func.func @transform_4(%arg0: i32) -> (i32, i32) {
    %c0_i32 = arith.constant 0 : i32
    %c0_i32_0 = arith.constant 0 : i32
    %c0_i32_1 = arith.constant 0 : i32
    return %c0_i32, %c0_i32_0 : i32, i32
  }
  func.func @transform_5(%arg0: i32) -> (i32, i32) {
    %c0_i32 = arith.constant 0 : i32
    %c0_i32_0 = arith.constant 0 : i32
    %c0_i32_1 = arith.constant 0 : i32
    return %c0_i32, %c0_i32_0 : i32, i32
  }
  func.func @transform_6(%arg0: i32) -> (i32, i32, i32) {
    %c0_i32 = arith.constant 0 : i32
    %c0_i32_0 = arith.constant 0 : i32
    %c0_i32_1 = arith.constant 0 : i32
    %c0_i32_2 = arith.constant 0 : i32
    return %c0_i32, %c0_i32_0, %c0_i32_1 : i32, i32, i32
  }
  func.func @transform_7(%arg0: i32) -> (i32, i32) {
    %c0_i32 = arith.constant 0 : i32
    %c0_i32_0 = arith.constant 0 : i32
    %c0_i32_1 = arith.constant 0 : i32
    return %c0_i32, %c0_i32_0 : i32, i32
  }
  func.func @transform_8(%arg0: i32) -> (i32, i32, i32) {
    %c0_i32 = arith.constant 0 : i32
    %c0_i32_0 = arith.constant 0 : i32
    %c0_i32_1 = arith.constant 0 : i32
    return %arg0, %c0_i32, %c0_i32_0 : i32, i32, i32
  }
}

module attributes {stable_mosaic.version = 11 : i64} {
  func.func @_msd_head_kernel(%arg0: memref<36x32xf32, #tpu.memory_space<vmem>>, %arg1: memref<36x32xf32, #tpu.memory_space<vmem>>, %arg2: memref<1x32xf32, #tpu.memory_space<vmem>>, %arg3: memref<1x32xf32, #tpu.memory_space<vmem>>, %arg4: memref<32x48xf32, #tpu.memory_space<vmem>>, %arg5: memref<1x48xf32, #tpu.memory_space<vmem>>, %arg6: memref<1x32xf32, #tpu.memory_space<vmem>>, %arg7: memref<16x16xf32, #tpu.memory_space<vmem>>, %arg8: memref<36x48xf32, #tpu.memory_space<vmem>>) attributes {dimension_semantics = [], scalar_prefetch = 0 : i64, scratch_operands = 0 : i64, tpu.core_type = #tpu.core_type<tc>} {
    %c0 = arith.constant 0 : index
    %c0_0 = arith.constant 0 : index
    %0 = vector.load %arg0[%c0, %c0_0] : memref<36x32xf32, #tpu.memory_space<vmem>>, vector<36x32xf32>
    %cst = arith.constant dense<0.000000e+00> : vector<36xf32>
    %1 = vector.multi_reduction <add>, %0, %cst [1] : vector<36x32xf32> to vector<36xf32>
    %2 = vector.shape_cast %1 : vector<36xf32> to vector<36x1xf32>
    %cst_1 = arith.constant 3.200000e+01 : f32
    %3 = vector.broadcast %cst_1 : f32 to vector<36x1xf32>
    %4 = arith.divf %2, %3 : vector<36x1xf32>
    %5 = vector.broadcast %4 : vector<36x1xf32> to vector<36x32xf32>
    %6 = arith.subf %0, %5 : vector<36x32xf32>
    %7 = arith.mulf %6, %6 : vector<36x32xf32>
    %cst_2 = arith.constant dense<0.000000e+00> : vector<36xf32>
    %8 = vector.multi_reduction <add>, %7, %cst_2 [1] : vector<36x32xf32> to vector<36xf32>
    %9 = vector.shape_cast %8 : vector<36xf32> to vector<36x1xf32>
    %cst_3 = arith.constant 3.200000e+01 : f32
    %10 = vector.broadcast %cst_3 : f32 to vector<36x1xf32>
    %11 = arith.divf %9, %10 : vector<36x1xf32>
    %12 = vector.broadcast %4 : vector<36x1xf32> to vector<36x32xf32>
    %13 = arith.subf %0, %12 : vector<36x32xf32>
    %cst_4 = arith.constant 9.99999974E-6 : f32
    %14 = vector.broadcast %cst_4 : f32 to vector<36x1xf32>
    %15 = arith.addf %11, %14 : vector<36x1xf32>
    %16 = math.rsqrt %15 : vector<36x1xf32>
    %17 = vector.broadcast %16 : vector<36x1xf32> to vector<36x32xf32>
    %18 = arith.mulf %13, %17 : vector<36x32xf32>
    %c0_5 = arith.constant 0 : index
    %c0_6 = arith.constant 0 : index
    %19 = vector.load %arg2[%c0_5, %c0_6] : memref<1x32xf32, #tpu.memory_space<vmem>>, vector<1x32xf32>
    %20 = vector.broadcast %19 : vector<1x32xf32> to vector<36x32xf32>
    %21 = arith.mulf %18, %20 : vector<36x32xf32>
    %c0_7 = arith.constant 0 : index
    %c0_8 = arith.constant 0 : index
    %22 = vector.load %arg3[%c0_7, %c0_8] : memref<1x32xf32, #tpu.memory_space<vmem>>, vector<1x32xf32>
    %23 = vector.broadcast %22 : vector<1x32xf32> to vector<36x32xf32>
    %24 = arith.addf %21, %23 : vector<36x32xf32>
    %c0_9 = arith.constant 0 : index
    %c0_10 = arith.constant 0 : index
    %25 = vector.load %arg4[%c0_9, %c0_10] : memref<32x48xf32, #tpu.memory_space<vmem>>, vector<32x48xf32>
    %cst_11 = arith.constant dense<0.000000e+00> : vector<36x48xf32>
    %26 = tpu.matmul %24, %25, %cst_11 {dimension_numbers = #tpu.dot_dimension_numbers<[1], [0], [0], [1], [0, 0, 1, 1], [], []>} : vector<36x32xf32>, vector<32x48xf32>, vector<36x48xf32> -> vector<36x48xf32>
    %c0_12 = arith.constant 0 : index
    %c0_13 = arith.constant 0 : index
    %27 = vector.load %arg5[%c0_12, %c0_13] : memref<1x48xf32, #tpu.memory_space<vmem>>, vector<1x48xf32>
    %28 = vector.broadcast %27 : vector<1x48xf32> to vector<36x48xf32>
    %29 = arith.addf %26, %28 : vector<36x48xf32>
    %c0_14 = arith.constant 0 : index
    %c0_15 = arith.constant 0 : index
    %30 = vector.load %arg1[%c0_14, %c0_15] : memref<36x32xf32, #tpu.memory_space<vmem>>, vector<36x32xf32>
    %31 = vector.extract_strided_slice %29 {offsets = [0, 0], sizes = [36, 32], strides = [1, 1]} : vector<36x48xf32> to vector<36x32xf32>
    %c0_16 = arith.constant 0 : index
    %c0_17 = arith.constant 0 : index
    %32 = vector.load %arg6[%c0_16, %c0_17] : memref<1x32xf32, #tpu.memory_space<vmem>>, vector<1x32xf32>
    %33 = vector.broadcast %32 : vector<1x32xf32> to vector<36x32xf32>
    %34 = arith.mulf %31, %33 : vector<36x32xf32>
    %35 = arith.addf %30, %34 : vector<36x32xf32>
    %36 = vector.extract_strided_slice %29 {offsets = [0, 32], sizes = [36, 16], strides = [1, 1]} : vector<36x48xf32> to vector<36x16xf32>
    %cst_18 = arith.constant dense<0xFF800000> : vector<36xf32>
    %37 = vector.multi_reduction <maximumf>, %36, %cst_18 [1] : vector<36x16xf32> to vector<36xf32>
    %38 = vector.shape_cast %37 : vector<36xf32> to vector<36x1xf32>
    %39 = vector.broadcast %38 : vector<36x1xf32> to vector<36x16xf32>
    %40 = arith.subf %36, %39 : vector<36x16xf32>
    %41 = math.exp %40 : vector<36x16xf32>
    %c0_19 = arith.constant 0 : index
    %c0_20 = arith.constant 0 : index
    %42 = vector.load %arg7[%c0_19, %c0_20] : memref<16x16xf32, #tpu.memory_space<vmem>>, vector<16x16xf32>
    %cst_21 = arith.constant dense<0.000000e+00> : vector<36x16xf32>
    %43 = tpu.matmul %41, %42, %cst_21 {dimension_numbers = #tpu.dot_dimension_numbers<[1], [0], [0], [1], [0, 0, 1, 1], [], []>} : vector<36x16xf32>, vector<16x16xf32>, vector<36x16xf32> -> vector<36x16xf32>
    %44 = tpu.reciprocal %43 {approx = true} : vector<36x16xf32> -> vector<36x16xf32>
    %45 = arith.mulf %41, %44 : vector<36x16xf32>
    %46 = tpu.concatenate %35, %45 in 1 : vector<36x32xf32>, vector<36x16xf32> -> vector<36x48xf32>
    %c0_22 = arith.constant 0 : index
    %c0_23 = arith.constant 0 : index
    %47 = vector.load %arg8[%c0_22, %c0_23] : memref<36x48xf32, #tpu.memory_space<vmem>>, vector<36x48xf32>
    tpu.vector_store %arg8[%c0_22, %c0_23], %46 {strides = array<i32>} : memref<36x48xf32, #tpu.memory_space<vmem>>, vector<36x48xf32>,
    return
  }
}

module attributes {stable_mosaic.version = 11 : i64} {
  func.func @_msd_out_ffn_kernel(%arg0: memref<36x512xf32, #tpu.memory_space<vmem>>, %arg1: memref<36x32xf32, #tpu.memory_space<vmem>>, %arg2: memref<512x32xf32, #tpu.memory_space<vmem>>, %arg3: memref<1x32xf32, #tpu.memory_space<vmem>>, %arg4: memref<1x32xf32, #tpu.memory_space<vmem>>, %arg5: memref<32x64xf32, #tpu.memory_space<vmem>>, %arg6: memref<1x64xf32, #tpu.memory_space<vmem>>, %arg7: memref<64x32xf32, #tpu.memory_space<vmem>>, %arg8: memref<1x32xf32, #tpu.memory_space<vmem>>, %arg9: memref<36x32xf32, #tpu.memory_space<vmem>>) attributes {dimension_semantics = [], scalar_prefetch = 0 : i64, scratch_operands = 0 : i64, tpu.core_type = #tpu.core_type<tc>} {
    %c0 = arith.constant 0 : index
    %c0_0 = arith.constant 0 : index
    %0 = vector.load %arg1[%c0, %c0_0] : memref<36x32xf32, #tpu.memory_space<vmem>>, vector<36x32xf32>
    %c0_1 = arith.constant 0 : index
    %c0_2 = arith.constant 0 : index
    %1 = vector.load %arg0[%c0_1, %c0_2] : memref<36x512xf32, #tpu.memory_space<vmem>>, vector<36x512xf32>
    %c0_3 = arith.constant 0 : index
    %c0_4 = arith.constant 0 : index
    %2 = vector.load %arg2[%c0_3, %c0_4] : memref<512x32xf32, #tpu.memory_space<vmem>>, vector<512x32xf32>
    %cst = arith.constant dense<0.000000e+00> : vector<36x32xf32>
    %3 = tpu.matmul %1, %2, %cst {dimension_numbers = #tpu.dot_dimension_numbers<[1], [0], [0], [1], [0, 0, 1, 1], [], []>} : vector<36x512xf32>, vector<512x32xf32>, vector<36x32xf32> -> vector<36x32xf32>
    %4 = arith.addf %0, %3 : vector<36x32xf32>
    %cst_5 = arith.constant dense<0.000000e+00> : vector<36xf32>
    %5 = vector.multi_reduction <add>, %4, %cst_5 [1] : vector<36x32xf32> to vector<36xf32>
    %6 = vector.shape_cast %5 : vector<36xf32> to vector<36x1xf32>
    %cst_6 = arith.constant 3.200000e+01 : f32
    %7 = vector.broadcast %cst_6 : f32 to vector<36x1xf32>
    %8 = arith.divf %6, %7 : vector<36x1xf32>
    %9 = vector.broadcast %8 : vector<36x1xf32> to vector<36x32xf32>
    %10 = arith.subf %4, %9 : vector<36x32xf32>
    %11 = arith.mulf %10, %10 : vector<36x32xf32>
    %cst_7 = arith.constant dense<0.000000e+00> : vector<36xf32>
    %12 = vector.multi_reduction <add>, %11, %cst_7 [1] : vector<36x32xf32> to vector<36xf32>
    %13 = vector.shape_cast %12 : vector<36xf32> to vector<36x1xf32>
    %cst_8 = arith.constant 3.200000e+01 : f32
    %14 = vector.broadcast %cst_8 : f32 to vector<36x1xf32>
    %15 = arith.divf %13, %14 : vector<36x1xf32>
    %16 = vector.broadcast %8 : vector<36x1xf32> to vector<36x32xf32>
    %17 = arith.subf %4, %16 : vector<36x32xf32>
    %cst_9 = arith.constant 9.99999974E-6 : f32
    %18 = vector.broadcast %cst_9 : f32 to vector<36x1xf32>
    %19 = arith.addf %15, %18 : vector<36x1xf32>
    %20 = math.rsqrt %19 : vector<36x1xf32>
    %21 = vector.broadcast %20 : vector<36x1xf32> to vector<36x32xf32>
    %22 = arith.mulf %17, %21 : vector<36x32xf32>
    %c0_10 = arith.constant 0 : index
    %c0_11 = arith.constant 0 : index
    %23 = vector.load %arg3[%c0_10, %c0_11] : memref<1x32xf32, #tpu.memory_space<vmem>>, vector<1x32xf32>
    %24 = vector.broadcast %23 : vector<1x32xf32> to vector<36x32xf32>
    %25 = arith.mulf %22, %24 : vector<36x32xf32>
    %c0_12 = arith.constant 0 : index
    %c0_13 = arith.constant 0 : index
    %26 = vector.load %arg4[%c0_12, %c0_13] : memref<1x32xf32, #tpu.memory_space<vmem>>, vector<1x32xf32>
    %27 = vector.broadcast %26 : vector<1x32xf32> to vector<36x32xf32>
    %28 = arith.addf %25, %27 : vector<36x32xf32>
    %c0_14 = arith.constant 0 : index
    %c0_15 = arith.constant 0 : index
    %29 = vector.load %arg5[%c0_14, %c0_15] : memref<32x64xf32, #tpu.memory_space<vmem>>, vector<32x64xf32>
    %cst_16 = arith.constant dense<0.000000e+00> : vector<36x64xf32>
    %30 = tpu.matmul %28, %29, %cst_16 {dimension_numbers = #tpu.dot_dimension_numbers<[1], [0], [0], [1], [0, 0, 1, 1], [], []>} : vector<36x32xf32>, vector<32x64xf32>, vector<36x64xf32> -> vector<36x64xf32>
    %c0_17 = arith.constant 0 : index
    %c0_18 = arith.constant 0 : index
    %31 = vector.load %arg6[%c0_17, %c0_18] : memref<1x64xf32, #tpu.memory_space<vmem>>, vector<1x64xf32>
    %32 = vector.broadcast %31 : vector<1x64xf32> to vector<36x64xf32>
    %33 = arith.addf %30, %32 : vector<36x64xf32>
    %cst_19 = arith.constant 5.000000e-01 : f32
    %34 = vector.broadcast %cst_19 : f32 to vector<36x64xf32>
    %35 = arith.mulf %34, %33 : vector<36x64xf32>
    %cst_20 = arith.constant 4.471500e-02 : f32
    %36 = vector.broadcast %cst_20 : f32 to vector<36x64xf32>
    %37 = arith.mulf %36, %33 : vector<36x64xf32>
    %38 = arith.mulf %37, %33 : vector<36x64xf32>
    %39 = arith.mulf %38, %33 : vector<36x64xf32>
    %40 = arith.addf %33, %39 : vector<36x64xf32>
    %cst_21 = arith.constant 0.797884583 : f32
    %41 = vector.broadcast %cst_21 : f32 to vector<36x64xf32>
    %42 = arith.mulf %41, %40 : vector<36x64xf32>
    %43 = math.tanh %42 : vector<36x64xf32>
    %cst_22 = arith.constant 1.000000e+00 : f32
    %44 = vector.broadcast %cst_22 : f32 to vector<36x64xf32>
    %45 = arith.addf %44, %43 : vector<36x64xf32>
    %46 = arith.mulf %35, %45 : vector<36x64xf32>
    %c0_23 = arith.constant 0 : index
    %c0_24 = arith.constant 0 : index
    %47 = vector.load %arg7[%c0_23, %c0_24] : memref<64x32xf32, #tpu.memory_space<vmem>>, vector<64x32xf32>
    %cst_25 = arith.constant dense<0.000000e+00> : vector<36x32xf32>
    %48 = tpu.matmul %46, %47, %cst_25 {dimension_numbers = #tpu.dot_dimension_numbers<[1], [0], [0], [1], [0, 0, 1, 1], [], []>} : vector<36x64xf32>, vector<64x32xf32>, vector<36x32xf32> -> vector<36x32xf32>
    %49 = arith.addf %4, %48 : vector<36x32xf32>
    %c0_26 = arith.constant 0 : index
    %c0_27 = arith.constant 0 : index
    %50 = vector.load %arg8[%c0_26, %c0_27] : memref<1x32xf32, #tpu.memory_space<vmem>>, vector<1x32xf32>
    %51 = vector.broadcast %50 : vector<1x32xf32> to vector<36x32xf32>
    %52 = arith.addf %49, %51 : vector<36x32xf32>
    %c0_28 = arith.constant 0 : index
    %c0_29 = arith.constant 0 : index
    %53 = vector.load %arg9[%c0_28, %c0_29] : memref<36x32xf32, #tpu.memory_space<vmem>>, vector<36x32xf32>
    tpu.vector_store %arg9[%c0_28, %c0_29], %52 {strides = array<i32>} : memref<36x32xf32, #tpu.memory_space<vmem>>, vector<36x32xf32>,
    return
  }
}

module attributes {stable_mosaic.version = 11 : i64} {
  func.func @_msd_head_kernel(%arg0: memref<30x32xf32, #tpu.memory_space<vmem>>, %arg1: memref<30x32xf32, #tpu.memory_space<vmem>>, %arg2: memref<1x32xf32, #tpu.memory_space<vmem>>, %arg3: memref<1x32xf32, #tpu.memory_space<vmem>>, %arg4: memref<32x48xf32, #tpu.memory_space<vmem>>, %arg5: memref<1x48xf32, #tpu.memory_space<vmem>>, %arg6: memref<1x32xf32, #tpu.memory_space<vmem>>, %arg7: memref<16x16xf32, #tpu.memory_space<vmem>>, %arg8: memref<30x48xf32, #tpu.memory_space<vmem>>) attributes {dimension_semantics = [], scalar_prefetch = 0 : i64, scratch_operands = 0 : i64, tpu.core_type = #tpu.core_type<tc>} {
    %c0 = arith.constant 0 : index
    %c0_0 = arith.constant 0 : index
    %0 = vector.load %arg0[%c0, %c0_0] : memref<30x32xf32, #tpu.memory_space<vmem>>, vector<30x32xf32>
    %cst = arith.constant dense<0.000000e+00> : vector<30xf32>
    %1 = vector.multi_reduction <add>, %0, %cst [1] : vector<30x32xf32> to vector<30xf32>
    %2 = vector.shape_cast %1 : vector<30xf32> to vector<30x1xf32>
    %cst_1 = arith.constant 3.200000e+01 : f32
    %3 = vector.broadcast %cst_1 : f32 to vector<30x1xf32>
    %4 = arith.divf %2, %3 : vector<30x1xf32>
    %5 = vector.broadcast %4 : vector<30x1xf32> to vector<30x32xf32>
    %6 = arith.subf %0, %5 : vector<30x32xf32>
    %7 = arith.mulf %6, %6 : vector<30x32xf32>
    %cst_2 = arith.constant dense<0.000000e+00> : vector<30xf32>
    %8 = vector.multi_reduction <add>, %7, %cst_2 [1] : vector<30x32xf32> to vector<30xf32>
    %9 = vector.shape_cast %8 : vector<30xf32> to vector<30x1xf32>
    %cst_3 = arith.constant 3.200000e+01 : f32
    %10 = vector.broadcast %cst_3 : f32 to vector<30x1xf32>
    %11 = arith.divf %9, %10 : vector<30x1xf32>
    %12 = vector.broadcast %4 : vector<30x1xf32> to vector<30x32xf32>
    %13 = arith.subf %0, %12 : vector<30x32xf32>
    %cst_4 = arith.constant 9.99999974E-6 : f32
    %14 = vector.broadcast %cst_4 : f32 to vector<30x1xf32>
    %15 = arith.addf %11, %14 : vector<30x1xf32>
    %16 = math.rsqrt %15 : vector<30x1xf32>
    %17 = vector.broadcast %16 : vector<30x1xf32> to vector<30x32xf32>
    %18 = arith.mulf %13, %17 : vector<30x32xf32>
    %c0_5 = arith.constant 0 : index
    %c0_6 = arith.constant 0 : index
    %19 = vector.load %arg2[%c0_5, %c0_6] : memref<1x32xf32, #tpu.memory_space<vmem>>, vector<1x32xf32>
    %20 = vector.broadcast %19 : vector<1x32xf32> to vector<30x32xf32>
    %21 = arith.mulf %18, %20 : vector<30x32xf32>
    %c0_7 = arith.constant 0 : index
    %c0_8 = arith.constant 0 : index
    %22 = vector.load %arg3[%c0_7, %c0_8] : memref<1x32xf32, #tpu.memory_space<vmem>>, vector<1x32xf32>
    %23 = vector.broadcast %22 : vector<1x32xf32> to vector<30x32xf32>
    %24 = arith.addf %21, %23 : vector<30x32xf32>
    %c0_9 = arith.constant 0 : index
    %c0_10 = arith.constant 0 : index
    %25 = vector.load %arg4[%c0_9, %c0_10] : memref<32x48xf32, #tpu.memory_space<vmem>>, vector<32x48xf32>
    %cst_11 = arith.constant dense<0.000000e+00> : vector<30x48xf32>
    %26 = tpu.matmul %24, %25, %cst_11 {dimension_numbers = #tpu.dot_dimension_numbers<[1], [0], [0], [1], [0, 0, 1, 1], [], []>} : vector<30x32xf32>, vector<32x48xf32>, vector<30x48xf32> -> vector<30x48xf32>
    %c0_12 = arith.constant 0 : index
    %c0_13 = arith.constant 0 : index
    %27 = vector.load %arg5[%c0_12, %c0_13] : memref<1x48xf32, #tpu.memory_space<vmem>>, vector<1x48xf32>
    %28 = vector.broadcast %27 : vector<1x48xf32> to vector<30x48xf32>
    %29 = arith.addf %26, %28 : vector<30x48xf32>
    %c0_14 = arith.constant 0 : index
    %c0_15 = arith.constant 0 : index
    %30 = vector.load %arg1[%c0_14, %c0_15] : memref<30x32xf32, #tpu.memory_space<vmem>>, vector<30x32xf32>
    %31 = vector.extract_strided_slice %29 {offsets = [0, 0], sizes = [30, 32], strides = [1, 1]} : vector<30x48xf32> to vector<30x32xf32>
    %c0_16 = arith.constant 0 : index
    %c0_17 = arith.constant 0 : index
    %32 = vector.load %arg6[%c0_16, %c0_17] : memref<1x32xf32, #tpu.memory_space<vmem>>, vector<1x32xf32>
    %33 = vector.broadcast %32 : vector<1x32xf32> to vector<30x32xf32>
    %34 = arith.mulf %31, %33 : vector<30x32xf32>
    %35 = arith.addf %30, %34 : vector<30x32xf32>
    %36 = vector.extract_strided_slice %29 {offsets = [0, 32], sizes = [30, 16], strides = [1, 1]} : vector<30x48xf32> to vector<30x16xf32>
    %cst_18 = arith.constant dense<0xFF800000> : vector<30xf32>
    %37 = vector.multi_reduction <maximumf>, %36, %cst_18 [1] : vector<30x16xf32> to vector<30xf32>
    %38 = vector.shape_cast %37 : vector<30xf32> to vector<30x1xf32>
    %39 = vector.broadcast %38 : vector<30x1xf32> to vector<30x16xf32>
    %40 = arith.subf %36, %39 : vector<30x16xf32>
    %41 = math.exp %40 : vector<30x16xf32>
    %c0_19 = arith.constant 0 : index
    %c0_20 = arith.constant 0 : index
    %42 = vector.load %arg7[%c0_19, %c0_20] : memref<16x16xf32, #tpu.memory_space<vmem>>, vector<16x16xf32>
    %cst_21 = arith.constant dense<0.000000e+00> : vector<30x16xf32>
    %43 = tpu.matmul %41, %42, %cst_21 {dimension_numbers = #tpu.dot_dimension_numbers<[1], [0], [0], [1], [0, 0, 1, 1], [], []>} : vector<30x16xf32>, vector<16x16xf32>, vector<30x16xf32> -> vector<30x16xf32>
    %44 = tpu.reciprocal %43 {approx = true} : vector<30x16xf32> -> vector<30x16xf32>
    %45 = arith.mulf %41, %44 : vector<30x16xf32>
    %46 = tpu.concatenate %35, %45 in 1 : vector<30x32xf32>, vector<30x16xf32> -> vector<30x48xf32>
    %c0_22 = arith.constant 0 : index
    %c0_23 = arith.constant 0 : index
    %47 = vector.load %arg8[%c0_22, %c0_23] : memref<30x48xf32, #tpu.memory_space<vmem>>, vector<30x48xf32>
    tpu.vector_store %arg8[%c0_22, %c0_23], %46 {strides = array<i32>} : memref<30x48xf32, #tpu.memory_space<vmem>>, vector<30x48xf32>,
    return
  }
}

module attributes {stable_mosaic.version = 11 : i64} {
  func.func @_msd_out_ffn_kernel(%arg0: memref<30x512xf32, #tpu.memory_space<vmem>>, %arg1: memref<30x32xf32, #tpu.memory_space<vmem>>, %arg2: memref<512x32xf32, #tpu.memory_space<vmem>>, %arg3: memref<1x32xf32, #tpu.memory_space<vmem>>, %arg4: memref<1x32xf32, #tpu.memory_space<vmem>>, %arg5: memref<32x64xf32, #tpu.memory_space<vmem>>, %arg6: memref<1x64xf32, #tpu.memory_space<vmem>>, %arg7: memref<64x32xf32, #tpu.memory_space<vmem>>, %arg8: memref<1x32xf32, #tpu.memory_space<vmem>>, %arg9: memref<30x32xf32, #tpu.memory_space<vmem>>) attributes {dimension_semantics = [], scalar_prefetch = 0 : i64, scratch_operands = 0 : i64, tpu.core_type = #tpu.core_type<tc>} {
    %c0 = arith.constant 0 : index
    %c0_0 = arith.constant 0 : index
    %0 = vector.load %arg1[%c0, %c0_0] : memref<30x32xf32, #tpu.memory_space<vmem>>, vector<30x32xf32>
    %c0_1 = arith.constant 0 : index
    %c0_2 = arith.constant 0 : index
    %1 = vector.load %arg0[%c0_1, %c0_2] : memref<30x512xf32, #tpu.memory_space<vmem>>, vector<30x512xf32>
    %c0_3 = arith.constant 0 : index
    %c0_4 = arith.constant 0 : index
    %2 = vector.load %arg2[%c0_3, %c0_4] : memref<512x32xf32, #tpu.memory_space<vmem>>, vector<512x32xf32>
    %cst = arith.constant dense<0.000000e+00> : vector<30x32xf32>
    %3 = tpu.matmul %1, %2, %cst {dimension_numbers = #tpu.dot_dimension_numbers<[1], [0], [0], [1], [0, 0, 1, 1], [], []>} : vector<30x512xf32>, vector<512x32xf32>, vector<30x32xf32> -> vector<30x32xf32>
    %4 = arith.addf %0, %3 : vector<30x32xf32>
    %cst_5 = arith.constant dense<0.000000e+00> : vector<30xf32>
    %5 = vector.multi_reduction <add>, %4, %cst_5 [1] : vector<30x32xf32> to vector<30xf32>
    %6 = vector.shape_cast %5 : vector<30xf32> to vector<30x1xf32>
    %cst_6 = arith.constant 3.200000e+01 : f32
    %7 = vector.broadcast %cst_6 : f32 to vector<30x1xf32>
    %8 = arith.divf %6, %7 : vector<30x1xf32>
    %9 = vector.broadcast %8 : vector<30x1xf32> to vector<30x32xf32>
    %10 = arith.subf %4, %9 : vector<30x32xf32>
    %11 = arith.mulf %10, %10 : vector<30x32xf32>
    %cst_7 = arith.constant dense<0.000000e+00> : vector<30xf32>
    %12 = vector.multi_reduction <add>, %11, %cst_7 [1] : vector<30x32xf32> to vector<30xf32>
    %13 = vector.shape_cast %12 : vector<30xf32> to vector<30x1xf32>
    %cst_8 = arith.constant 3.200000e+01 : f32
    %14 = vector.broadcast %cst_8 : f32 to vector<30x1xf32>
    %15 = arith.divf %13, %14 : vector<30x1xf32>
    %16 = vector.broadcast %8 : vector<30x1xf32> to vector<30x32xf32>
    %17 = arith.subf %4, %16 : vector<30x32xf32>
    %cst_9 = arith.constant 9.99999974E-6 : f32
    %18 = vector.broadcast %cst_9 : f32 to vector<30x1xf32>
    %19 = arith.addf %15, %18 : vector<30x1xf32>
    %20 = math.rsqrt %19 : vector<30x1xf32>
    %21 = vector.broadcast %20 : vector<30x1xf32> to vector<30x32xf32>
    %22 = arith.mulf %17, %21 : vector<30x32xf32>
    %c0_10 = arith.constant 0 : index
    %c0_11 = arith.constant 0 : index
    %23 = vector.load %arg3[%c0_10, %c0_11] : memref<1x32xf32, #tpu.memory_space<vmem>>, vector<1x32xf32>
    %24 = vector.broadcast %23 : vector<1x32xf32> to vector<30x32xf32>
    %25 = arith.mulf %22, %24 : vector<30x32xf32>
    %c0_12 = arith.constant 0 : index
    %c0_13 = arith.constant 0 : index
    %26 = vector.load %arg4[%c0_12, %c0_13] : memref<1x32xf32, #tpu.memory_space<vmem>>, vector<1x32xf32>
    %27 = vector.broadcast %26 : vector<1x32xf32> to vector<30x32xf32>
    %28 = arith.addf %25, %27 : vector<30x32xf32>
    %c0_14 = arith.constant 0 : index
    %c0_15 = arith.constant 0 : index
    %29 = vector.load %arg5[%c0_14, %c0_15] : memref<32x64xf32, #tpu.memory_space<vmem>>, vector<32x64xf32>
    %cst_16 = arith.constant dense<0.000000e+00> : vector<30x64xf32>
    %30 = tpu.matmul %28, %29, %cst_16 {dimension_numbers = #tpu.dot_dimension_numbers<[1], [0], [0], [1], [0, 0, 1, 1], [], []>} : vector<30x32xf32>, vector<32x64xf32>, vector<30x64xf32> -> vector<30x64xf32>
    %c0_17 = arith.constant 0 : index
    %c0_18 = arith.constant 0 : index
    %31 = vector.load %arg6[%c0_17, %c0_18] : memref<1x64xf32, #tpu.memory_space<vmem>>, vector<1x64xf32>
    %32 = vector.broadcast %31 : vector<1x64xf32> to vector<30x64xf32>
    %33 = arith.addf %30, %32 : vector<30x64xf32>
    %cst_19 = arith.constant 5.000000e-01 : f32
    %34 = vector.broadcast %cst_19 : f32 to vector<30x64xf32>
    %35 = arith.mulf %34, %33 : vector<30x64xf32>
    %cst_20 = arith.constant 4.471500e-02 : f32
    %36 = vector.broadcast %cst_20 : f32 to vector<30x64xf32>
    %37 = arith.mulf %36, %33 : vector<30x64xf32>
    %38 = arith.mulf %37, %33 : vector<30x64xf32>
    %39 = arith.mulf %38, %33 : vector<30x64xf32>
    %40 = arith.addf %33, %39 : vector<30x64xf32>
    %cst_21 = arith.constant 0.797884583 : f32
    %41 = vector.broadcast %cst_21 : f32 to vector<30x64xf32>
    %42 = arith.mulf %41, %40 : vector<30x64xf32>
    %43 = math.tanh %42 : vector<30x64xf32>
    %cst_22 = arith.constant 1.000000e+00 : f32
    %44 = vector.broadcast %cst_22 : f32 to vector<30x64xf32>
    %45 = arith.addf %44, %43 : vector<30x64xf32>
    %46 = arith.mulf %35, %45 : vector<30x64xf32>
    %c0_23 = arith.constant 0 : index
    %c0_24 = arith.constant 0 : index
    %47 = vector.load %arg7[%c0_23, %c0_24] : memref<64x32xf32, #tpu.memory_space<vmem>>, vector<64x32xf32>
    %cst_25 = arith.constant dense<0.000000e+00> : vector<30x32xf32>
    %48 = tpu.matmul %46, %47, %cst_25 {dimension_numbers = #tpu.dot_dimension_numbers<[1], [0], [0], [1], [0, 0, 1, 1], [], []>} : vector<30x64xf32>, vector<64x32xf32>, vector<30x32xf32> -> vector<30x32xf32>
    %49 = arith.addf %4, %48 : vector<30x32xf32>
    %c0_26 = arith.constant 0 : index
    %c0_27 = arith.constant 0 : index
    %50 = vector.load %arg8[%c0_26, %c0_27] : memref<1x32xf32, #tpu.memory_space<vmem>>, vector<1x32xf32>
    %51 = vector.broadcast %50 : vector<1x32xf32> to vector<30x32xf32>
    %52 = arith.addf %49, %51 : vector<30x32xf32>
    %c0_28 = arith.constant 0 : index
    %c0_29 = arith.constant 0 : index
    %53 = vector.load %arg9[%c0_28, %c0_29] : memref<30x32xf32, #tpu.memory_space<vmem>>, vector<30x32xf32>
    tpu.vector_store %arg9[%c0_28, %c0_29], %52 {strides = array<i32>} : memref<30x32xf32, #tpu.memory_space<vmem>>, vector<30x32xf32>,
    return
  }
}

</mosaic_0001>

<llo_original>
// kernel: tile.24
$region0: #{tile.24}
  %s0 = inlined_call_operand.vmem [shape: f32[2,10,4,8], index: 0, kind: input, shape index: {}]
  %s1 = inlined_call_operand.vmem [shape: f32[2,10,32], index: 1, kind: output, shape index: {}]
  $region1: #{tile.24} parent=0
    #allocation0 [shape = 'u8[40960]{0}', space=vmem, size = 0xa000, scoped, tag = 'scoped mem for output reshape']
    #allocation1 [shape = 'u8[81920]{0}', space=vmem, size = 0x14000, scoped, tag = 'scoped mem for input reshape']
    %s3 = sshllo.u32 0, 4
    %s4 = smul.addr 4, 19
    %s5 = scalar_lea.vmem %s0, %s4
    %v6 = vld [vmem:[%s5] sm:%s3]
    %s7 = scalar_lea.vmem [#allocation1], 152
    %8 = vst [vmem:[%s7] sm:%s3] %v6
    %s9 = smul.addr 4, 18
    %s10 = scalar_lea.vmem %s0, %s9
    %v11 = vld [vmem:[%s10] sm:%s3]
    %s12 = scalar_lea.vmem [#allocation1], 144
    %13 = vst [vmem:[%s12] sm:%s3] %v11
    %s14 = smul.addr 4, 17
    %s15 = scalar_lea.vmem %s0, %s14
    %v16 = vld [vmem:[%s15] sm:%s3]
    %s17 = scalar_lea.vmem [#allocation1], 136
    %18 = vst [vmem:[%s17] sm:%s3] %v16
    %s19 = smul.addr 4, 16
    %s20 = scalar_lea.vmem %s0, %s19
    %v21 = vld [vmem:[%s20] sm:%s3]
    %s22 = scalar_lea.vmem [#allocation1], 128
    %23 = vst [vmem:[%s22] sm:%s3] %v21
    %s24 = smul.addr 4, 15
    %s25 = scalar_lea.vmem %s0, %s24
    %v26 = vld [vmem:[%s25] sm:%s3]
    %s27 = scalar_lea.vmem [#allocation1], 120
    %28 = vst [vmem:[%s27] sm:%s3] %v26
    %s29 = smul.addr 4, 14
    %s30 = scalar_lea.vmem %s0, %s29
    %v31 = vld [vmem:[%s30] sm:%s3]
    %s32 = scalar_lea.vmem [#allocation1], 112
    %33 = vst [vmem:[%s32] sm:%s3] %v31
    %s34 = smul.addr 4, 13
    %s35 = scalar_lea.vmem %s0, %s34
    %v36 = vld [vmem:[%s35] sm:%s3]
    %s37 = scalar_lea.vmem [#allocation1], 104
    %38 = vst [vmem:[%s37] sm:%s3] %v36
    %s39 = smul.addr 4, 12
    %s40 = scalar_lea.vmem %s0, %s39
    %v41 = vld [vmem:[%s40] sm:%s3]
    %s42 = scalar_lea.vmem [#allocation1], 96
    %43 = vst [vmem:[%s42] sm:%s3] %v41
    %s44 = smul.addr 4, 11
    %s45 = scalar_lea.vmem %s0, %s44
    %v46 = vld [vmem:[%s45] sm:%s3]
    %s47 = scalar_lea.vmem [#allocation1], 88
    %48 = vst [vmem:[%s47] sm:%s3] %v46
    %s49 = smul.addr 4, 10
    %s50 = scalar_lea.vmem %s0, %s49
    %v51 = vld [vmem:[%s50] sm:%s3]
    %s52 = scalar_lea.vmem [#allocation1], 80
    %53 = vst [vmem:[%s52] sm:%s3] %v51
    %s54 = smul.addr 4, 9
    %s55 = scalar_lea.vmem %s0, %s54
    %v56 = vld [vmem:[%s55] sm:%s3]
    %s57 = scalar_lea.vmem [#allocation1], 72
    %58 = vst [vmem:[%s57] sm:%s3] %v56
    %s59 = smul.addr 4, 8
    %s60 = scalar_lea.vmem %s0, %s59
    %v61 = vld [vmem:[%s60] sm:%s3]
    %s62 = scalar_lea.vmem [#allocation1], 64
    %63 = vst [vmem:[%s62] sm:%s3] %v61
    %s64 = smul.addr 4, 7
    %s65 = scalar_lea.vmem %s0, %s64
    %v66 = vld [vmem:[%s65] sm:%s3]
    %s67 = scalar_lea.vmem [#allocation1], 56
    %68 = vst [vmem:[%s67] sm:%s3] %v66
    %s69 = smul.addr 4, 6
    %s70 = scalar_lea.vmem %s0, %s69
    %v71 = vld [vmem:[%s70] sm:%s3]
    %s72 = scalar_lea.vmem [#allocation1], 48
    %73 = vst [vmem:[%s72] sm:%s3] %v71
    %s74 = smul.addr 4, 5
    %s75 = scalar_lea.vmem %s0, %s74
    %v76 = vld [vmem:[%s75] sm:%s3]
    %s77 = scalar_lea.vmem [#allocation1], 40
    %78 = vst [vmem:[%s77] sm:%s3] %v76
    %s79 = smul.addr 4, 4
    %s80 = scalar_lea.vmem %s0, %s79
    %v81 = vld [vmem:[%s80] sm:%s3]
    %s82 = scalar_lea.vmem [#allocation1], 32
    %83 = vst [vmem:[%s82] sm:%s3] %v81
    %s84 = smul.addr 4, 3
    %s85 = scalar_lea.vmem %s0, %s84
    %v86 = vld [vmem:[%s85] sm:%s3]
    %s87 = scalar_lea.vmem [#allocation1], 24
    %88 = vst [vmem:[%s87] sm:%s3] %v86
    %s89 = smul.addr 4, 2
    %s90 = scalar_lea.vmem %s0, %s89
    %v91 = vld [vmem:[%s90] sm:%s3]
    %s92 = scalar_lea.vmem [#allocation1], 16
    %93 = vst [vmem:[%s92] sm:%s3] %v91
    %s94 = scalar_lea.vmem %s0, 4
    %v95 = vld [vmem:[%s94] sm:%s3]
    %s96 = scalar_lea.vmem [#allocation1], 8
    %97 = vst [vmem:[%s96] sm:%s3] %v95
    %v98 = vld [vmem:[%s0] sm:%s3]
    %99 = vst [vmem:[#allocation1] sm:%s3] %v98
    %v100 = vld [vmem:[#allocation1] ss:$8 sm:$0xf]
    %v101 = vld [vmem:[#allocation1] ss:$8 sm:$0xf0]
    %vm102 = vcmask 1047556
    %v103 = vsel %vm102, %v101, %v100
    %vm104 = vcmask 64512
    %105 = vst.msk [vmem:[#allocation0] sm:$0x3] %vm104, %v103
    %s106 = scalar_lea.vmem [#allocation0], 6
    %107 = vst.msk [vmem:[%s106] sm:$0xc] %vm104, %v103
    %s108 = scalar_lea.vmem [#allocation0], 12
    %109 = vst.msk [vmem:[%s108] sm:$0x30] %vm104, %v103
    %s110 = scalar_lea.vmem [#allocation0], 18
    %111 = vst.msk [vmem:[%s110] sm:$0xc0] %vm104, %v103
    %s112 = scalar_lea.vmem [#allocation1], 64
    %v113 = vld [vmem:[%s112] ss:$8 sm:$0xf]
    %s114 = scalar_lea.vmem [#allocation1], 64
    %v115 = vld [vmem:[%s114] ss:$8 sm:$0xf0]
    %vm116 = vcmask 1047556
    %v117 = vsel %vm116, %v115, %v113
    %vm118 = vcmask 64512
    %s119 = scalar_lea.vmem [#allocation0], 32
    %120 = vst.msk [vmem:[%s119] sm:$0x3] %vm118, %v117
    %s121 = scalar_lea.vmem [#allocation0], 38
    %122 = vst.msk [vmem:[%s121] sm:$0xc] %vm118, %v117
    %s123 = scalar_lea.vmem [#allocation0], 44
    %124 = vst.msk [vmem:[%s123] sm:$0x30] %vm118, %v117
    %s125 = scalar_lea.vmem [#allocation0], 50
    %126 = vst.msk [vmem:[%s125] sm:$0xc0] %vm118, %v117
    %s127 = scalar_lea.vmem [#allocation1], 128
    %v128 = vld [vmem:[%s127] ss:$8 sm:$0xf]
    %vm129 = vcmask 64512
    %s130 = scalar_lea.vmem [#allocation0], 64
    %131 = vst.msk [vmem:[%s130] sm:$0x3] %vm129, %v128
    %s132 = scalar_lea.vmem [#allocation0], 70
    %133 = vst.msk [vmem:[%s132] sm:$0xc] %vm129, %v128
    %s134 = scalar_lea.vmem [#allocation1], 3
    %v135 = vld [vmem:[%s134] ss:$8 sm:$0xf]
    %s136 = scalar_lea.vmem [#allocation1], 3
    %v137 = vld [vmem:[%s136] ss:$8 sm:$0xf0]
    %vm138 = vcmask 1047556
    %v139 = vsel %vm138, %v137, %v135
    %140 = vrot.lane.b32.xlu0 %v139, 24
    %v141 = vpop.permute.xlu0 %140
    %vm142 = vcmask 261312
    %143 = vst.msk [vmem:[#allocation0] sm:$0x3] %vm142, %v141
    %s144 = scalar_lea.vmem [#allocation0], 6
    %145 = vst.msk [vmem:[%s144] sm:$0xc] %vm142, %v141
    %s146 = scalar_lea.vmem [#allocation0], 12
    %147 = vst.msk [vmem:[%s146] sm:$0x30] %vm142, %v141
    %s148 = scalar_lea.vmem [#allocation0], 18
    %149 = vst.msk [vmem:[%s148] sm:$0xc0] %vm142, %v141
    %s150 = scalar_lea.vmem [#allocation1], 67
    %v151 = vld [vmem:[%s150] ss:$8 sm:$0xf]
    %s152 = scalar_lea.vmem [#allocation1], 67
    %v153 = vld [vmem:[%s152] ss:$8 sm:$0xf0]
    %vm154 = vcmask 1047556
    %v155 = vsel %vm154, %v153, %v151
    %156 = vrot.lane.b32.xlu0 %v155, 24
    %v157 = vpop.permute.xlu0 %156
    %vm158 = vcmask 261312
    %s159 = scalar_lea.vmem [#allocation0], 32
    %160 = vst.msk [vmem:[%s159] sm:$0x3] %vm158, %v157
    %s161 = scalar_lea.vmem [#allocation0], 38
    %162 = vst.msk [vmem:[%s161] sm:$0xc] %vm158, %v157
    %s163 = scalar_lea.vmem [#allocation0], 44
    %164 = vst.msk [vmem:[%s163] sm:$0x30] %vm158, %v157
    %s165 = scalar_lea.vmem [#allocation0], 50
    %166 = vst.msk [vmem:[%s165] sm:$0xc0] %vm158, %v157
    %s167 = scalar_lea.vmem [#allocation1], 131
    %v168 = vld [vmem:[%s167] ss:$8 sm:$0xf]
    %169 = vrot.lane.b32.xlu0 %v168, 24
    %v170 = vpop.permute.xlu0 %169
    %vm171 = vcmask 261312
    %s172 = scalar_lea.vmem [#allocation0], 64
    %173 = vst.msk [vmem:[%s172] sm:$0x3] %vm171, %v170
    %s174 = scalar_lea.vmem [#allocation0], 70
    %175 = vst.msk [vmem:[%s174] sm:$0xc] %vm171, %v170
    %s176 = scalar_lea.vmem [#allocation1], 2
    %v177 = vld [vmem:[%s176] ss:$8 sm:$0xf]
    %s178 = scalar_lea.vmem [#allocation1], 2
    %v179 = vld [vmem:[%s178] ss:$8 sm:$0xf0]
    %vm180 = vcmask 1047556
    %v181 = vsel %vm180, %v179, %v177
    %182 = vrot.lane.b32.xlu0 %v181, 16
    %v183 = vpop.permute.xlu0 %182
    %vm184 = vcmask 195712
    %185 = vst.msk [vmem:[#allocation0] sm:$0x3] %vm184, %v183
    %s186 = scalar_lea.vmem [#allocation0], 6
    %187 = vst.msk [vmem:[%s186] sm:$0xc] %vm184, %v183
    %s188 = scalar_lea.vmem [#allocation0], 12
    %189 = vst.msk [vmem:[%s188] sm:$0x30] %vm184, %v183
    %s190 = scalar_lea.vmem [#allocation0], 18
    %191 = vst.msk [vmem:[%s190] sm:$0xc0] %vm184, %v183
    %s192 = scalar_lea.vmem [#allocation1], 66
    %v193 = vld [vmem:[%s192] ss:$8 sm:$0xf]
    %s194 = scalar_lea.vmem [#allocation1], 66
    %v195 = vld [vmem:[%s194] ss:$8 sm:$0xf0]
    %vm196 = vcmask 1047556
    %v197 = vsel %vm196, %v195, %v193
    %198 = vrot.lane.b32.xlu0 %v197, 16
    %v199 = vpop.permute.xlu0 %198
    %vm200 = vcmask 195712
    %s201 = scalar_lea.vmem [#allocation0], 32
    %202 = vst.msk [vmem:[%s201] sm:$0x3] %vm200, %v199
    %s203 = scalar_lea.vmem [#allocation0], 38
    %204 = vst.msk [vmem:[%s203] sm:$0xc] %vm200, %v199
    %s205 = scalar_lea.vmem [#allocation0], 44
    %206 = vst.msk [vmem:[%s205] sm:$0x30] %vm200, %v199
    %s207 = scalar_lea.vmem [#allocation0], 50
    %208 = vst.msk [vmem:[%s207] sm:$0xc0] %vm200, %v199
    %s209 = scalar_lea.vmem [#allocation1], 130
    %v210 = vld [vmem:[%s209] ss:$8 sm:$0xf]
    %211 = vrot.lane.b32.xlu0 %v210, 16
    %v212 = vpop.permute.xlu0 %211
    %vm213 = vcmask 195712
    %s214 = scalar_lea.vmem [#allocation0], 64
    %215 = vst.msk [vmem:[%s214] sm:$0x3] %vm213, %v212
    %s216 = scalar_lea.vmem [#allocation0], 70
    %217 = vst.msk [vmem:[%s216] sm:$0xc] %vm213, %v212
    %s218 = scalar_lea.vmem [#allocation1], 1
    %v219 = vld [vmem:[%s218] ss:$8 sm:$0xf]
    %s220 = scalar_lea.vmem [#allocation1], 1
    %v221 = vld [vmem:[%s220] ss:$8 sm:$0xf0]
    %vm222 = vcmask 1047556
    %v223 = vsel %vm222, %v221, %v219
    %224 = vrot.lane.b32.xlu0 %v223, 8
    %v225 = vpop.permute.xlu0 %224
    %vm226 = vcmask 130112
    %227 = vst.msk [vmem:[#allocation0] sm:$0x3] %vm226, %v225
    %s228 = scalar_lea.vmem [#allocation0], 6
    %229 = vst.msk [vmem:[%s228] sm:$0xc] %vm226, %v225
    %s230 = scalar_lea.vmem [#allocation0], 12
    %231 = vst.msk [vmem:[%s230] sm:$0x30] %vm226, %v225
    %s232 = scalar_lea.vmem [#allocation0], 18
    %233 = vst.msk [vmem:[%s232] sm:$0xc0] %vm226, %v225
    %s234 = scalar_lea.vmem [#allocation1], 65
    %v235 = vld [vmem:[%s234] ss:$8 sm:$0xf]
    %s236 = scalar_lea.vmem [#allocation1], 65
    %v237 = vld [vmem:[%s236] ss:$8 sm:$0xf0]
    %vm238 = vcmask 1047556
    %v239 = vsel %vm238, %v237, %v235
    %240 = vrot.lane.b32.xlu0 %v239, 8
    %v241 = vpop.permute.xlu0 %240
    %vm242 = vcmask 130112
    %s243 = scalar_lea.vmem [#allocation0], 32
    %244 = vst.msk [vmem:[%s243] sm:$0x3] %vm242, %v241
    %s245 = scalar_lea.vmem [#allocation0], 38
    %246 = vst.msk [vmem:[%s245] sm:$0xc] %vm242, %v241
    %s247 = scalar_lea.vmem [#allocation0], 44
    %248 = vst.msk [vmem:[%s247] sm:$0x30] %vm242, %v241
    %s249 = scalar_lea.vmem [#allocation0], 50
    %250 = vst.msk [vmem:[%s249] sm:$0xc0] %vm242, %v241
    %s251 = scalar_lea.vmem [#allocation1], 129
    %v252 = vld [vmem:[%s251] ss:$8 sm:$0xf]
    %253 = vrot.lane.b32.xlu0 %v252, 8
    %v254 = vpop.permute.xlu0 %253
    %vm255 = vcmask 130112
    %s256 = scalar_lea.vmem [#allocation0], 64
    %257 = vst.msk [vmem:[%s256] sm:$0x3] %vm255, %v254
    %s258 = scalar_lea.vmem [#allocation0], 70
    %259 = vst.msk [vmem:[%s258] sm:$0xc] %vm255, %v254
    %s261 = sshllo.u32 0, 2
    %v263 = vld [vmem:[#allocation0] sm:%s261]
    %s264 = sshllo.u32 0, 2
    %265 = vst [vmem:[%s1] sm:%s264] %v263
    %s266 = scalar_lea.vmem [#allocation0], 8
    %v267 = vld [vmem:[%s266] sm:%s261]
    %s268 = sshllo.u32 0, 2
    %s269 = scalar_lea.vmem %s1, 2
    %270 = vst [vmem:[%s269] sm:%s268] %v267
    %s271 = scalar_lea.vmem [#allocation0], 16
    %v272 = vld [vmem:[%s271] sm:%s261]
    %s273 = sshllo.u32 0, 2
    %s274 = smul.addr 2, 2
    %s275 = scalar_lea.vmem %s1, %s274
    %276 = vst [vmem:[%s275] sm:%s273] %v272
    %s277 = scalar_lea.vmem [#allocation0], 24
    %v278 = vld [vmem:[%s277] sm:%s261]
    %s279 = sshllo.u32 0, 2
    %s280 = smul.addr 2, 3
    %s281 = scalar_lea.vmem %s1, %s280
    %282 = vst [vmem:[%s281] sm:%s279] %v278
    %s283 = scalar_lea.vmem [#allocation0], 32
    %v284 = vld [vmem:[%s283] sm:%s261]
    %s285 = sshllo.u32 0, 2
    %s286 = smul.addr 2, 4
    %s287 = scalar_lea.vmem %s1, %s286
    %288 = vst [vmem:[%s287] sm:%s285] %v284
    %s289 = scalar_lea.vmem [#allocation0], 40
    %v290 = vld [vmem:[%s289] sm:%s261]
    %s291 = sshllo.u32 0, 2
    %s292 = smul.addr 2, 5
    %s293 = scalar_lea.vmem %s1, %s292
    %294 = vst [vmem:[%s293] sm:%s291] %v290
    %s295 = scalar_lea.vmem [#allocation0], 48
    %v296 = vld [vmem:[%s295] sm:%s261]
    %s297 = sshllo.u32 0, 2
    %s298 = smul.addr 2, 6
    %s299 = scalar_lea.vmem %s1, %s298
    %300 = vst [vmem:[%s299] sm:%s297] %v296
    %s301 = scalar_lea.vmem [#allocation0], 56
    %v302 = vld [vmem:[%s301] sm:%s261]
    %s303 = sshllo.u32 0, 2
    %s304 = smul.addr 2, 7
    %s305 = scalar_lea.vmem %s1, %s304
    %306 = vst [vmem:[%s305] sm:%s303] %v302
    %s307 = scalar_lea.vmem [#allocation0], 64
    %v308 = vld [vmem:[%s307] sm:%s261]
    %s309 = sshllo.u32 0, 2
    %s310 = smul.addr 2, 8
    %s311 = scalar_lea.vmem %s1, %s310
    %312 = vst [vmem:[%s311] sm:%s309] %v308
    %s313 = scalar_lea.vmem [#allocation0], 72
    %v314 = vld [vmem:[%s313] sm:%s261]
    %s315 = sshllo.u32 0, 2
    %s316 = smul.addr 2, 9
    %s317 = scalar_lea.vmem %s1, %s316
    %318 = vst [vmem:[%s317] sm:%s315] %v314

// kernel: encoder_forward.6
$region0: #{encoder_forward.6}
  #allocation0 [shape = 'u32[]', space=smem, size = 0x4, offset = 0x4, fixed_abs, tag = 'smem constant byte address 0x4 - core index']
  #allocation1 [shape = 'u32[144,128]{1,0:T(1,128)}', space=vmem, size = 0x12000, scoped, tag = 'internal scratch']
  %s0 = inlined_call_operand.vmem [shape: f32[2,10,32], index: 0, kind: input, shape index: {}]
  %s1 = inlined_call_operand.vmem [shape: f32[2,10,32], index: 1, kind: input, shape index: {}]
  %s2 = inlined_call_operand.vmem [shape: f32[2,10,32], index: 2, kind: input, shape index: {}]
  %s3 = inlined_call_operand.vmem [shape: f32[2,1,10], index: 3, kind: input, shape index: {}]
  %s4 = inlined_call_operand.vmem [shape: f32[1,32], index: 4, kind: input, shape index: {}]
  %s5 = inlined_call_operand.vmem [shape: f32[1,32], index: 5, kind: input, shape index: {}]
  %s6 = inlined_call_operand.vmem [shape: f32[5,32,32], index: 6, kind: input, shape index: {}]
  %s7 = inlined_call_operand.vmem [shape: f32[32,32], index: 7, kind: input, shape index: {}]
  %s8 = inlined_call_operand.vmem [shape: f32[2,10,32], index: 8, kind: output, shape index: {}]
  %s9 = sld [smem:[#allocation0]]
  $region65: #{encoder_forward.6} parent=0
    _
  %s11 = ssub.s32 1, %s9
  %s12 = scalar_select 0, %s11, %s9
  loop: start=0, step=1, limit=4
  $region2: #{encoder_forward.6} parent=0 // loop_pre_header
    _
  $region3: #{encoder_forward.6} parent=0 // loop_header
    %s14 = sphi 0, %s18
    %p15 = scmp.ge.s32.totalorder %s14, 4
    %s24 = sphi 0, %s26
    %s27 = sphi 0, %s24
    %s28 = sphi 0, %s27
    %s44 = sphi 0, %s28
    %s50 = sphi 0, %s52
    %s53 = sphi 0, %s50
    %s54 = sphi 0, %s53
    %s70 = sphi 0, %s54
    %s76 = sphi 0, %s78
    %s79 = sphi 0, %s76
    %s80 = sphi 0, %s79
    %s96 = sphi 0, %s80
    %s102 = sphi 0, %s104
    %s105 = sphi 0, %s102
    %s106 = sphi 0, %s105
    %s122 = sphi 0, %s106
    %s126 = sphi 0, %s126
    %s128 = sphi 0, %s126
    %s129 = sphi 0, %s128
    %s143 = sphi 0, %s129
    %s147 = sphi 0, %s147
    %s149 = sphi 0, %s147
    %s150 = sphi 0, %s149
    %s164 = sphi 0, %s150
    %s168 = sphi 0, %s168
    %s170 = sphi 0, %s168
    %s171 = sphi 0, %s170
    %s185 = sphi 0, %s171
    %s189 = sphi 0, %s189
    %s191 = sphi 0, %s189
    %s192 = sphi 0, %s191
    %s206 = sphi 0, %s192
    %s212 = sphi 0, %s214
    %s215 = sphi 0, %s212
    %s216 = sphi 0, %s215
    %s232 = sphi 0, %s216
  $region4: #{encoder_forward.6} parent=0 // loop_header_branch
    %17 = sbr.rel (%p15) target = $region8
  $region5: #{encoder_forward.6} parent=0 // loop_body
    %s19 = ssub.s32 %s14, 1
    %s20 = ssub.s32 %s14, 2
    %s21 = sadd.s32 %s14, 1
    %s22 = ssub.s32 %s14, %s21
    %p23 = scmp.eq.s32.totalorder %s22, 0
    %s25 = sadd.s32 %s24, 1
    %s26 = scalar_select %p23, %s24, %s25
    %p29 = pneg %p23
    %p30 = scmp.eq.s32.totalorder %s14, 1
    %p31 = por %p29, %p30
    %p32 = scmp.ne.s32.totalorder %s24, %s27
    %p33 = scmp.eq.s32.totalorder %s14, 0
    %p34 = por %p32, %p33
    %p35 = scmp.ne.s32.totalorder %s24, %s27
    %p36 = scmp.eq.s32.totalorder %s19, 1
    %p37 = por %p35, %p36
    %p38 = scmp.ne.s32.totalorder %s27, %s28
    %p39 = scmp.eq.s32.totalorder %s19, 0
    %p40 = por %p38, %p39
    %p41 = scmp.ne.s32.totalorder %s27, %s28
    %p42 = scmp.eq.s32.totalorder %s20, 1
    %p43 = por %p41, %p42
    %p45 = scmp.ne.s32.totalorder %s28, %s44
    %p46 = scmp.eq.s32.totalorder %s20, 0
    %p47 = por %p45, %p46
    %s48 = ssub.s32 %s14, %s21
    %p49 = scmp.eq.s32.totalorder %s48, 0
    %s51 = sadd.s32 %s50, 1
    %s52 = scalar_select %p49, %s50, %s51
    %p55 = pneg %p49
    %p56 = scmp.eq.s32.totalorder %s14, 1
    %p57 = por %p55, %p56
    %p58 = scmp.ne.s32.totalorder %s50, %s53
    %p59 = scmp.eq.s32.totalorder %s14, 0
    %p60 = por %p58, %p59
    %p61 = scmp.ne.s32.totalorder %s50, %s53
    %p62 = scmp.eq.s32.totalorder %s19, 1
    %p63 = por %p61, %p62
    %p64 = scmp.ne.s32.totalorder %s53, %s54
    %p65 = scmp.eq.s32.totalorder %s19, 0
    %p66 = por %p64, %p65
    %p67 = scmp.ne.s32.totalorder %s53, %s54
    %p68 = scmp.eq.s32.totalorder %s20, 1
    %p69 = por %p67, %p68
    %p71 = scmp.ne.s32.totalorder %s54, %s70
    %p72 = scmp.eq.s32.totalorder %s20, 0
    %p73 = por %p71, %p72
    %s74 = ssub.s32 %s14, %s21
    %p75 = scmp.eq.s32.totalorder %s74, 0
    %s77 = sadd.s32 %s76, 1
    %s78 = scalar_select %p75, %s76, %s77
    %p81 = pneg %p75
    %p82 = scmp.eq.s32.totalorder %s14, 1
    %p83 = por %p81, %p82
    %p84 = scmp.ne.s32.totalorder %s76, %s79
    %p85 = scmp.eq.s32.totalorder %s14, 0
    %p86 = por %p84, %p85
    %p87 = scmp.ne.s32.totalorder %s76, %s79
    %p88 = scmp.eq.s32.totalorder %s19, 1
    %p89 = por %p87, %p88
    %p90 = scmp.ne.s32.totalorder %s79, %s80
    %p91 = scmp.eq.s32.totalorder %s19, 0
    %p92 = por %p90, %p91
    %p93 = scmp.ne.s32.totalorder %s79, %s80
    %p94 = scmp.eq.s32.totalorder %s20, 1
    %p95 = por %p93, %p94
    %p97 = scmp.ne.s32.totalorder %s80, %s96
    %p98 = scmp.eq.s32.totalorder %s20, 0
    %p99 = por %p97, %p98
    %s100 = ssub.s32 %s14, %s21
    %p101 = scmp.eq.s32.totalorder %s100, 0
    %s103 = sadd.s32 %s102, 1
    %s104 = scalar_select %p101, %s102, %s103
    %p107 = pneg %p101
    %p108 = scmp.eq.s32.totalorder %s14, 1
    %p109 = por %p107, %p108
    %p110 = scmp.ne.s32.totalorder %s102, %s105
    %p111 = scmp.eq.s32.totalorder %s14, 0
    %p112 = por %p110, %p111
    %p113 = scmp.ne.s32.totalorder %s102, %s105
    %p114 = scmp.eq.s32.totalorder %s19, 1
    %p115 = por %p113, %p114
    %p116 = scmp.ne.s32.totalorder %s105, %s106
    %p117 = scmp.eq.s32.totalorder %s19, 0
    %p118 = por %p116, %p117
    %p119 = scmp.ne.s32.totalorder %s105, %s106
    %p120 = scmp.eq.s32.totalorder %s20, 1
    %p121 = por %p119, %p120
    %p123 = scmp.ne.s32.totalorder %s106, %s122
    %p124 = scmp.eq.s32.totalorder %s20, 0
    %p125 = por %p123, %p124
    %s127 = sadd.s32 %s126, 1
    %p130 = scmp.eq.s32.totalorder %s14, 1
    %p131 = scmp.ne.s32.totalorder %s126, %s128
    %p132 = scmp.eq.s32.totalorder %s14, 0
    %p133 = por %p131, %p132
    %p134 = scmp.ne.s32.totalorder %s126, %s128
    %p135 = scmp.eq.s32.totalorder %s19, 1
    %p136 = por %p134, %p135
    %p137 = scmp.ne.s32.totalorder %s128, %s129
    %p138 = scmp.eq.s32.totalorder %s19, 0
    %p139 = por %p137, %p138
    %p140 = scmp.ne.s32.totalorder %s128, %s129
    %p141 = scmp.eq.s32.totalorder %s20, 1
    %p142 = por %p140, %p141
    %p144 = scmp.ne.s32.totalorder %s129, %s143
    %p145 = scmp.eq.s32.totalorder %s20, 0
    %p146 = por %p144, %p145
    %s148 = sadd.s32 %s147, 1
    %p151 = scmp.eq.s32.totalorder %s14, 1
    %p152 = scmp.ne.s32.totalorder %s147, %s149
    %p153 = scmp.eq.s32.totalorder %s14, 0
    %p154 = por %p152, %p153
    %p155 = scmp.ne.s32.totalorder %s147, %s149
    %p156 = scmp.eq.s32.totalorder %s19, 1
    %p157 = por %p155, %p156
    %p158 = scmp.ne.s32.totalorder %s149, %s150
    %p159 = scmp.eq.s32.totalorder %s19, 0
    %p160 = por %p158, %p159
    %p161 = scmp.ne.s32.totalorder %s149, %s150
    %p162 = scmp.eq.s32.totalorder %s20, 1
    %p163 = por %p161, %p162
    %p165 = scmp.ne.s32.totalorder %s150, %s164
    %p166 = scmp.eq.s32.totalorder %s20, 0
    %p167 = por %p165, %p166
    %s169 = sadd.s32 %s168, 1
    %p172 = scmp.eq.s32.totalorder %s14, 1
    %p173 = scmp.ne.s32.totalorder %s168, %s170
    %p174 = scmp.eq.s32.totalorder %s14, 0
    %p175 = por %p173, %p174
    %p176 = scmp.ne.s32.totalorder %s168, %s170
    %p177 = scmp.eq.s32.totalorder %s19, 1
    %p178 = por %p176, %p177
    %p179 = scmp.ne.s32.totalorder %s170, %s171
    %p180 = scmp.eq.s32.totalorder %s19, 0
    %p181 = por %p179, %p180
    %p182 = scmp.ne.s32.totalorder %s170, %s171
    %p183 = scmp.eq.s32.totalorder %s20, 1
    %p184 = por %p182, %p183
    %p186 = scmp.ne.s32.totalorder %s171, %s185
    %p187 = scmp.eq.s32.totalorder %s20, 0
    %p188 = por %p186, %p187
    %s190 = sadd.s32 %s189, 1
    %p193 = scmp.eq.s32.totalorder %s14, 1
    %p194 = scmp.ne.s32.totalorder %s189, %s191
    %p195 = scmp.eq.s32.totalorder %s14, 0
    %p196 = por %p194, %p195
    %p197 = scmp.ne.s32.totalorder %s189, %s191
    %p198 = scmp.eq.s32.totalorder %s19, 1
    %p199 = por %p197, %p198
    %p200 = scmp.ne.s32.totalorder %s191, %s192
    %p201 = scmp.eq.s32.totalorder %s19, 0
    %p202 = por %p200, %p201
    %p203 = scmp.ne.s32.totalorder %s191, %s192
    %p204 = scmp.eq.s32.totalorder %s20, 1
    %p205 = por %p203, %p204
    %p207 = scmp.ne.s32.totalorder %s192, %s206
    %p208 = scmp.eq.s32.totalorder %s20, 0
    %p209 = por %p207, %p208
    %s210 = ssub.s32 %s14, %s21
    %p211 = scmp.eq.s32.totalorder %s210, 0
    %s213 = sadd.s32 %s212, 1
    %s214 = scalar_select %p211, %s212, %s213
    %p217 = pneg %p211
    %p218 = scmp.eq.s32.totalorder %s14, 1
    %p219 = por %p217, %p218
    %p220 = scmp.ne.s32.totalorder %s212, %s215
    %p221 = scmp.eq.s32.totalorder %s14, 0
    %p222 = por %p220, %p221
    %p223 = scmp.ne.s32.totalorder %s212, %s215
    %p224 = scmp.eq.s32.totalorder %s19, 1
    %p225 = por %p223, %p224
    %p226 = scmp.ne.s32.totalorder %s215, %s216
    %p227 = scmp.eq.s32.totalorder %s19, 0
    %p228 = por %p226, %p227
    %p229 = scmp.ne.s32.totalorder %s215, %s216
    %p230 = scmp.eq.s32.totalorder %s20, 1
    %p231 = por %p229, %p230
    %p233 = scmp.ne.s32.totalorder %s216, %s232
    %p234 = scmp.eq.s32.totalorder %s20, 0
    %p235 = por %p233, %p234
    %p236 = scmp.le.s32.totalorder 1, %s14
    %p237 = scmp.lt.s32.totalorder %s14, 3
    %p238 = pnand %p236, %p237
    %p239 = pneg %p238
    // Predicated region
    $region9: #{encoder_forward.6} parent=5 // pred_check
      _
    $region10: #{encoder_forward.6} parent=5 // pred_check_branch
      %241 = sbr.rel (%p238) target = $region12
    $region11: #{encoder_forward.6} parent=5 // pred_region
      %s242 = ssub.s32 %s14, 1
      // Predicated region
      $region13: #{encoder_forward.6} parent=11 // pred_check
        %p243 = pneg %p139
      $region14: #{encoder_forward.6} parent=11 // pred_check_branch
        %245 = sbr.rel (%p243) target = $region16
      $region15: #{encoder_forward.6} parent=11 // pred_region
        _
      $region16: #{encoder_forward.6} parent=11 // pred_fallthru
        _
      // Predicated region
      $region17: #{encoder_forward.6} parent=11 // pred_check
        %p246 = pneg %p160
      $region18: #{encoder_forward.6} parent=11 // pred_check_branch
        %248 = sbr.rel (%p246) target = $region20
      $region19: #{encoder_forward.6} parent=11 // pred_region
        _
      $region20: #{encoder_forward.6} parent=11 // pred_fallthru
        _
      // Predicated region
      $region21: #{encoder_forward.6} parent=11 // pred_check
        %p249 = pneg %p181
      $region22: #{encoder_forward.6} parent=11 // pred_check_branch
        %251 = sbr.rel (%p249) target = $region24
      $region23: #{encoder_forward.6} parent=11 // pred_region
        _
      $region24: #{encoder_forward.6} parent=11 // pred_fallthru
        _
      // Predicated region
      $region25: #{encoder_forward.6} parent=11 // pred_check
        %p252 = pneg %p202
      $region26: #{encoder_forward.6} parent=11 // pred_check_branch
        %254 = sbr.rel (%p252) target = $region28
      $region27: #{encoder_forward.6} parent=11 // pred_region
        _
      $region28: #{encoder_forward.6} parent=11 // pred_fallthru
        _
    $region12: #{encoder_forward.6} parent=5 // pred_fallthru
      _
    %p255 = scmp.lt.s32.totalorder %s14, 2
    // Predicated region
    $region29: #{encoder_forward.6} parent=5 // pred_check
      %p256 = pneg %p255
    $region30: #{encoder_forward.6} parent=5 // pred_check_branch
      %258 = sbr.rel (%p256) target = $region32
    $region31: #{encoder_forward.6} parent=5 // pred_region
      // Predicated region
      $region33: #{encoder_forward.6} parent=31 // pred_check
        %p259 = pneg %p34
      $region34: #{encoder_forward.6} parent=31 // pred_check_branch
        %261 = sbr.rel (%p259) target = $region36
      $region35: #{encoder_forward.6} parent=31 // pred_region
        %p262 = scmp.lt.s32.totalorder %s14, 1
        %s263 = scalar_select %p262, %s14, 1
        %s264 = smul.addr %s263, 2
        %s265 = smul.addr %s264, 8
        %s266 = scalar_lea.vmem %s0, %s265
      $region36: #{encoder_forward.6} parent=31 // pred_fallthru
        _
      // Predicated region
      $region37: #{encoder_forward.6} parent=31 // pred_check
        %p267 = pneg %p60
      $region38: #{encoder_forward.6} parent=31 // pred_check_branch
        %269 = sbr.rel (%p267) target = $region40
      $region39: #{encoder_forward.6} parent=31 // pred_region
        %p270 = scmp.lt.s32.totalorder %s14, 1
        %s271 = scalar_select %p270, %s14, 1
        %s272 = smul.addr %s271, 2
        %s273 = smul.addr %s272, 8
        %s274 = scalar_lea.vmem %s1, %s273
      $region40: #{encoder_forward.6} parent=31 // pred_fallthru
        _
      // Predicated region
      $region41: #{encoder_forward.6} parent=31 // pred_check
        %p275 = pneg %p86
      $region42: #{encoder_forward.6} parent=31 // pred_check_branch
        %277 = sbr.rel (%p275) target = $region44
      $region43: #{encoder_forward.6} parent=31 // pred_region
        %p278 = scmp.lt.s32.totalorder %s14, 1
        %s279 = scalar_select %p278, %s14, 1
        %s280 = smul.addr %s279, 2
        %s281 = smul.addr %s280, 8
        %s282 = scalar_lea.vmem %s2, %s281
      $region44: #{encoder_forward.6} parent=31 // pred_fallthru
        _
      // Predicated region
      $region45: #{encoder_forward.6} parent=31 // pred_check
        %p283 = pneg %p112
      $region46: #{encoder_forward.6} parent=31 // pred_check_branch
        %285 = sbr.rel (%p283) target = $region48
      $region47: #{encoder_forward.6} parent=31 // pred_region
        %p286 = scmp.lt.s32.totalorder %s14, 1
        %s287 = scalar_select %p286, %s14, 1
        %s288 = scalar_lea.vmem %s3, %s287
      $region48: #{encoder_forward.6} parent=31 // pred_fallthru
        _
    $region32: #{encoder_forward.6} parent=5 // pred_fallthru
      _
    %p289 = scmp.le.s32.totalorder 1, %s14
    %p290 = scmp.lt.s32.totalorder %s14, 3
    %p291 = pnand %p289, %p290
    %p292 = pneg %p291
    // Predicated region
    $region49: #{encoder_forward.6} parent=5 // pred_check
      _
    $region50: #{encoder_forward.6} parent=5 // pred_check_branch
      %294 = sbr.rel (%p291) target = $region52
    $region51: #{encoder_forward.6} parent=5 // pred_region
      %s295 = ssub.s32 %s14, 1
      %p296 = scmp.lt.s32.totalorder %s19, 1
      %s297 = scalar_select %p296, %s19, 1
      %s298 = smul.addr %s297, 2
      %s299 = smul.addr %s298, 8
      %s300 = scalar_lea.vmem %s0, %s299
      %p301 = pneg %p40
      %p302 = pneg %p37
      %p303 = scmp.lt.s32.totalorder %s19, 1
      %s304 = scalar_select %p303, %s19, 1
      %s305 = smul.addr %s304, 2
      %s306 = smul.addr %s305, 8
      %s307 = scalar_lea.vmem %s1, %s306
      %p308 = pneg %p66
      %p309 = pneg %p63
      %p310 = scmp.lt.s32.totalorder %s19, 1
      %s311 = scalar_select %p310, %s19, 1
      %s312 = smul.addr %s311, 2
      %s313 = smul.addr %s312, 8
      %s314 = scalar_lea.vmem %s2, %s313
      %p315 = pneg %p92
      %p316 = pneg %p89
      %p317 = scmp.lt.s32.totalorder %s19, 1
      %s318 = scalar_select %p317, %s19, 1
      %s319 = scalar_lea.vmem %s3, %s318
      %p320 = pneg %p118
      %p321 = pneg %p115
      %p322 = pneg %p139
      %p323 = pneg %p136
      %p324 = pneg %p160
      %p325 = pneg %p157
      %p326 = pneg %p181
      %p327 = pneg %p178
      %p328 = pneg %p202
      %p329 = pneg %p199
      %p330 = pneg %p228
      %p331 = pneg %p225
      %p332 = scmp.lt.s32.totalorder %s19, 1
      %s333 = scalar_select %p332, %s19, 1
      %s334 = smul.addr %s333, 2
      %s335 = smul.addr %s334, 8
      %s336 = scalar_lea.vmem %s8, %s335
      %p337 = scmp.lt.s32.totalorder %s19, 1
      %s338 = scalar_select %p337, %s19, 1
      %s339 = smul.addr %s338, 2
      %s340 = smul.addr %s339, 8
      %s341 = scalar_lea.vmem %s0, %s340
      %p342 = scmp.lt.s32.totalorder %s19, 1
      %s343 = scalar_select %p342, %s19, 1
      %s344 = smul.addr %s343, 2
      %s345 = smul.addr %s344, 8
      %s346 = scalar_lea.vmem %s1, %s345
      %p347 = scmp.lt.s32.totalorder %s19, 1
      %s348 = scalar_select %p347, %s19, 1
      %s349 = smul.addr %s348, 2
      %s350 = smul.addr %s349, 8
      %s351 = scalar_lea.vmem %s2, %s350
      %p352 = scmp.lt.s32.totalorder %s19, 1
      %s353 = scalar_select %p352, %s19, 1
      %s354 = scalar_lea.vmem %s3, %s353
      %p355 = scmp.lt.s32.totalorder %s19, 1
      %s356 = scalar_select %p355, %s19, 1
      %s357 = smul.addr %s356, 2
      %s358 = smul.addr %s357, 8
      %s359 = scalar_lea.vmem %s8, %s358
      %v360 = vld [vmem:[%s341] sm:$0xff]
      %v361 = vld [vmem:[%s341 + $0x8] sm:$0x3]
      %v362 = vld [vmem:[%s346] sm:$0xff]
      %v363 = vld [vmem:[%s346 + $0x8] sm:$0x3]
      %v364 = vld [vmem:[%s351] sm:$0xff]
      %v365 = vld [vmem:[%s351 + $0x8] sm:$0x3]
      %v366 = vld [vmem:[%s354] sm:$0x1]
      %vm367 = vcmask 261120
      %v368 = vsel %vm367, %v360, 0.0
      %369 = vadd.xlane.f32.xlu0 %v368
      %v370 = vpop.xlane.xlu0 %369
      %vm371 = vcmask 254976
      %v372 = vsel %vm371, %v361, 0.0
      %373 = vadd.xlane.f32.xlu0 %v372
      %v374 = vpop.xlane.xlu0 %373
      %v375 = vrcp.pop 32.0
      %v376 = vmul.f32 %v370, %v375
      %v377 = vmul.f32 %v374, %v375
      %v378 = vsub.f32 %v360, %v376
      %v379 = vsub.f32 %v361, %v377
      %v380 = vmul.f32 %v378, %v378
      %v381 = vmul.f32 %v379, %v379
      %v382 = vsel %vm367, %v380, 0.0
      %383 = vadd.xlane.f32.xlu0 %v382
      %v384 = vpop.xlane.xlu0 %383
      %v385 = vsel %vm371, %v381, 0.0
      %386 = vadd.xlane.f32.xlu0 %v385
      %v387 = vpop.xlane.xlu0 %386
      %v388 = vmul.f32 %v384, %v375
      %v389 = vmul.f32 %v387, %v375
      %v390 = vadd.f32 %v388, 1e-05
      %v391 = vadd.f32 %v389, 1e-05
      %v392 = vrsqrt.pop %v390
      %v393 = vrsqrt.pop %v391
      %v394 = vmul.f32 %v378, %v392
      %v395 = vmul.f32 %v379, %v393
      %v396 = vld [vmem:[%s4] sm:$0x1]
      %v398 = vlaneseq
      %v399 = vshrl.u32 %v398, 7
      %v400 = vsub.s32 0, %v399
      %v401 = vrot.slane %v396, %v400
      %v403 = vmul.f32 %v394, %v401
      %v404 = vmul.f32 %v395, %v401
      %v405 = vld [vmem:[%s5] sm:$0x1]
      %v407 = vlaneseq
      %v408 = vshrl.u32 %v407, 7
      %v409 = vsub.s32 0, %v408
      %v410 = vrot.slane %v405, %v409
      %v412 = vadd.f32 %v403, %v410
      %v413 = vadd.f32 %v404, %v410
      %v414 = vld [vmem:[%s6] sm:$0xff]
      %v415 = vld [vmem:[%s6 + $0x8] sm:$0xff]
      %v416 = vld [vmem:[%s6 + $0x10] sm:$0xff]
      %v417 = vld [vmem:[%s6 + $0x18] sm:$0xff]
      %v419 = vsel %vm367, %v412, 0
      %v422 = vsel %vm367, %v413, 0
      %424 = vmatprep.subr.mxu0 0.0
      %425 = vmatpush1.msra.mxu0 %v414
      %426 = vmatprep.subr.mxu0 0.0
      %427 = vmatpush1.msra.mxu0 %v415
      %428 = vmatprep.subr.mxu0 0.0
      %429 = vmatpush1.msra.mxu0 %v416
      %430 = vmatprep.subr.mxu0 0.0
      %431 = vmatpush1.msra.mxu0 %v417
      %432 = vmatprep.subr.mxu0 0.0
      %433 = vmatpush1.msra.mxu0 0.0
      %434 = vmatprep.subr.mxu0 0.0
      %435 = vmatpush1.msra.mxu0 0.0
      %436 = vmatprep.subr.mxu0 0.0
      %437 = vmatpush1.msra.mxu0 0.0
      %438 = vmatprep.subr.mxu0 0.0
      %439 = vmatpush1.msra.mxu0 0.0
      %440 = vmatprep.subr.mxu0 0.0
      %441 = vmatpush1.msra.mxu0 0.0
      %442 = vmatprep.subr.mxu0 0.0
      %443 = vmatpush1.msra.mxu0 0.0
      %444 = vmatprep.subr.mxu0 0.0
      %445 = vmatpush1.msra.mxu0 0.0
      %446 = vmatprep.subr.mxu0 0.0
      %447 = vmatpush1.msra.mxu0 0.0
      %448 = vmatprep.subr.mxu0 0.0
      %449 = vmatpush1.msra.mxu0 0.0
      %450 = vmatprep.subr.mxu0 0.0
      %451 = vmatpush1.msra.mxu0 0.0
      %452 = vmatprep.subr.mxu0 0.0
      %453 = vmatpush1.msra.mxu0 0.0
      %454 = vmatprep.subr.mxu0 0.0
      %455 = vmatpush1.msra.mxu0 0.0
      %456 = vmatprep.subr.mxu0 0.0
      %457 = vmatpush1.msra.mxu0 0.0
      %458 = vmatprep.subr.mxu0 0.0
      %459 = vmatpush1.msra.mxu0 0.0
      %460 = vmatprep.subr.mxu0 0.0
      %461 = vmatpush1.msra.mxu0 0.0
      %462 = vmatprep.subr.mxu0 0.0
      %463 = vmatpush1.msra.mxu0 0.0
      %464 = vmatprep.subr.mxu0 0.0
      %465 = vmatpush1.msra.mxu0 0.0
      %466 = vmatprep.subr.mxu0 0.0
      %467 = vmatpush1.msra.mxu0 0.0
      %468 = vmatprep.subr.mxu0 0.0
      %469 = vmatpush1.msra.mxu0 0.0
      %470 = vmatprep.subr.mxu0 0.0
      %471 = vmatpush1.msra.mxu0 0.0
      %472 = vmatprep.subr.mxu0 0.0
      %473 = vmatpush1.msra.mxu0 0.0
      %474 = vmatprep.subr.mxu0 0.0
      %475 = vmatpush1.msra.mxu0 0.0
      %476 = vmatprep.subr.mxu0 0.0
      %477 = vmatpush1.msra.mxu0 0.0
      %478 = vmatprep.subr.mxu0 0.0
      %479 = vmatpush1.msra.mxu0 0.0
      %480 = vmatprep.subr.mxu0 0.0
      %481 = vmatpush1.msra.mxu0 0.0
      %482 = vmatprep.subr.mxu0 0.0
      %483 = vmatpush1.msra.mxu0 0.0
      %484 = vmatprep.subr.mxu0 0.0
      %485 = vmatpush1.msra.mxu0 0.0
      %486 = vmatprep.subr.mxu0 0.0
      %487 = vmatpush1.msra.mxu0 0.0
      %488 = vmatprep.mubr.f32.mxu0 0.0
      %489 = vmatmul.mubr.f32.gmra.mrb[0].mxu0 %v419
      %v490 = vpop.f32.mrb[0].mxu0
      %v491 = vadd.f32 0.0, %v490
      %v492 = vpop.f32.mrb[0].mxu0
      %493 = vmatprep.mubr.f32.mxu0 0.0
      %494 = vmatmul.mubr.f32.gmra.mrb[0].mxu0 %v422
      %v495 = vpop.f32.mrb[0].mxu0
      %v496 = vadd.f32 0.0, %v495
      %v497 = vpop.f32.mrb[0].mxu0
      %498 = vdwg.mxu0
      %s499 = scalar_lea.vmem %s6, 32
      %v500 = vld [vmem:[%s499] sm:$0xff]
      %v501 = vld [vmem:[%s499 + $0x8] sm:$0xff]
      %v502 = vld [vmem:[%s499 + $0x10] sm:$0xff]
      %v503 = vld [vmem:[%s499 + $0x18] sm:$0xff]
      %504 = vmatprep.subr.mxu0 0.0
      %505 = vmatpush1.msra.mxu0 %v500
      %506 = vmatprep.subr.mxu0 0.0
      %507 = vmatpush1.msra.mxu0 %v501
      %508 = vmatprep.subr.mxu0 0.0
      %509 = vmatpush1.msra.mxu0 %v502
      %510 = vmatprep.subr.mxu0 0.0
      %511 = vmatpush1.msra.mxu0 %v503
      %512 = vmatprep.subr.mxu0 0.0
      %513 = vmatpush1.msra.mxu0 0.0
      %514 = vmatprep.subr.mxu0 0.0
      %515 = vmatpush1.msra.mxu0 0.0
      %516 = vmatprep.subr.mxu0 0.0
      %517 = vmatpush1.msra.mxu0 0.0
      %518 = vmatprep.subr.mxu0 0.0
      %519 = vmatpush1.msra.mxu0 0.0
      %520 = vmatprep.subr.mxu0 0.0
      %521 = vmatpush1.msra.mxu0 0.0
      %522 = vmatprep.subr.mxu0 0.0
      %523 = vmatpush1.msra.mxu0 0.0
      %524 = vmatprep.subr.mxu0 0.0
      %525 = vmatpush1.msra.mxu0 0.0
      %526 = vmatprep.subr.mxu0 0.0
      %527 = vmatpush1.msra.mxu0 0.0
      %528 = vmatprep.subr.mxu0 0.0
      %529 = vmatpush1.msra.mxu0 0.0
      %530 = vmatprep.subr.mxu0 0.0
      %531 = vmatpush1.msra.mxu0 0.0
      %532 = vmatprep.subr.mxu0 0.0
      %533 = vmatpush1.msra.mxu0 0.0
      %534 = vmatprep.subr.mxu0 0.0
      %535 = vmatpush1.msra.mxu0 0.0
      %536 = vmatprep.subr.mxu0 0.0
      %537 = vmatpush1.msra.mxu0 0.0
      %538 = vmatprep.subr.mxu0 0.0
      %539 = vmatpush1.msra.mxu0 0.0
      %540 = vmatprep.subr.mxu0 0.0
      %541 = vmatpush1.msra.mxu0 0.0
      %542 = vmatprep.subr.mxu0 0.0
      %543 = vmatpush1.msra.mxu0 0.0
      %544 = vmatprep.subr.mxu0 0.0
      %545 = vmatpush1.msra.mxu0 0.0
      %546 = vmatprep.subr.mxu0 0.0
      %547 = vmatpush1.msra.mxu0 0.0
      %548 = vmatprep.subr.mxu0 0.0
      %549 = vmatpush1.msra.mxu0 0.0
      %550 = vmatprep.subr.mxu0 0.0
      %551 = vmatpush1.msra.mxu0 0.0
      %552 = vmatprep.subr.mxu0 0.0
      %553 = vmatpush1.msra.mxu0 0.0
      %554 = vmatprep.subr.mxu0 0.0
      %555 = vmatpush1.msra.mxu0 0.0
      %556 = vmatprep.subr.mxu0 0.0
      %557 = vmatpush1.msra.mxu0 0.0
      %558 = vmatprep.subr.mxu0 0.0
      %559 = vmatpush1.msra.mxu0 0.0
      %560 = vmatprep.subr.mxu0 0.0
      %561 = vmatpush1.msra.mxu0 0.0
      %562 = vmatprep.subr.mxu0 0.0
      %563 = vmatpush1.msra.mxu0 0.0
      %564 = vmatprep.subr.mxu0 0.0
      %565 = vmatpush1.msra.mxu0 0.0
      %566 = vmatprep.subr.mxu0 0.0
      %567 = vmatpush1.msra.mxu0 0.0
      %568 = vmatprep.mubr.f32.mxu0 0.0
      %569 = vmatmul.mubr.f32.gmra.mrb[0].mxu0 %v419
      %v570 = vpop.f32.mrb[0].mxu0
      %v571 = vadd.f32 0.0, %v570
      %v572 = vpop.f32.mrb[0].mxu0
      %573 = vmatprep.mubr.f32.mxu0 0.0
      %574 = vmatmul.mubr.f32.gmra.mrb[0].mxu0 %v422
      %v575 = vpop.f32.mrb[0].mxu0
      %v576 = vadd.f32 0.0, %v575
      %v577 = vpop.f32.mrb[0].mxu0
      %578 = vdwg.mxu0
      %s579 = scalar_lea.vmem %s6, 64
      %v580 = vld [vmem:[%s579] sm:$0xff]
      %v581 = vld [vmem:[%s579 + $0x8] sm:$0xff]
      %v582 = vld [vmem:[%s579 + $0x10] sm:$0xff]
      %v583 = vld [vmem:[%s579 + $0x18] sm:$0xff]
      %584 = vmatprep.subr.mxu0 0.0
      %585 = vmatpush1.msra.mxu0 %v580
      %586 = vmatprep.subr.mxu0 0.0
      %587 = vmatpush1.msra.mxu0 %v581
      %588 = vmatprep.subr.mxu0 0.0
      %589 = vmatpush1.msra.mxu0 %v582
      %590 = vmatprep.subr.mxu0 0.0
      %591 = vmatpush1.msra.mxu0 %v583
      %592 = vmatprep.subr.mxu0 0.0
      %593 = vmatpush1.msra.mxu0 0.0
      %594 = vmatprep.subr.mxu0 0.0
      %595 = vmatpush1.msra.mxu0 0.0
      %596 = vmatprep.subr.mxu0 0.0
      %597 = vmatpush1.msra.mxu0 0.0
      %598 = vmatprep.subr.mxu0 0.0
      %599 = vmatpush1.msra.mxu0 0.0
      %600 = vmatprep.subr.mxu0 0.0
      %601 = vmatpush1.msra.mxu0 0.0
      %602 = vmatprep.subr.mxu0 0.0
      %603 = vmatpush1.msra.mxu0 0.0
      %604 = vmatprep.subr.mxu0 0.0
      %605 = vmatpush1.msra.mxu0 0.0
      %606 = vmatprep.subr.mxu0 0.0
      %607 = vmatpush1.msra.mxu0 0.0
      %608 = vmatprep.subr.mxu0 0.0
      %609 = vmatpush1.msra.mxu0 0.0
      %610 = vmatprep.subr.mxu0 0.0
      %611 = vmatpush1.msra.mxu0 0.0
      %612 = vmatprep.subr.mxu0 0.0
      %613 = vmatpush1.msra.mxu0 0.0
      %614 = vmatprep.subr.mxu0 0.0
      %615 = vmatpush1.msra.mxu0 0.0
      %616 = vmatprep.subr.mxu0 0.0
      %617 = vmatpush1.msra.mxu0 0.0
      %618 = vmatprep.subr.mxu0 0.0
      %619 = vmatpush1.msra.mxu0 0.0
      %620 = vmatprep.subr.mxu0 0.0
      %621 = vmatpush1.msra.mxu0 0.0
      %622 = vmatprep.subr.mxu0 0.0
      %623 = vmatpush1.msra.mxu0 0.0
      %624 = vmatprep.subr.mxu0 0.0
      %625 = vmatpush1.msra.mxu0 0.0
      %626 = vmatprep.subr.mxu0 0.0
      %627 = vmatpush1.msra.mxu0 0.0
      %628 = vmatprep.subr.mxu0 0.0
      %629 = vmatpush1.msra.mxu0 0.0
      %630 = vmatprep.subr.mxu0 0.0
      %631 = vmatpush1.msra.mxu0 0.0
      %632 = vmatprep.subr.mxu0 0.0
      %633 = vmatpush1.msra.mxu0 0.0
      %634 = vmatprep.subr.mxu0 0.0
      %635 = vmatpush1.msra.mxu0 0.0
      %636 = vmatprep.subr.mxu0 0.0
      %637 = vmatpush1.msra.mxu0 0.0
      %638 = vmatprep.subr.mxu0 0.0
      %639 = vmatpush1.msra.mxu0 0.0
      %640 = vmatprep.subr.mxu0 0.0
      %641 = vmatpush1.msra.mxu0 0.0
      %642 = vmatprep.subr.mxu0 0.0
      %643 = vmatpush1.msra.mxu0 0.0
      %644 = vmatprep.subr.mxu0 0.0
      %645 = vmatpush1.msra.mxu0 0.0
      %646 = vmatprep.subr.mxu0 0.0
      %647 = vmatpush1.msra.mxu0 0.0
      %648 = vmatprep.mubr.f32.mxu0 0.0
      %649 = vmatmul.mubr.f32.gmra.mrb[0].mxu0 %v419
      %v650 = vpop.f32.mrb[0].mxu0
      %v651 = vadd.f32 0.0, %v650
      %v652 = vpop.f32.mrb[0].mxu0
      %653 = vmatprep.mubr.f32.mxu0 0.0
      %654 = vmatmul.mubr.f32.gmra.mrb[0].mxu0 %v422
      %v655 = vpop.f32.mrb[0].mxu0
      %v656 = vadd.f32 0.0, %v655
      %v657 = vpop.f32.mrb[0].mxu0
      %658 = vdwg.mxu0
      %s659 = scalar_lea.vmem %s6, 96
      %v660 = vld [vmem:[%s659] sm:$0xff]
      %v661 = vld [vmem:[%s659 + $0x8] sm:$0xff]
      %v662 = vld [vmem:[%s659 + $0x10] sm:$0xff]
      %v663 = vld [vmem:[%s659 + $0x18] sm:$0xff]
      %664 = vmatprep.subr.mxu0 0.0
      %665 = vmatpush1.msra.mxu0 %v660
      %666 = vmatprep.subr.mxu0 0.0
      %667 = vmatpush1.msra.mxu0 %v661
      %668 = vmatprep.subr.mxu0 0.0
      %669 = vmatpush1.msra.mxu0 %v662
      %670 = vmatprep.subr.mxu0 0.0
      %671 = vmatpush1.msra.mxu0 %v663
      %672 = vmatprep.subr.mxu0 0.0
      %673 = vmatpush1.msra.mxu0 0.0
      %674 = vmatprep.subr.mxu0 0.0
      %675 = vmatpush1.msra.mxu0 0.0
      %676 = vmatprep.subr.mxu0 0.0
      %677 = vmatpush1.msra.mxu0 0.0
      %678 = vmatprep.subr.mxu0 0.0
      %679 = vmatpush1.msra.mxu0 0.0
      %680 = vmatprep.subr.mxu0 0.0
      %681 = vmatpush1.msra.mxu0 0.0
      %682 = vmatprep.subr.mxu0 0.0
      %683 = vmatpush1.msra.mxu0 0.0
      %684 = vmatprep.subr.mxu0 0.0
      %685 = vmatpush1.msra.mxu0 0.0
      %686 = vmatprep.subr.mxu0 0.0
      %687 = vmatpush1.msra.mxu0 0.0
      %688 = vmatprep.subr.mxu0 0.0
      %689 = vmatpush1.msra.mxu0 0.0
      %690 = vmatprep.subr.mxu0 0.0
      %691 = vmatpush1.msra.mxu0 0.0
      %692 = vmatprep.subr.mxu0 0.0
      %693 = vmatpush1.msra.mxu0 0.0
      %694 = vmatprep.subr.mxu0 0.0
      %695 = vmatpush1.msra.mxu0 0.0
      %696 = vmatprep.subr.mxu0 0.0
      %697 = vmatpush1.msra.mxu0 0.0
      %698 = vmatprep.subr.mxu0 0.0
      %699 = vmatpush1.msra.mxu0 0.0
      %700 = vmatprep.subr.mxu0 0.0
      %701 = vmatpush1.msra.mxu0 0.0
      %702 = vmatprep.subr.mxu0 0.0
      %703 = vmatpush1.msra.mxu0 0.0
      %704 = vmatprep.subr.mxu0 0.0
      %705 = vmatpush1.msra.mxu0 0.0
      %706 = vmatprep.subr.mxu0 0.0
      %707 = vmatpush1.msra.mxu0 0.0
      %708 = vmatprep.subr.mxu0 0.0
      %709 = vmatpush1.msra.mxu0 0.0
      %710 = vmatprep.subr.mxu0 0.0
      %711 = vmatpush1.msra.mxu0 0.0
      %712 = vmatprep.subr.mxu0 0.0
      %713 = vmatpush1.msra.mxu0 0.0
      %714 = vmatprep.subr.mxu0 0.0
      %715 = vmatpush1.msra.mxu0 0.0
      %716 = vmatprep.subr.mxu0 0.0
      %717 = vmatpush1.msra.mxu0 0.0
      %718 = vmatprep.subr.mxu0 0.0
      %719 = vmatpush1.msra.mxu0 0.0
      %720 = vmatprep.subr.mxu0 0.0
      %721 = vmatpush1.msra.mxu0 0.0
      %722 = vmatprep.subr.mxu0 0.0
      %723 = vmatpush1.msra.mxu0 0.0
      %724 = vmatprep.subr.mxu0 0.0
      %725 = vmatpush1.msra.mxu0 0.0
      %726 = vmatprep.subr.mxu0 0.0
      %727 = vmatpush1.msra.mxu0 0.0
      %728 = vmatprep.mubr.f32.mxu0 0.0
      %729 = vmatmul.mubr.f32.gmra.mrb[0].mxu0 %v419
      %v730 = vpop.f32.mrb[0].mxu0
      %v731 = vadd.f32 0.0, %v730
      %v732 = vpop.f32.mrb[0].mxu0
      %733 = vmatprep.mubr.f32.mxu0 0.0
      %734 = vmatmul.mubr.f32.gmra.mrb[0].mxu0 %v422
      %v735 = vpop.f32.mrb[0].mxu0
      %v736 = vadd.f32 0.0, %v735
      %v737 = vpop.f32.mrb[0].mxu0
      %738 = vdwg.mxu0
      %s739 = scalar_lea.vmem %s6, 128
      %v740 = vld [vmem:[%s739] sm:$0xff]
      %v741 = vld [vmem:[%s739 + $0x8] sm:$0xff]
      %v742 = vld [vmem:[%s739 + $0x10] sm:$0xff]
      %v743 = vld [vmem:[%s739 + $0x18] sm:$0xff]
      %744 = vmatprep.subr.mxu0 0.0
      %745 = vmatpush1.msra.mxu0 %v740
      %746 = vmatprep.subr.mxu0 0.0
      %747 = vmatpush1.msra.mxu0 %v741
      %748 = vmatprep.subr.mxu0 0.0
      %749 = vmatpush1.msra.mxu0 %v742
      %750 = vmatprep.subr.mxu0 0.0
      %751 = vmatpush1.msra.mxu0 %v743
      %752 = vmatprep.subr.mxu0 0.0
      %753 = vmatpush1.msra.mxu0 0.0
      %754 = vmatprep.subr.mxu0 0.0
      %755 = vmatpush1.msra.mxu0 0.0
      %756 = vmatprep.subr.mxu0 0.0
      %757 = vmatpush1.msra.mxu0 0.0
      %758 = vmatprep.subr.mxu0 0.0
      %759 = vmatpush1.msra.mxu0 0.0
      %760 = vmatprep.subr.mxu0 0.0
      %761 = vmatpush1.msra.mxu0 0.0
      %762 = vmatprep.subr.mxu0 0.0
      %763 = vmatpush1.msra.mxu0 0.0
      %764 = vmatprep.subr.mxu0 0.0
      %765 = vmatpush1.msra.mxu0 0.0
      %766 = vmatprep.subr.mxu0 0.0
      %767 = vmatpush1.msra.mxu0 0.0
      %768 = vmatprep.subr.mxu0 0.0
      %769 = vmatpush1.msra.mxu0 0.0
      %770 = vmatprep.subr.mxu0 0.0
      %771 = vmatpush1.msra.mxu0 0.0
      %772 = vmatprep.subr.mxu0 0.0
      %773 = vmatpush1.msra.mxu0 0.0
      %774 = vmatprep.subr.mxu0 0.0
      %775 = vmatpush1.msra.mxu0 0.0
      %776 = vmatprep.subr.mxu0 0.0
      %777 = vmatpush1.msra.mxu0 0.0
      %778 = vmatprep.subr.mxu0 0.0
      %779 = vmatpush1.msra.mxu0 0.0
      %780 = vmatprep.subr.mxu0 0.0
      %781 = vmatpush1.msra.mxu0 0.0
      %782 = vmatprep.subr.mxu0 0.0
      %783 = vmatpush1.msra.mxu0 0.0
      %784 = vmatprep.subr.mxu0 0.0
      %785 = vmatpush1.msra.mxu0 0.0
      %786 = vmatprep.subr.mxu0 0.0
      %787 = vmatpush1.msra.mxu0 0.0
      %788 = vmatprep.subr.mxu0 0.0
      %789 = vmatpush1.msra.mxu0 0.0
      %790 = vmatprep.subr.mxu0 0.0
      %791 = vmatpush1.msra.mxu0 0.0
      %792 = vmatprep.subr.mxu0 0.0
      %793 = vmatpush1.msra.mxu0 0.0
      %794 = vmatprep.subr.mxu0 0.0
      %795 = vmatpush1.msra.mxu0 0.0
      %796 = vmatprep.subr.mxu0 0.0
      %797 = vmatpush1.msra.mxu0 0.0
      %798 = vmatprep.subr.mxu0 0.0
      %799 = vmatpush1.msra.mxu0 0.0
      %800 = vmatprep.subr.mxu0 0.0
      %801 = vmatpush1.msra.mxu0 0.0
      %802 = vmatprep.subr.mxu0 0.0
      %803 = vmatpush1.msra.mxu0 0.0
      %804 = vmatprep.subr.mxu0 0.0
      %805 = vmatpush1.msra.mxu0 0.0
      %806 = vmatprep.subr.mxu0 0.0
      %807 = vmatpush1.msra.mxu0 0.0
      %808 = vmatprep.mubr.f32.mxu0 0.0
      %809 = vmatmul.mubr.f32.gmra.mrb[0].mxu0 %v419
      %v810 = vpop.f32.mrb[0].mxu0
      %v811 = vadd.f32 0.0, %v810
      %v812 = vpop.f32.mrb[0].mxu0
      %813 = vmatprep.mubr.f32.mxu0 0.0
      %814 = vmatmul.mubr.f32.gmra.mrb[0].mxu0 %v422
      %v815 = vpop.f32.mrb[0].mxu0
      %v816 = vadd.f32 0.0, %v815
      %v817 = vpop.f32.mrb[0].mxu0
      %818 = vdwg.mxu0
      %v819 = vmul.f32 %v491, %v362
      %v820 = vmul.f32 %v496, %v363
      %v821 = vmul.f32 %v731, %v364
      %v822 = vmul.f32 %v736, %v365
      %v823 = vadd.f32 %v819, %v821
      %v824 = vadd.f32 %v820, %v822
      %v825 = vmul.f32 %v571, %v362
      %v826 = vmul.f32 %v576, %v363
      %v827 = vmul.f32 %v811, %v364
      %v828 = vmul.f32 %v816, %v365
      %v829 = vadd.f32 %v825, %v827
      %v830 = vadd.f32 %v826, %v828
      %vm831 = vcmask 64512
      %v833 = vsel %vm831, %v823, 0
      %v836 = vsel %vm831, %v824, 0
      %v839 = vsel %vm831, %v829, 0
      %v842 = vsel %vm831, %v830, 0
      %844 = vmatprep.subr.mxu0 0.0
      %845 = vmatpush1.xpose.msra.mxu0 %v839
      %846 = vmatprep.subr.mxu0 0.0
      %847 = vmatpush1.xpose.msra.mxu0 %v842
      %848 = vmatprep.subr.mxu0 0.0
      %849 = vmatpush1.xpose.msra.mxu0 0.0
      %850 = vmatprep.subr.mxu0 0.0
      %851 = vmatpush1.xpose.msra.mxu0 0.0
      %852 = vmatprep.subr.mxu0 0.0
      %853 = vmatpush1.xpose.msra.mxu0 0.0
      %854 = vmatprep.subr.mxu0 0.0
      %855 = vmatpush1.xpose.msra.mxu0 0.0
      %856 = vmatprep.subr.mxu0 0.0
      %857 = vmatpush1.xpose.msra.mxu0 0.0
      %858 = vmatprep.subr.mxu0 0.0
      %859 = vmatpush1.xpose.msra.mxu0 0.0
      %860 = vmatprep.subr.mxu0 0.0
      %861 = vmatpush1.xpose.msra.mxu0 0.0
      %862 = vmatprep.subr.mxu0 0.0
      %863 = vmatpush1.xpose.msra.mxu0 0.0
      %864 = vmatprep.subr.mxu0 0.0
      %865 = vmatpush1.xpose.msra.mxu0 0.0
      %866 = vmatprep.subr.mxu0 0.0
      %867 = vmatpush1.xpose.msra.mxu0 0.0
      %868 = vmatprep.subr.mxu0 0.0
      %869 = vmatpush1.xpose.msra.mxu0 0.0
      %870 = vmatprep.subr.mxu0 0.0
      %871 = vmatpush1.xpose.msra.mxu0 0.0
      %872 = vmatprep.subr.mxu0 0.0
      %873 = vmatpush1.xpose.msra.mxu0 0.0
      %874 = vmatprep.subr.mxu0 0.0
      %875 = vmatpush1.xpose.msra.mxu0 0.0
      %876 = vmatprep.subr.mxu0 0.0
      %877 = vmatpush1.xpose.msra.mxu0 0.0
      %878 = vmatprep.subr.mxu0 0.0
      %879 = vmatpush1.xpose.msra.mxu0 0.0
      %880 = vmatprep.subr.mxu0 0.0
      %881 = vmatpush1.xpose.msra.mxu0 0.0
      %882 = vmatprep.subr.mxu0 0.0
      %883 = vmatpush1.xpose.msra.mxu0 0.0
      %884 = vmatprep.subr.mxu0 0.0
      %885 = vmatpush1.xpose.msra.mxu0 0.0
      %886 = vmatprep.subr.mxu0 0.0
      %887 = vmatpush1.xpose.msra.mxu0 0.0
      %888 = vmatprep.subr.mxu0 0.0
      %889 = vmatpush1.xpose.msra.mxu0 0.0
      %890 = vmatprep.subr.mxu0 0.0
      %891 = vmatpush1.xpose.msra.mxu0 0.0
      %892 = vmatprep.subr.mxu0 0.0
      %893 = vmatpush1.xpose.msra.mxu0 0.0
      %894 = vmatprep.subr.mxu0 0.0
      %895 = vmatpush1.xpose.msra.mxu0 0.0
      %896 = vmatprep.subr.mxu0 0.0
      %897 = vmatpush1.xpose.msra.mxu0 0.0
      %898 = vmatprep.subr.mxu0 0.0
      %899 = vmatpush1.xpose.msra.mxu0 0.0
      %900 = vmatprep.subr.mxu0 0.0
      %901 = vmatpush1.xpose.msra.mxu0 0.0
      %902 = vmatprep.subr.mxu0 0.0
      %903 = vmatpush1.xpose.msra.mxu0 0.0
      %904 = vmatprep.subr.mxu0 0.0
      %905 = vmatpush1.xpose.msra.mxu0 0.0
      %906 = vmatprep.subr.mxu0 0.0
      %907 = vmatpush1.xpose.msra.mxu0 0.0
      %908 = vmatprep.mubr.f32.mxu0 0.0
      %909 = vmatmul.mubr.f32.gmra.mrb[0].mxu0 %v833
      %v910 = vpop.f32.mrb[0].mxu0
      %v911 = vadd.f32 0.0, %v910
      %v912 = vpop.f32.mrb[0].mxu0
      %913 = vmatprep.mubr.f32.mxu0 0.0
      %914 = vmatmul.mubr.f32.gmra.mrb[0].mxu0 %v836
      %v915 = vpop.f32.mrb[0].mxu0
      %v916 = vadd.f32 0.0, %v915
      %v917 = vpop.f32.mrb[0].mxu0
      %918 = vdwg.mxu0
      %v919 = vmul.f32 %v911, 0.35355338
      %v920 = vmul.f32 %v916, 0.35355338
      %v922 = vlaneseq
      %v923 = vshrl.u32 %v922, 7
      %v924 = vsub.s32 0, %v923
      %v925 = vrot.slane %v366, %v924
      %v927 = vadd.f32 %v919, %v925
      %v928 = vadd.f32 %v920, %v925
      %vm929 = vcmask 80896
      %v930 = vsel %vm929, %v927, -inf
      %931 = vmax.xlane.f32.xlu0 %v930
      %v932 = vpop.xlane.xlu0 %931
      %vm933 = vcmask 74752
      %v934 = vsel %vm933, %v928, -inf
      %935 = vmax.xlane.f32.xlu0 %v934
      %v936 = vpop.xlane.xlu0 %935
      %v937 = vsub.f32 %v927, %v932
      %v938 = vsub.f32 %v928, %v936
      %v939 = vmul.f32 %v937, 1.442695
      %v940 = vpow.pop %v939
      %v941 = vmul.f32 %v938, 1.442695
      %v942 = vpow.pop %v941
      %v943 = vsel %vm929, %v940, 0.0
      %944 = vadd.xlane.f32.xlu0 %v943
      %v945 = vpop.xlane.xlu0 %944
      %v946 = vsel %vm933, %v942, 0.0
      %947 = vadd.xlane.f32.xlu0 %v946
      %v948 = vpop.xlane.xlu0 %947
      %v949 = vrcp.pop %v945
      %v950 = vrcp.pop %v948
      %v951 = vmul.f32 %v940, %v949
      %v952 = vmul.f32 %v942, %v950
      %v954 = vsel %vm929, %v951, 0
      %v957 = vsel %vm929, %v952, 0
      %vm959 = vcmask 1041408
      %v961 = vsel %vm959, %v656, 0
      %963 = vmatprep.subr.mxu0 0.0
      %964 = vmatpush1.msra.mxu0 %v651
      %965 = vmatprep.subr.mxu0 0.0
      %966 = vmatpush1.msra.mxu0 %v961
      %967 = vmatprep.subr.mxu0 0.0
      %968 = vmatpush1.msra.mxu0 0.0
      %969 = vmatprep.subr.mxu0 0.0
      %970 = vmatpush1.msra.mxu0 0.0
      %971 = vmatprep.subr.mxu0 0.0
      %972 = vmatpush1.msra.mxu0 0.0
      %973 = vmatprep.subr.mxu0 0.0
      %974 = vmatpush1.msra.mxu0 0.0
      %975 = vmatprep.subr.mxu0 0.0
      %976 = vmatpush1.msra.mxu0 0.0
      %977 = vmatprep.subr.mxu0 0.0
      %978 = vmatpush1.msra.mxu0 0.0
      %979 = vmatprep.subr.mxu0 0.0
      %980 = vmatpush1.msra.mxu0 0.0
      %981 = vmatprep.subr.mxu0 0.0
      %982 = vmatpush1.msra.mxu0 0.0
      %983 = vmatprep.subr.mxu0 0.0
      %984 = vmatpush1.msra.mxu0 0.0
      %985 = vmatprep.subr.mxu0 0.0
      %986 = vmatpush1.msra.mxu0 0.0
      %987 = vmatprep.subr.mxu0 0.0
      %988 = vmatpush1.msra.mxu0 0.0
      %989 = vmatprep.subr.mxu0 0.0
      %990 = vmatpush1.msra.mxu0 0.0
      %991 = vmatprep.subr.mxu0 0.0
      %992 = vmatpush1.msra.mxu0 0.0
      %993 = vmatprep.subr.mxu0 0.0
      %994 = vmatpush1.msra.mxu0 0.0
      %995 = vmatprep.subr.mxu0 0.0
      %996 = vmatpush1.msra.mxu0 0.0
      %997 = vmatprep.subr.mxu0 0.0
      %998 = vmatpush1.msra.mxu0 0.0
      %999 = vmatprep.subr.mxu0 0.0
      %1000 = vmatpush1.msra.mxu0 0.0
      %1001 = vmatprep.subr.mxu0 0.0
      %1002 = vmatpush1.msra.mxu0 0.0
      %1003 = vmatprep.subr.mxu0 0.0
      %1004 = vmatpush1.msra.mxu0 0.0
      %1005 = vmatprep.subr.mxu0 0.0
      %1006 = vmatpush1.msra.mxu0 0.0
      %1007 = vmatprep.subr.mxu0 0.0
      %1008 = vmatpush1.msra.mxu0 0.0
      %1009 = vmatprep.subr.mxu0 0.0
      %1010 = vmatpush1.msra.mxu0 0.0
      %1011 = vmatprep.subr.mxu0 0.0
      %1012 = vmatpush1.msra.mxu0 0.0
      %1013 = vmatprep.subr.mxu0 0.0
      %1014 = vmatpush1.msra.mxu0 0.0
      %1015 = vmatprep.subr.mxu0 0.0
      %1016 = vmatpush1.msra.mxu0 0.0
      %1017 = vmatprep.subr.mxu0 0.0
      %1018 = vmatpush1.msra.mxu0 0.0
      %1019 = vmatprep.subr.mxu0 0.0
      %1020 = vmatpush1.msra.mxu0 0.0
      %1021 = vmatprep.subr.mxu0 0.0
      %1022 = vmatpush1.msra.mxu0 0.0
      %1023 = vmatprep.subr.mxu0 0.0
      %1024 = vmatpush1.msra.mxu0 0.0
      %1025 = vmatprep.subr.mxu0 0.0
      %1026 = vmatpush1.msra.mxu0 0.0
      %1027 = vmatprep.mubr.f32.mxu0 0.0
      %1028 = vmatmul.mubr.f32.gmra.mrb[0].mxu0 %v954
      %v1029 = vpop.f32.mrb[0].mxu0
      %v1030 = vadd.f32 0.0, %v1029
      %v1031 = vpop.f32.mrb[0].mxu0
      %1032 = vmatprep.mubr.f32.mxu0 0.0
      %1033 = vmatmul.mubr.f32.gmra.mrb[0].mxu0 %v957
      %v1034 = vpop.f32.mrb[0].mxu0
      %v1035 = vadd.f32 0.0, %v1034
      %v1036 = vpop.f32.mrb[0].mxu0
      %1037 = vdwg.mxu0
      %1038 = vrot.lane.b32.xlu0 %v823, 120
      %v1039 = vpop.permute.xlu0 %1038
      %1040 = vrot.lane.b32.xlu0 %v824, 120
      %v1041 = vpop.permute.xlu0 %1040
      %1042 = vrot.lane.b32.xlu0 %v829, 120
      %v1043 = vpop.permute.xlu0 %1042
      %1044 = vrot.lane.b32.xlu0 %v830, 120
      %v1045 = vpop.permute.xlu0 %1044
      %v1046 = vsel %vm831, %v1039, 0
      %v1048 = vsel %vm831, %v1041, 0
      %v1050 = vsel %vm831, %v1043, 0
      %v1052 = vsel %vm831, %v1045, 0
      %1054 = vmatprep.subr.mxu0 0.0
      %1055 = vmatpush1.xpose.msra.mxu0 %v1050
      %1056 = vmatprep.subr.mxu0 0.0
      %1057 = vmatpush1.xpose.msra.mxu0 %v1052
      %1058 = vmatprep.subr.mxu0 0.0
      %1059 = vmatpush1.xpose.msra.mxu0 0.0
      %1060 = vmatprep.subr.mxu0 0.0
      %1061 = vmatpush1.xpose.msra.mxu0 0.0
      %1062 = vmatprep.subr.mxu0 0.0
      %1063 = vmatpush1.xpose.msra.mxu0 0.0
      %1064 = vmatprep.subr.mxu0 0.0
      %1065 = vmatpush1.xpose.msra.mxu0 0.0
      %1066 = vmatprep.subr.mxu0 0.0
      %1067 = vmatpush1.xpose.msra.mxu0 0.0
      %1068 = vmatprep.subr.mxu0 0.0
      %1069 = vmatpush1.xpose.msra.mxu0 0.0
      %1070 = vmatprep.subr.mxu0 0.0
      %1071 = vmatpush1.xpose.msra.mxu0 0.0
      %1072 = vmatprep.subr.mxu0 0.0
      %1073 = vmatpush1.xpose.msra.mxu0 0.0
      %1074 = vmatprep.subr.mxu0 0.0
      %1075 = vmatpush1.xpose.msra.mxu0 0.0
      %1076 = vmatprep.subr.mxu0 0.0
      %1077 = vmatpush1.xpose.msra.mxu0 0.0
      %1078 = vmatprep.subr.mxu0 0.0
      %1079 = vmatpush1.xpose.msra.mxu0 0.0
      %1080 = vmatprep.subr.mxu0 0.0
      %1081 = vmatpush1.xpose.msra.mxu0 0.0
      %1082 = vmatprep.subr.mxu0 0.0
      %1083 = vmatpush1.xpose.msra.mxu0 0.0
      %1084 = vmatprep.subr.mxu0 0.0
      %1085 = vmatpush1.xpose.msra.mxu0 0.0
      %1086 = vmatprep.subr.mxu0 0.0
      %1087 = vmatpush1.xpose.msra.mxu0 0.0
      %1088 = vmatprep.subr.mxu0 0.0
      %1089 = vmatpush1.xpose.msra.mxu0 0.0
      %1090 = vmatprep.subr.mxu0 0.0
      %1091 = vmatpush1.xpose.msra.mxu0 0.0
      %1092 = vmatprep.subr.mxu0 0.0
      %1093 = vmatpush1.xpose.msra.mxu0 0.0
      %1094 = vmatprep.subr.mxu0 0.0
      %1095 = vmatpush1.xpose.msra.mxu0 0.0
      %1096 = vmatprep.subr.mxu0 0.0
      %1097 = vmatpush1.xpose.msra.mxu0 0.0
      %1098 = vmatprep.subr.mxu0 0.0
      %1099 = vmatpush1.xpose.msra.mxu0 0.0
      %1100 = vmatprep.subr.mxu0 0.0
      %1101 = vmatpush1.xpose.msra.mxu0 0.0
      %1102 = vmatprep.subr.mxu0 0.0
      %1103 = vmatpush1.xpose.msra.mxu0 0.0
      %1104 = vmatprep.subr.mxu0 0.0
      %1105 = vmatpush1.xpose.msra.mxu0 0.0
      %1106 = vmatprep.subr.mxu0 0.0
      %1107 = vmatpush1.xpose.msra.mxu0 0.0
      %1108 = vmatprep.subr.mxu0 0.0
      %1109 = vmatpush1.xpose.msra.mxu0 0.0
      %1110 = vmatprep.subr.mxu0 0.0
      %1111 = vmatpush1.xpose.msra.mxu0 0.0
      %1112 = vmatprep.subr.mxu0 0.0
      %1113 = vmatpush1.xpose.msra.mxu0 0.0
      %1114 = vmatprep.subr.mxu0 0.0
      %1115 = vmatpush1.xpose.msra.mxu0 0.0
      %1116 = vmatprep.subr.mxu0 0.0
      %1117 = vmatpush1.xpose.msra.mxu0 0.0
      %1118 = vmatprep.mubr.f32.mxu0 0.0
      %1119 = vmatmul.mubr.f32.gmra.mrb[0].mxu0 %v1046
      %v1120 = vpop.f32.mrb[0].mxu0
      %v1121 = vadd.f32 0.0, %v1120
      %v1122 = vpop.f32.mrb[0].mxu0
      %1123 = vmatprep.mubr.f32.mxu0 0.0
      %1124 = vmatmul.mubr.f32.gmra.mrb[0].mxu0 %v1048
      %v1125 = vpop.f32.mrb[0].mxu0
      %v1126 = vadd.f32 0.0, %v1125
      %v1127 = vpop.f32.mrb[0].mxu0
      %1128 = vdwg.mxu0
      %v1129 = vmul.f32 %v1121, 0.35355338
      %v1130 = vmul.f32 %v1126, 0.35355338
      %v1131 = vadd.f32 %v1129, %v925
      %v1132 = vadd.f32 %v1130, %v925
      %v1133 = vsel %vm929, %v1131, -inf
      %1134 = vmax.xlane.f32.xlu0 %v1133
      %v1135 = vpop.xlane.xlu0 %1134
      %v1136 = vsel %vm933, %v1132, -inf
      %1137 = vmax.xlane.f32.xlu0 %v1136
      %v1138 = vpop.xlane.xlu0 %1137
      %v1139 = vsub.f32 %v1131, %v1135
      %v1140 = vsub.f32 %v1132, %v1138
      %v1141 = vmul.f32 %v1139, 1.442695
      %v1142 = vpow.pop %v1141
      %v1143 = vmul.f32 %v1140, 1.442695
      %v1144 = vpow.pop %v1143
      %v1145 = vsel %vm929, %v1142, 0.0
      %1146 = vadd.xlane.f32.xlu0 %v1145
      %v1147 = vpop.xlane.xlu0 %1146
      %v1148 = vsel %vm933, %v1144, 0.0
      %1149 = vadd.xlane.f32.xlu0 %v1148
      %v1150 = vpop.xlane.xlu0 %1149
      %v1151 = vrcp.pop %v1147
      %v1152 = vrcp.pop %v1150
      %v1153 = vmul.f32 %v1142, %v1151
      %v1154 = vmul.f32 %v1144, %v1152
      %1156 = vrot.lane.b32.xlu0 %v651, 120
      %v1157 = vpop.permute.xlu0 %1156
      %1158 = vrot.lane.b32.xlu0 %v656, 120
      %v1159 = vpop.permute.xlu0 %1158
      %v1162 = vsel %vm929, %v1153, 0
      %v1165 = vsel %vm929, %v1154, 0
      %v1167 = vsel %vm959, %v1159, 0
      %1169 = vmatprep.subr.mxu0 0.0
      %1170 = vmatpush1.msra.mxu0 %v1157
      %1171 = vmatprep.subr.mxu0 0.0
      %1172 = vmatpush1.msra.mxu0 %v1167
      %1173 = vmatprep.subr.mxu0 0.0
      %1174 = vmatpush1.msra.mxu0 0.0
      %1175 = vmatprep.subr.mxu0 0.0
      %1176 = vmatpush1.msra.mxu0 0.0
      %1177 = vmatprep.subr.mxu0 0.0
      %1178 = vmatpush1.msra.mxu0 0.0
      %1179 = vmatprep.subr.mxu0 0.0
      %1180 = vmatpush1.msra.mxu0 0.0
      %1181 = vmatprep.subr.mxu0 0.0
      %1182 = vmatpush1.msra.mxu0 0.0
      %1183 = vmatprep.subr.mxu0 0.0
      %1184 = vmatpush1.msra.mxu0 0.0
      %1185 = vmatprep.subr.mxu0 0.0
      %1186 = vmatpush1.msra.mxu0 0.0
      %1187 = vmatprep.subr.mxu0 0.0
      %1188 = vmatpush1.msra.mxu0 0.0
      %1189 = vmatprep.subr.mxu0 0.0
      %1190 = vmatpush1.msra.mxu0 0.0
      %1191 = vmatprep.subr.mxu0 0.0
      %1192 = vmatpush1.msra.mxu0 0.0
      %1193 = vmatprep.subr.mxu0 0.0
      %1194 = vmatpush1.msra.mxu0 0.0
      %1195 = vmatprep.subr.mxu0 0.0
      %1196 = vmatpush1.msra.mxu0 0.0
      %1197 = vmatprep.subr.mxu0 0.0
      %1198 = vmatpush1.msra.mxu0 0.0
      %1199 = vmatprep.subr.mxu0 0.0
      %1200 = vmatpush1.msra.mxu0 0.0
      %1201 = vmatprep.subr.mxu0 0.0
      %1202 = vmatpush1.msra.mxu0 0.0
      %1203 = vmatprep.subr.mxu0 0.0
      %1204 = vmatpush1.msra.mxu0 0.0
      %1205 = vmatprep.subr.mxu0 0.0
      %1206 = vmatpush1.msra.mxu0 0.0
      %1207 = vmatprep.subr.mxu0 0.0
      %1208 = vmatpush1.msra.mxu0 0.0
      %1209 = vmatprep.subr.mxu0 0.0
      %1210 = vmatpush1.msra.mxu0 0.0
      %1211 = vmatprep.subr.mxu0 0.0
      %1212 = vmatpush1.msra.mxu0 0.0
      %1213 = vmatprep.subr.mxu0 0.0
      %1214 = vmatpush1.msra.mxu0 0.0
      %1215 = vmatprep.subr.mxu0 0.0
      %1216 = vmatpush1.msra.mxu0 0.0
      %1217 = vmatprep.subr.mxu0 0.0
      %1218 = vmatpush1.msra.mxu0 0.0
      %1219 = vmatprep.subr.mxu0 0.0
      %1220 = vmatpush1.msra.mxu0 0.0
      %1221 = vmatprep.subr.mxu0 0.0
      %1222 = vmatpush1.msra.mxu0 0.0
      %1223 = vmatprep.subr.mxu0 0.0
      %1224 = vmatpush1.msra.mxu0 0.0
      %1225 = vmatprep.subr.mxu0 0.0
      %1226 = vmatpush1.msra.mxu0 0.0
      %1227 = vmatprep.subr.mxu0 0.0
      %1228 = vmatpush1.msra.mxu0 0.0
      %1229 = vmatprep.subr.mxu0 0.0
      %1230 = vmatpush1.msra.mxu0 0.0
      %1231 = vmatprep.subr.mxu0 0.0
      %1232 = vmatpush1.msra.mxu0 0.0
      %1233 = vmatprep.mubr.f32.mxu0 0.0
      %1234 = vmatmul.mubr.f32.gmra.mrb[0].mxu0 %v1162
      %v1235 = vpop.f32.mrb[0].mxu0
      %v1236 = vadd.f32 0.0, %v1235
      %v1237 = vpop.f32.mrb[0].mxu0
      %1238 = vmatprep.mubr.f32.mxu0 0.0
      %1239 = vmatmul.mubr.f32.gmra.mrb[0].mxu0 %v1165
      %v1240 = vpop.f32.mrb[0].mxu0
      %v1241 = vadd.f32 0.0, %v1240
      %v1242 = vpop.f32.mrb[0].mxu0
      %1243 = vdwg.mxu0
      %1244 = vrot.lane.b32.xlu0 %v823, 112
      %v1245 = vpop.permute.xlu0 %1244
      %1246 = vrot.lane.b32.xlu0 %v824, 112
      %v1247 = vpop.permute.xlu0 %1246
      %1248 = vrot.lane.b32.xlu0 %v829, 112
      %v1249 = vpop.permute.xlu0 %1248
      %1250 = vrot.lane.b32.xlu0 %v830, 112
      %v1251 = vpop.permute.xlu0 %1250
      %v1252 = vsel %vm831, %v1245, 0
      %v1254 = vsel %vm831, %v1247, 0
      %v1256 = vsel %vm831, %v1249, 0
      %v1258 = vsel %vm831, %v1251, 0
      %1260 = vmatprep.subr.mxu0 0.0
      %1261 = vmatpush1.xpose.msra.mxu0 %v1256
      %1262 = vmatprep.subr.mxu0 0.0
      %1263 = vmatpush1.xpose.msra.mxu0 %v1258
      %1264 = vmatprep.subr.mxu0 0.0
      %1265 = vmatpush1.xpose.msra.mxu0 0.0
      %1266 = vmatprep.subr.mxu0 0.0
      %1267 = vmatpush1.xpose.msra.mxu0 0.0
      %1268 = vmatprep.subr.mxu0 0.0
      %1269 = vmatpush1.xpose.msra.mxu0 0.0
      %1270 = vmatprep.subr.mxu0 0.0
      %1271 = vmatpush1.xpose.msra.mxu0 0.0
      %1272 = vmatprep.subr.mxu0 0.0
      %1273 = vmatpush1.xpose.msra.mxu0 0.0
      %1274 = vmatprep.subr.mxu0 0.0
      %1275 = vmatpush1.xpose.msra.mxu0 0.0
      %1276 = vmatprep.subr.mxu0 0.0
      %1277 = vmatpush1.xpose.msra.mxu0 0.0
      %1278 = vmatprep.subr.mxu0 0.0
      %1279 = vmatpush1.xpose.msra.mxu0 0.0
      %1280 = vmatprep.subr.mxu0 0.0
      %1281 = vmatpush1.xpose.msra.mxu0 0.0
      %1282 = vmatprep.subr.mxu0 0.0
      %1283 = vmatpush1.xpose.msra.mxu0 0.0
      %1284 = vmatprep.subr.mxu0 0.0
      %1285 = vmatpush1.xpose.msra.mxu0 0.0
      %1286 = vmatprep.subr.mxu0 0.0
      %1287 = vmatpush1.xpose.msra.mxu0 0.0
      %1288 = vmatprep.subr.mxu0 0.0
      %1289 = vmatpush1.xpose.msra.mxu0 0.0
      %1290 = vmatprep.subr.mxu0 0.0
      %1291 = vmatpush1.xpose.msra.mxu0 0.0
      %1292 = vmatprep.subr.mxu0 0.0
      %1293 = vmatpush1.xpose.msra.mxu0 0.0
      %1294 = vmatprep.subr.mxu0 0.0
      %1295 = vmatpush1.xpose.msra.mxu0 0.0
      %1296 = vmatprep.subr.mxu0 0.0
      %1297 = vmatpush1.xpose.msra.mxu0 0.0
      %1298 = vmatprep.subr.mxu0 0.0
      %1299 = vmatpush1.xpose.msra.mxu0 0.0
      %1300 = vmatprep.subr.mxu0 0.0
      %1301 = vmatpush1.xpose.msra.mxu0 0.0
      %1302 = vmatprep.subr.mxu0 0.0
      %1303 = vmatpush1.xpose.msra.mxu0 0.0
      %1304 = vmatprep.subr.mxu0 0.0
      %1305 = vmatpush1.xpose.msra.mxu0 0.0
      %1306 = vmatprep.subr.mxu0 0.0
      %1307 = vmatpush1.xpose.msra.mxu0 0.0
      %1308 = vmatprep.subr.mxu0 0.0
      %1309 = vmatpush1.xpose.msra.mxu0 0.0
      %1310 = vmatprep.subr.mxu0 0.0
      %1311 = vmatpush1.xpose.msra.mxu0 0.0
      %1312 = vmatprep.subr.mxu0 0.0
      %1313 = vmatpush1.xpose.msra.mxu0 0.0
      %1314 = vmatprep.subr.mxu0 0.0
      %1315 = vmatpush1.xpose.msra.mxu0 0.0
      %1316 = vmatprep.subr.mxu0 0.0
      %1317 = vmatpush1.xpose.msra.mxu0 0.0
      %1318 = vmatprep.subr.mxu0 0.0
      %1319 = vmatpush1.xpose.msra.mxu0 0.0
      %1320 = vmatprep.subr.mxu0 0.0
      %1321 = vmatpush1.xpose.msra.mxu0 0.0
      %1322 = vmatprep.subr.mxu0 0.0
      %1323 = vmatpush1.xpose.msra.mxu0 0.0
      %1324 = vmatprep.mubr.f32.mxu0 0.0
      %1325 = vmatmul.mubr.f32.gmra.mrb[0].mxu0 %v1252
      %v1326 = vpop.f32.mrb[0].mxu0
      %v1327 = vadd.f32 0.0, %v1326
      %v1328 = vpop.f32.mrb[0].mxu0
      %1329 = vmatprep.mubr.f32.mxu0 0.0
      %1330 = vmatmul.mubr.f32.gmra.mrb[0].mxu0 %v1254
      %v1331 = vpop.f32.mrb[0].mxu0
      %v1332 = vadd.f32 0.0, %v1331
      %v1333 = vpop.f32.mrb[0].mxu0
      %1334 = vdwg.mxu0
      %v1335 = vmul.f32 %v1327, 0.35355338
      %v1336 = vmul.f32 %v1332, 0.35355338
      %v1337 = vadd.f32 %v1335, %v925
      %v1338 = vadd.f32 %v1336, %v925
      %v1339 = vsel %vm929, %v1337, -inf
      %1340 = vmax.xlane.f32.xlu0 %v1339
      %v1341 = vpop.xlane.xlu0 %1340
      %v1342 = vsel %vm933, %v1338, -inf
      %1343 = vmax.xlane.f32.xlu0 %v1342
      %v1344 = vpop.xlane.xlu0 %1343
      %v1345 = vsub.f32 %v1337, %v1341
      %v1346 = vsub.f32 %v1338, %v1344
      %v1347 = vmul.f32 %v1345, 1.442695
      %v1348 = vpow.pop %v1347
      %v1349 = vmul.f32 %v1346, 1.442695
      %v1350 = vpow.pop %v1349
      %v1351 = vsel %vm929, %v1348, 0.0
      %1352 = vadd.xlane.f32.xlu0 %v1351
      %v1353 = vpop.xlane.xlu0 %1352
      %v1354 = vsel %vm933, %v1350, 0.0
      %1355 = vadd.xlane.f32.xlu0 %v1354
      %v1356 = vpop.xlane.xlu0 %1355
      %v1357 = vrcp.pop %v1353
      %v1358 = vrcp.pop %v1356
      %v1359 = vmul.f32 %v1348, %v1357
      %v1360 = vmul.f32 %v1350, %v1358
      %1361 = vrot.lane.b32.xlu0 %v651, 112
      %v1362 = vpop.permute.xlu0 %1361
      %1363 = vrot.lane.b32.xlu0 %v656, 112
      %v1364 = vpop.permute.xlu0 %1363
      %v1367 = vsel %vm929, %v1359, 0
      %v1370 = vsel %vm929, %v1360, 0
      %v1372 = vsel %vm959, %v1364, 0
      %1374 = vmatprep.subr.mxu0 0.0
      %1375 = vmatpush1.msra.mxu0 %v1362
      %1376 = vmatprep.subr.mxu0 0.0
      %1377 = vmatpush1.msra.mxu0 %v1372
      %1378 = vmatprep.subr.mxu0 0.0
      %1379 = vmatpush1.msra.mxu0 0.0
      %1380 = vmatprep.subr.mxu0 0.0
      %1381 = vmatpush1.msra.mxu0 0.0
      %1382 = vmatprep.subr.mxu0 0.0
      %1383 = vmatpush1.msra.mxu0 0.0
      %1384 = vmatprep.subr.mxu0 0.0
      %1385 = vmatpush1.msra.mxu0 0.0
      %1386 = vmatprep.subr.mxu0 0.0
      %1387 = vmatpush1.msra.mxu0 0.0
      %1388 = vmatprep.subr.mxu0 0.0
      %1389 = vmatpush1.msra.mxu0 0.0
      %1390 = vmatprep.subr.mxu0 0.0
      %1391 = vmatpush1.msra.mxu0 0.0
      %1392 = vmatprep.subr.mxu0 0.0
      %1393 = vmatpush1.msra.mxu0 0.0
      %1394 = vmatprep.subr.mxu0 0.0
      %1395 = vmatpush1.msra.mxu0 0.0
      %1396 = vmatprep.subr.mxu0 0.0
      %1397 = vmatpush1.msra.mxu0 0.0
      %1398 = vmatprep.subr.mxu0 0.0
      %1399 = vmatpush1.msra.mxu0 0.0
      %1400 = vmatprep.subr.mxu0 0.0
      %1401 = vmatpush1.msra.mxu0 0.0
      %1402 = vmatprep.subr.mxu0 0.0
      %1403 = vmatpush1.msra.mxu0 0.0
      %1404 = vmatprep.subr.mxu0 0.0
      %1405 = vmatpush1.msra.mxu0 0.0
      %1406 = vmatprep.subr.mxu0 0.0
      %1407 = vmatpush1.msra.mxu0 0.0
      %1408 = vmatprep.subr.mxu0 0.0
      %1409 = vmatpush1.msra.mxu0 0.0
      %1410 = vmatprep.subr.mxu0 0.0
      %1411 = vmatpush1.msra.mxu0 0.0
      %1412 = vmatprep.subr.mxu0 0.0
      %1413 = vmatpush1.msra.mxu0 0.0
      %1414 = vmatprep.subr.mxu0 0.0
      %1415 = vmatpush1.msra.mxu0 0.0
      %1416 = vmatprep.subr.mxu0 0.0
      %1417 = vmatpush1.msra.mxu0 0.0
      %1418 = vmatprep.subr.mxu0 0.0
      %1419 = vmatpush1.msra.mxu0 0.0
      %1420 = vmatprep.subr.mxu0 0.0
      %1421 = vmatpush1.msra.mxu0 0.0
      %1422 = vmatprep.subr.mxu0 0.0
      %1423 = vmatpush1.msra.mxu0 0.0
      %1424 = vmatprep.subr.mxu0 0.0
      %1425 = vmatpush1.msra.mxu0 0.0
      %1426 = vmatprep.subr.mxu0 0.0
      %1427 = vmatpush1.msra.mxu0 0.0
      %1428 = vmatprep.subr.mxu0 0.0
      %1429 = vmatpush1.msra.mxu0 0.0
      %1430 = vmatprep.subr.mxu0 0.0
      %1431 = vmatpush1.msra.mxu0 0.0
      %1432 = vmatprep.subr.mxu0 0.0
      %1433 = vmatpush1.msra.mxu0 0.0
      %1434 = vmatprep.subr.mxu0 0.0
      %1435 = vmatpush1.msra.mxu0 0.0
      %1436 = vmatprep.subr.mxu0 0.0
      %1437 = vmatpush1.msra.mxu0 0.0
      %1438 = vmatprep.mubr.f32.mxu0 0.0
      %1439 = vmatmul.mubr.f32.gmra.mrb[0].mxu0 %v1367
      %v1440 = vpop.f32.mrb[0].mxu0
      %v1441 = vadd.f32 0.0, %v1440
      %v1442 = vpop.f32.mrb[0].mxu0
      %1443 = vmatprep.mubr.f32.mxu0 0.0
      %1444 = vmatmul.mubr.f32.gmra.mrb[0].mxu0 %v1370
      %v1445 = vpop.f32.mrb[0].mxu0
      %v1446 = vadd.f32 0.0, %v1445
      %v1447 = vpop.f32.mrb[0].mxu0
      %1448 = vdwg.mxu0
      %1449 = vrot.lane.b32.xlu0 %v823, 104
      %v1450 = vpop.permute.xlu0 %1449
      %1451 = vrot.lane.b32.xlu0 %v824, 104
      %v1452 = vpop.permute.xlu0 %1451
      %1453 = vrot.lane.b32.xlu0 %v829, 104
      %v1454 = vpop.permute.xlu0 %1453
      %1455 = vrot.lane.b32.xlu0 %v830, 104
      %v1456 = vpop.permute.xlu0 %1455
      %v1457 = vsel %vm831, %v1450, 0
      %v1459 = vsel %vm831, %v1452, 0
      %v1461 = vsel %vm831, %v1454, 0
      %v1463 = vsel %vm831, %v1456, 0
      %1465 = vmatprep.subr.mxu0 0.0
      %1466 = vmatpush1.xpose.msra.mxu0 %v1461
      %1467 = vmatprep.subr.mxu0 0.0
      %1468 = vmatpush1.xpose.msra.mxu0 %v1463
      %1469 = vmatprep.subr.mxu0 0.0
      %1470 = vmatpush1.xpose.msra.mxu0 0.0
      %1471 = vmatprep.subr.mxu0 0.0
      %1472 = vmatpush1.xpose.msra.mxu0 0.0
      %1473 = vmatprep.subr.mxu0 0.0
      %1474 = vmatpush1.xpose.msra.mxu0 0.0
      %1475 = vmatprep.subr.mxu0 0.0
      %1476 = vmatpush1.xpose.msra.mxu0 0.0
      %1477 = vmatprep.subr.mxu0 0.0
      %1478 = vmatpush1.xpose.msra.mxu0 0.0
      %1479 = vmatprep.subr.mxu0 0.0
      %1480 = vmatpush1.xpose.msra.mxu0 0.0
      %1481 = vmatprep.subr.mxu0 0.0
      %1482 = vmatpush1.xpose.msra.mxu0 0.0
      %1483 = vmatprep.subr.mxu0 0.0
      %1484 = vmatpush1.xpose.msra.mxu0 0.0
      %1485 = vmatprep.subr.mxu0 0.0
      %1486 = vmatpush1.xpose.msra.mxu0 0.0
      %1487 = vmatprep.subr.mxu0 0.0
      %1488 = vmatpush1.xpose.msra.mxu0 0.0
      %1489 = vmatprep.subr.mxu0 0.0
      %1490 = vmatpush1.xpose.msra.mxu0 0.0
      %1491 = vmatprep.subr.mxu0 0.0
      %1492 = vmatpush1.xpose.msra.mxu0 0.0
      %1493 = vmatprep.subr.mxu0 0.0
      %1494 = vmatpush1.xpose.msra.mxu0 0.0
      %1495 = vmatprep.subr.mxu0 0.0
      %1496 = vmatpush1.xpose.msra.mxu0 0.0
      %1497 = vmatprep.subr.mxu0 0.0
      %1498 = vmatpush1.xpose.msra.mxu0 0.0
      %1499 = vmatprep.subr.mxu0 0.0
      %1500 = vmatpush1.xpose.msra.mxu0 0.0
      %1501 = vmatprep.subr.mxu0 0.0
      %1502 = vmatpush1.xpose.msra.mxu0 0.0
      %1503 = vmatprep.subr.mxu0 0.0
      %1504 = vmatpush1.xpose.msra.mxu0 0.0
      %1505 = vmatprep.subr.mxu0 0.0
      %1506 = vmatpush1.xpose.msra.mxu0 0.0
      %1507 = vmatprep.subr.mxu0 0.0
      %1508 = vmatpush1.xpose.msra.mxu0 0.0
      %1509 = vmatprep.subr.mxu0 0.0
      %1510 = vmatpush1.xpose.msra.mxu0 0.0
      %1511 = vmatprep.subr.mxu0 0.0
      %1512 = vmatpush1.xpose.msra.mxu0 0.0
      %1513 = vmatprep.subr.mxu0 0.0
      %1514 = vmatpush1.xpose.msra.mxu0 0.0
      %1515 = vmatprep.subr.mxu0 0.0
      %1516 = vmatpush1.xpose.msra.mxu0 0.0
      %1517 = vmatprep.subr.mxu0 0.0
      %1518 = vmatpush1.xpose.msra.mxu0 0.0
      %1519 = vmatprep.subr.mxu0 0.0
      %1520 = vmatpush1.xpose.msra.mxu0 0.0
      %1521 = vmatprep.subr.mxu0 0.0
      %1522 = vmatpush1.xpose.msra.mxu0 0.0
      %1523 = vmatprep.subr.mxu0 0.0
      %1524 = vmatpush1.xpose.msra.mxu0 0.0
      %1525 = vmatprep.subr.mxu0 0.0
      %1526 = vmatpush1.xpose.msra.mxu0 0.0
      %1527 = vmatprep.subr.mxu0 0.0
      %1528 = vmatpush1.xpose.msra.mxu0 0.0
      %1529 = vmatprep.mubr.f32.mxu0 0.0
      %1530 = vmatmul.mubr.f32.gmra.mrb[0].mxu0 %v1457
      %v1531 = vpop.f32.mrb[0].mxu0
      %v1532 = vadd.f32 0.0, %v1531
      %v1533 = vpop.f32.mrb[0].mxu0
      %1534 = vmatprep.mubr.f32.mxu0 0.0
      %1535 = vmatmul.mubr.f32.gmra.mrb[0].mxu0 %v1459
      %v1536 = vpop.f32.mrb[0].mxu0
      %v1537 = vadd.f32 0.0, %v1536
      %v1538 = vpop.f32.mrb[0].mxu0
      %1539 = vdwg.mxu0
      %v1540 = vmul.f32 %v1532, 0.35355338
      %v1541 = vmul.f32 %v1537, 0.35355338
      %v1542 = vadd.f32 %v1540, %v925
      %v1543 = vadd.f32 %v1541, %v925
      %v1544 = vsel %vm929, %v1542, -inf
      %1545 = vmax.xlane.f32.xlu0 %v1544
      %v1546 = vpop.xlane.xlu0 %1545
      %v1547 = vsel %vm933, %v1543, -inf
      %1548 = vmax.xlane.f32.xlu0 %v1547
      %v1549 = vpop.xlane.xlu0 %1548
      %v1550 = vsub.f32 %v1542, %v1546
      %v1551 = vsub.f32 %v1543, %v1549
      %v1552 = vmul.f32 %v1550, 1.442695
      %v1553 = vpow.pop %v1552
      %v1554 = vmul.f32 %v1551, 1.442695
      %v1555 = vpow.pop %v1554
      %v1556 = vsel %vm929, %v1553, 0.0
      %1557 = vadd.xlane.f32.xlu0 %v1556
      %v1558 = vpop.xlane.xlu0 %1557
      %v1559 = vsel %vm933, %v1555, 0.0
      %1560 = vadd.xlane.f32.xlu0 %v1559
      %v1561 = vpop.xlane.xlu0 %1560
      %v1562 = vrcp.pop %v1558
      %v1563 = vrcp.pop %v1561
      %v1564 = vmul.f32 %v1553, %v1562
      %v1565 = vmul.f32 %v1555, %v1563
      %1566 = vrot.lane.b32.xlu0 %v651, 104
      %v1567 = vpop.permute.xlu0 %1566
      %1568 = vrot.lane.b32.xlu0 %v656, 104
      %v1569 = vpop.permute.xlu0 %1568
      %v1572 = vsel %vm929, %v1564, 0
      %v1575 = vsel %vm929, %v1565, 0
      %v1577 = vsel %vm959, %v1569, 0
      %1579 = vmatprep.subr.mxu0 0.0
      %1580 = vmatpush1.msra.mxu0 %v1567
      %1581 = vmatprep.subr.mxu0 0.0
      %1582 = vmatpush1.msra.mxu0 %v1577
      %1583 = vmatprep.subr.mxu0 0.0
      %1584 = vmatpush1.msra.mxu0 0.0
      %1585 = vmatprep.subr.mxu0 0.0
      %1586 = vmatpush1.msra.mxu0 0.0
      %1587 = vmatprep.subr.mxu0 0.0
      %1588 = vmatpush1.msra.mxu0 0.0
      %1589 = vmatprep.subr.mxu0 0.0
      %1590 = vmatpush1.msra.mxu0 0.0
      %1591 = vmatprep.subr.mxu0 0.0
      %1592 = vmatpush1.msra.mxu0 0.0
      %1593 = vmatprep.subr.mxu0 0.0
      %1594 = vmatpush1.msra.mxu0 0.0
      %1595 = vmatprep.subr.mxu0 0.0
      %1596 = vmatpush1.msra.mxu0 0.0
      %1597 = vmatprep.subr.mxu0 0.0
      %1598 = vmatpush1.msra.mxu0 0.0
      %1599 = vmatprep.subr.mxu0 0.0
      %1600 = vmatpush1.msra.mxu0 0.0
      %1601 = vmatprep.subr.mxu0 0.0
      %1602 = vmatpush1.msra.mxu0 0.0
      %1603 = vmatprep.subr.mxu0 0.0
      %1604 = vmatpush1.msra.mxu0 0.0
      %1605 = vmatprep.subr.mxu0 0.0
      %1606 = vmatpush1.msra.mxu0 0.0
      %1607 = vmatprep.subr.mxu0 0.0
      %1608 = vmatpush1.msra.mxu0 0.0
      %1609 = vmatprep.subr.mxu0 0.0
      %1610 = vmatpush1.msra.mxu0 0.0
      %1611 = vmatprep.subr.mxu0 0.0
      %1612 = vmatpush1.msra.mxu0 0.0
      %1613 = vmatprep.subr.mxu0 0.0
      %1614 = vmatpush1.msra.mxu0 0.0
      %1615 = vmatprep.subr.mxu0 0.0
      %1616 = vmatpush1.msra.mxu0 0.0
      %1617 = vmatprep.subr.mxu0 0.0
      %1618 = vmatpush1.msra.mxu0 0.0
      %1619 = vmatprep.subr.mxu0 0.0
      %1620 = vmatpush1.msra.mxu0 0.0
      %1621 = vmatprep.subr.mxu0 0.0
      %1622 = vmatpush1.msra.mxu0 0.0
      %1623 = vmatprep.subr.mxu0 0.0
      %1624 = vmatpush1.msra.mxu0 0.0
      %1625 = vmatprep.subr.mxu0 0.0
      %1626 = vmatpush1.msra.mxu0 0.0
      %1627 = vmatprep.subr.mxu0 0.0
      %1628 = vmatpush1.msra.mxu0 0.0
      %1629 = vmatprep.subr.mxu0 0.0
      %1630 = vmatpush1.msra.mxu0 0.0
      %1631 = vmatprep.subr.mxu0 0.0
      %1632 = vmatpush1.msra.mxu0 0.0
      %1633 = vmatprep.subr.mxu0 0.0
      %1634 = vmatpush1.msra.mxu0 0.0
      %1635 = vmatprep.subr.mxu0 0.0
      %1636 = vmatpush1.msra.mxu0 0.0
      %1637 = vmatprep.subr.mxu0 0.0
      %1638 = vmatpush1.msra.mxu0 0.0
      %1639 = vmatprep.subr.mxu0 0.0
      %1640 = vmatpush1.msra.mxu0 0.0
      %1641 = vmatprep.subr.mxu0 0.0
      %1642 = vmatpush1.msra.mxu0 0.0
      %1643 = vmatprep.mubr.f32.mxu0 0.0
      %1644 = vmatmul.mubr.f32.gmra.mrb[0].mxu0 %v1572
      %v1645 = vpop.f32.mrb[0].mxu0
      %v1646 = vadd.f32 0.0, %v1645
      %v1647 = vpop.f32.mrb[0].mxu0
      %1648 = vmatprep.mubr.f32.mxu0 0.0
      %1649 = vmatmul.mubr.f32.gmra.mrb[0].mxu0 %v1575
      %v1650 = vpop.f32.mrb[0].mxu0
      %v1651 = vadd.f32 0.0, %v1650
      %v1652 = vpop.f32.mrb[0].mxu0
      %1653 = vdwg.mxu0
      %1656 = vrot.lane.b32.xlu0 %v1236, 8
      %v1657 = vpop.permute.xlu0 %1656
      %1658 = vrot.lane.b32.xlu0 %v1241, 8
      %v1659 = vpop.permute.xlu0 %1658
      %1664 = vrot.lane.b32.xlu0 %v1441, 16
      %v1665 = vpop.permute.xlu0 %1664
      %1666 = vrot.lane.b32.xlu0 %v1446, 16
      %v1667 = vpop.permute.xlu0 %1666
      %1672 = vrot.lane.b32.xlu0 %v1646, 24
      %v1673 = vpop.permute.xlu0 %1672
      %1674 = vrot.lane.b32.xlu0 %v1651, 24
      %v1675 = vpop.permute.xlu0 %1674
      %v1678 = vsel %vm831, %v1030, %v1657
      %v1679 = vsel %vm831, %v1035, %v1659
      %vm1680 = vcmask 130048
      %v1681 = vsel %vm1680, %v1678, %v1665
      %v1682 = vsel %vm1680, %v1679, %v1667
      %vm1683 = vcmask 195584
      %v1684 = vsel %vm1683, %v1681, %v1673
      %v1685 = vsel %vm1683, %v1682, %v1675
      %v1686 = vld [vmem:[%s7] sm:$0xff]
      %v1687 = vld [vmem:[%s7 + $0x8] sm:$0xff]
      %v1688 = vld [vmem:[%s7 + $0x10] sm:$0xff]
      %v1689 = vld [vmem:[%s7 + $0x18] sm:$0xff]
      %v1691 = vsel %vm367, %v1684, 0
      %v1694 = vsel %vm367, %v1685, 0
      %1696 = vmatprep.subr.mxu0 0.0
      %1697 = vmatpush1.msra.mxu0 %v1686
      %1698 = vmatprep.subr.mxu0 0.0
      %1699 = vmatpush1.msra.mxu0 %v1687
      %1700 = vmatprep.subr.mxu0 0.0
      %1701 = vmatpush1.msra.mxu0 %v1688
      %1702 = vmatprep.subr.mxu0 0.0
      %1703 = vmatpush1.msra.mxu0 %v1689
      %1704 = vmatprep.subr.mxu0 0.0
      %1705 = vmatpush1.msra.mxu0 0.0
      %1706 = vmatprep.subr.mxu0 0.0
      %1707 = vmatpush1.msra.mxu0 0.0
      %1708 = vmatprep.subr.mxu0 0.0
      %1709 = vmatpush1.msra.mxu0 0.0
      %1710 = vmatprep.subr.mxu0 0.0
      %1711 = vmatpush1.msra.mxu0 0.0
      %1712 = vmatprep.subr.mxu0 0.0
      %1713 = vmatpush1.msra.mxu0 0.0
      %1714 = vmatprep.subr.mxu0 0.0
      %1715 = vmatpush1.msra.mxu0 0.0
      %1716 = vmatprep.subr.mxu0 0.0
      %1717 = vmatpush1.msra.mxu0 0.0
      %1718 = vmatprep.subr.mxu0 0.0
      %1719 = vmatpush1.msra.mxu0 0.0
      %1720 = vmatprep.subr.mxu0 0.0
      %1721 = vmatpush1.msra.mxu0 0.0
      %1722 = vmatprep.subr.mxu0 0.0
      %1723 = vmatpush1.msra.mxu0 0.0
      %1724 = vmatprep.subr.mxu0 0.0
      %1725 = vmatpush1.msra.mxu0 0.0
      %1726 = vmatprep.subr.mxu0 0.0
      %1727 = vmatpush1.msra.mxu0 0.0
      %1728 = vmatprep.subr.mxu0 0.0
      %1729 = vmatpush1.msra.mxu0 0.0
      %1730 = vmatprep.subr.mxu0 0.0
      %1731 = vmatpush1.msra.mxu0 0.0
      %1732 = vmatprep.subr.mxu0 0.0
      %1733 = vmatpush1.msra.mxu0 0.0
      %1734 = vmatprep.subr.mxu0 0.0
      %1735 = vmatpush1.msra.mxu0 0.0
      %1736 = vmatprep.subr.mxu0 0.0
      %1737 = vmatpush1.msra.mxu0 0.0
      %1738 = vmatprep.subr.mxu0 0.0
      %1739 = vmatpush1.msra.mxu0 0.0
      %1740 = vmatprep.subr.mxu0 0.0
      %1741 = vmatpush1.msra.mxu0 0.0
      %1742 = vmatprep.subr.mxu0 0.0
      %1743 = vmatpush1.msra.mxu0 0.0
      %1744 = vmatprep.subr.mxu0 0.0
      %1745 = vmatpush1.msra.mxu0 0.0
      %1746 = vmatprep.subr.mxu0 0.0
      %1747 = vmatpush1.msra.mxu0 0.0
      %1748 = vmatprep.subr.mxu0 0.0
      %1749 = vmatpush1.msra.mxu0 0.0
      %1750 = vmatprep.subr.mxu0 0.0
      %1751 = vmatpush1.msra.mxu0 0.0
      %1752 = vmatprep.subr.mxu0 0.0
      %1753 = vmatpush1.msra.mxu0 0.0
      %1754 = vmatprep.subr.mxu0 0.0
      %1755 = vmatpush1.msra.mxu0 0.0
      %1756 = vmatprep.subr.mxu0 0.0
      %1757 = vmatpush1.msra.mxu0 0.0
      %1758 = vmatprep.subr.mxu0 0.0
      %1759 = vmatpush1.msra.mxu0 0.0
      %1760 = vmatprep.mubr.f32.mxu0 0.0
      %1761 = vmatmul.mubr.f32.gmra.mrb[0].mxu0 %v1691
      %v1762 = vpop.f32.mrb[0].mxu0
      %v1763 = vadd.f32 0.0, %v1762
      %v1764 = vpop.f32.mrb[0].mxu0
      %1765 = vmatprep.mubr.f32.mxu0 0.0
      %1766 = vmatmul.mubr.f32.gmra.mrb[0].mxu0 %v1694
      %v1767 = vpop.f32.mrb[0].mxu0
      %v1768 = vadd.f32 0.0, %v1767
      %v1769 = vpop.f32.mrb[0].mxu0
      %1770 = vdwg.mxu0
      %v1771 = vadd.f32 %v360, %v1763
      %v1772 = vadd.f32 %v361, %v1768
      %1773 = vst.msk [vmem:[%s359] sm:$0xff] %vm367, %v1771
      %1774 = vst.msk [vmem:[%s359 + $0x8] sm:$0x3] %vm371, %v1772
      %p1775 = scmp.lt.s32.totalorder %s19, 1
      %s1776 = scalar_select %p1775, %s19, 1
      %s1777 = smul.addr %s1776, 2
      %s1778 = smul.addr %s1777, 8
      %s1779 = scalar_lea.vmem %s8, %s1778
      // Predicated region
      $region53: #{encoder_forward.6} parent=51 // pred_check
        %p1780 = pneg %p225
      $region54: #{encoder_forward.6} parent=51 // pred_check_branch
        %1782 = sbr.rel (%p1780) target = $region56
      $region55: #{encoder_forward.6} parent=51 // pred_region
        _
      $region56: #{encoder_forward.6} parent=51 // pred_fallthru
        _
    $region52: #{encoder_forward.6} parent=5 // pred_fallthru
      _
    %p1783 = scmp.le.s32.totalorder 2, %s14
    // Predicated region
    $region57: #{encoder_forward.6} parent=5 // pred_check
      %p1784 = pneg %p1783
    $region58: #{encoder_forward.6} parent=5 // pred_check_branch
      %1786 = sbr.rel (%p1784) target = $region60
    $region59: #{encoder_forward.6} parent=5 // pred_region
      %s1787 = ssub.s32 %s14, 2
      // Predicated region
      $region61: #{encoder_forward.6} parent=59 // pred_check
        %p1788 = pneg %p231
      $region62: #{encoder_forward.6} parent=59 // pred_check_branch
        %1790 = sbr.rel (%p1788) target = $region64
      $region63: #{encoder_forward.6} parent=59 // pred_region
        %p1791 = scmp.lt.s32.totalorder %s20, 1
        %s1792 = scalar_select %p1791, %s20, 1
        %s1793 = smul.addr %s1792, 2
        %s1794 = smul.addr %s1793, 8
        %s1795 = scalar_lea.vmem %s8, %s1794
      $region64: #{encoder_forward.6} parent=59 // pred_fallthru
        _
    $region60: #{encoder_forward.6} parent=5 // pred_fallthru
      _
  $region6: #{encoder_forward.6} parent=0 // loop_footer
    %s18 = sadd.s32 1, %s14
  $region7: #{encoder_forward.6} parent=0 // loop_footer_branch
    %13 = sbr.rel target = $region3
  $region8: #{encoder_forward.6} parent=0 // loop_exit
    _

// kernel: encoder_forward.7
$region0: #{encoder_forward.7}
  #allocation0 [shape = 'u32[]', space=smem, size = 0x4, offset = 0x4, fixed_abs, tag = 'smem constant byte address 0x4 - core index']
  #allocation1 [shape = 'u32[144,128]{1,0:T(1,128)}', space=vmem, size = 0x12000, scoped, tag = 'internal scratch']
  %s0 = inlined_call_operand.vmem [shape: f32[36,32], index: 0, kind: input, shape index: {}]
  %s1 = inlined_call_operand.vmem [shape: f32[36,32], index: 1, kind: input, shape index: {}]
  %s2 = inlined_call_operand.vmem [shape: f32[1,32], index: 2, kind: input, shape index: {}]
  %s3 = inlined_call_operand.vmem [shape: f32[1,32], index: 3, kind: input, shape index: {}]
  %s4 = inlined_call_operand.vmem [shape: f32[32,48], index: 4, kind: input, shape index: {}]
  %s5 = inlined_call_operand.vmem [shape: f32[1,48], index: 5, kind: input, shape index: {}]
  %s6 = inlined_call_operand.vmem [shape: f32[1,32], index: 6, kind: input, shape index: {}]
  %s7 = inlined_call_operand.vmem [shape: f32[16,16], index: 7, kind: input, shape index: {}]
  %s8 = inlined_call_operand.vmem [shape: f32[36,48], index: 8, kind: output, shape index: {}]
  %s9 = sld [smem:[#allocation0]]
  $region42: #{encoder_forward.7} parent=0
    _
  %s11 = ssub.s32 1, %s9
  %s12 = scalar_select 0, %s11, %s9
  // Predicated region
  $region2: #{encoder_forward.7} parent=0 // pred_check
    _
  $region3: #{encoder_forward.7} parent=0 // pred_check_branch
    %14 = sbr.rel (0) target = $region5
  $region4: #{encoder_forward.7} parent=0 // pred_region
    _
  $region5: #{encoder_forward.7} parent=0 // pred_fallthru
    _
  // Predicated region
  $region6: #{encoder_forward.7} parent=0 // pred_check
    _
  $region7: #{encoder_forward.7} parent=0 // pred_check_branch
    %16 = sbr.rel (0) target = $region9
  $region8: #{encoder_forward.7} parent=0 // pred_region
    _
  $region9: #{encoder_forward.7} parent=0 // pred_fallthru
    _
  // Predicated region
  $region10: #{encoder_forward.7} parent=0 // pred_check
    _
  $region11: #{encoder_forward.7} parent=0 // pred_check_branch
    %18 = sbr.rel (0) target = $region13
  $region12: #{encoder_forward.7} parent=0 // pred_region
    _
  $region13: #{encoder_forward.7} parent=0 // pred_fallthru
    _
  // Predicated region
  $region14: #{encoder_forward.7} parent=0 // pred_check
    _
  $region15: #{encoder_forward.7} parent=0 // pred_check_branch
    %20 = sbr.rel (0) target = $region17
  $region16: #{encoder_forward.7} parent=0 // pred_region
    _
  $region17: #{encoder_forward.7} parent=0 // pred_fallthru
    _
  // Predicated region
  $region18: #{encoder_forward.7} parent=0 // pred_check
    _
  $region19: #{encoder_forward.7} parent=0 // pred_check_branch
    %22 = sbr.rel (0) target = $region21
  $region20: #{encoder_forward.7} parent=0 // pred_region
    _
  $region21: #{encoder_forward.7} parent=0 // pred_fallthru
    _
  // Predicated region
  $region22: #{encoder_forward.7} parent=0 // pred_check
    _
  $region23: #{encoder_forward.7} parent=0 // pred_check_branch
    %24 = sbr.rel (0) target = $region25
  $region24: #{encoder_forward.7} parent=0 // pred_region
    _
  $region25: #{encoder_forward.7} parent=0 // pred_fallthru
    _
  // Predicated region
  $region26: #{encoder_forward.7} parent=0 // pred_check
    _
  $region27: #{encoder_forward.7} parent=0 // pred_check_branch
    %26 = sbr.rel (0) target = $region29
  $region28: #{encoder_forward.7} parent=0 // pred_region
    _
  $region29: #{encoder_forward.7} parent=0 // pred_fallthru
    _
  // Predicated region
  $region30: #{encoder_forward.7} parent=0 // pred_check
    _
  $region31: #{encoder_forward.7} parent=0 // pred_check_branch
    %28 = sbr.rel (0) target = $region33
  $region32: #{encoder_forward.7} parent=0 // pred_region
    _
  $region33: #{encoder_forward.7} parent=0 // pred_fallthru
    _
  %v29 = vld [vmem:[%s0] sm:$0xff]
  %v30 = vld [vmem:[%s0 + $0x8] sm:$0xff]
  %v31 = vld [vmem:[%s0 + $0x10] sm:$0xff]
  %v32 = vld [vmem:[%s0 + $0x18] sm:$0xff]
  %v33 = vld [vmem:[%s0 + $0x20] sm:$0xf]
  %vm34 = vcmask 261120
  %v35 = vsel %vm34, %v29, 0.0
  %36 = vadd.xlane.f32.xlu0 %v35
  %v37 = vpop.xlane.xlu0 %36
  %v38 = vsel %vm34, %v30, 0.0
  %39 = vadd.xlane.f32.xlu0 %v38
  %v40 = vpop.xlane.xlu0 %39
  %v41 = vsel %vm34, %v31, 0.0
  %42 = vadd.xlane.f32.xlu0 %v41
  %v43 = vpop.xlane.xlu0 %42
  %v44 = vsel %vm34, %v32, 0.0
  %45 = vadd.xlane.f32.xlu0 %v44
  %v46 = vpop.xlane.xlu0 %45
  %vm47 = vcmask 257024
  %v48 = vsel %vm47, %v33, 0.0
  %49 = vadd.xlane.f32.xlu0 %v48
  %v50 = vpop.xlane.xlu0 %49
  %v51 = vrcp.pop 32.0
  %v52 = vmul.f32 %v37, %v51
  %v53 = vmul.f32 %v40, %v51
  %v54 = vmul.f32 %v43, %v51
  %v55 = vmul.f32 %v46, %v51
  %v56 = vmul.f32 %v50, %v51
  %v57 = vsub.f32 %v29, %v52
  %v58 = vsub.f32 %v30, %v53
  %v59 = vsub.f32 %v31, %v54
  %v60 = vsub.f32 %v32, %v55
  %v61 = vsub.f32 %v33, %v56
  %v62 = vmul.f32 %v57, %v57
  %v63 = vmul.f32 %v58, %v58
  %v64 = vmul.f32 %v59, %v59
  %v65 = vmul.f32 %v60, %v60
  %v66 = vmul.f32 %v61, %v61
  %v67 = vsel %vm34, %v62, 0.0
  %68 = vadd.xlane.f32.xlu0 %v67
  %v69 = vpop.xlane.xlu0 %68
  %v70 = vsel %vm34, %v63, 0.0
  %71 = vadd.xlane.f32.xlu0 %v70
  %v72 = vpop.xlane.xlu0 %71
  %v73 = vsel %vm34, %v64, 0.0
  %74 = vadd.xlane.f32.xlu0 %v73
  %v75 = vpop.xlane.xlu0 %74
  %v76 = vsel %vm34, %v65, 0.0
  %77 = vadd.xlane.f32.xlu0 %v76
  %v78 = vpop.xlane.xlu0 %77
  %v79 = vsel %vm47, %v66, 0.0
  %80 = vadd.xlane.f32.xlu0 %v79
  %v81 = vpop.xlane.xlu0 %80
  %v82 = vmul.f32 %v69, %v51
  %v83 = vmul.f32 %v72, %v51
  %v84 = vmul.f32 %v75, %v51
  %v85 = vmul.f32 %v78, %v51
  %v86 = vmul.f32 %v81, %v51
  %v87 = vadd.f32 %v82, 1e-05
  %v88 = vadd.f32 %v83, 1e-05
  %v89 = vadd.f32 %v84, 1e-05
  %v90 = vadd.f32 %v85, 1e-05
  %v91 = vadd.f32 %v86, 1e-05
  %v92 = vrsqrt.pop %v87
  %v93 = vrsqrt.pop %v88
  %v94 = vrsqrt.pop %v89
  %v95 = vrsqrt.pop %v90
  %v96 = vrsqrt.pop %v91
  %v97 = vmul.f32 %v57, %v92
  %v98 = vmul.f32 %v58, %v93
  %v99 = vmul.f32 %v59, %v94
  %v100 = vmul.f32 %v60, %v95
  %v101 = vmul.f32 %v61, %v96
  %v102 = vld [vmem:[%s2] sm:$0x1]
  %v104 = vlaneseq
  %v105 = vshrl.u32 %v104, 7
  %v106 = vsub.s32 0, %v105
  %v107 = vrot.slane %v102, %v106
  %v109 = vmul.f32 %v97, %v107
  %v110 = vmul.f32 %v98, %v107
  %v111 = vmul.f32 %v99, %v107
  %v112 = vmul.f32 %v100, %v107
  %v113 = vmul.f32 %v101, %v107
  %v114 = vld [vmem:[%s3] sm:$0x1]
  %v116 = vlaneseq
  %v117 = vshrl.u32 %v116, 7
  %v118 = vsub.s32 0, %v117
  %v119 = vrot.slane %v114, %v118
  %v121 = vadd.f32 %v109, %v119
  %v122 = vadd.f32 %v110, %v119
  %v123 = vadd.f32 %v111, %v119
  %v124 = vadd.f32 %v112, %v119
  %v125 = vadd.f32 %v113, %v119
  %v126 = vld [vmem:[%s4] sm:$0xff]
  %v127 = vld [vmem:[%s4 + $0x8] sm:$0xff]
  %v128 = vld [vmem:[%s4 + $0x10] sm:$0xff]
  %v129 = vld [vmem:[%s4 + $0x18] sm:$0xff]
  %v130 = vld [vmem:[%s5] sm:$0x1]
  %v132 = vlaneseq
  %v133 = vshrl.u32 %v132, 7
  %v134 = vsub.s32 0, %v133
  %v135 = vrot.slane %v130, %v134
  %v138 = vsel %vm34, %v121, 0
  %v141 = vsel %vm34, %v122, 0
  %v144 = vsel %vm34, %v123, 0
  %v147 = vsel %vm34, %v124, 0
  %v150 = vsel %vm34, %v125, 0
  %152 = vmatprep.subr.mxu0 0.0
  %153 = vmatpush1.msra.mxu0 %v126
  %154 = vmatprep.subr.mxu0 0.0
  %155 = vmatpush1.msra.mxu0 %v127
  %156 = vmatprep.subr.mxu0 0.0
  %157 = vmatpush1.msra.mxu0 %v128
  %158 = vmatprep.subr.mxu0 0.0
  %159 = vmatpush1.msra.mxu0 %v129
  %160 = vmatprep.subr.mxu0 0.0
  %161 = vmatpush1.msra.mxu0 0.0
  %162 = vmatprep.subr.mxu0 0.0
  %163 = vmatpush1.msra.mxu0 0.0
  %164 = vmatprep.subr.mxu0 0.0
  %165 = vmatpush1.msra.mxu0 0.0
  %166 = vmatprep.subr.mxu0 0.0
  %167 = vmatpush1.msra.mxu0 0.0
  %168 = vmatprep.subr.mxu0 0.0
  %169 = vmatpush1.msra.mxu0 0.0
  %170 = vmatprep.subr.mxu0 0.0
  %171 = vmatpush1.msra.mxu0 0.0
  %172 = vmatprep.subr.mxu0 0.0
  %173 = vmatpush1.msra.mxu0 0.0
  %174 = vmatprep.subr.mxu0 0.0
  %175 = vmatpush1.msra.mxu0 0.0
  %176 = vmatprep.subr.mxu0 0.0
  %177 = vmatpush1.msra.mxu0 0.0
  %178 = vmatprep.subr.mxu0 0.0
  %179 = vmatpush1.msra.mxu0 0.0
  %180 = vmatprep.subr.mxu0 0.0
  %181 = vmatpush1.msra.mxu0 0.0
  %182 = vmatprep.subr.mxu0 0.0
  %183 = vmatpush1.msra.mxu0 0.0
  %184 = vmatprep.subr.mxu0 0.0
  %185 = vmatpush1.msra.mxu0 0.0
  %186 = vmatprep.subr.mxu0 0.0
  %187 = vmatpush1.msra.mxu0 0.0
  %188 = vmatprep.subr.mxu0 0.0
  %189 = vmatpush1.msra.mxu0 0.0
  %190 = vmatprep.subr.mxu0 0.0
  %191 = vmatpush1.msra.mxu0 0.0
  %192 = vmatprep.subr.mxu0 0.0
  %193 = vmatpush1.msra.mxu0 0.0
  %194 = vmatprep.subr.mxu0 0.0
  %195 = vmatpush1.msra.mxu0 0.0
  %196 = vmatprep.subr.mxu0 0.0
  %197 = vmatpush1.msra.mxu0 0.0
  %198 = vmatprep.subr.mxu0 0.0
  %199 = vmatpush1.msra.mxu0 0.0
  %200 = vmatprep.subr.mxu0 0.0
  %201 = vmatpush1.msra.mxu0 0.0
  %202 = vmatprep.subr.mxu0 0.0
  %203 = vmatpush1.msra.mxu0 0.0
  %204 = vmatprep.subr.mxu0 0.0
  %205 = vmatpush1.msra.mxu0 0.0
  %206 = vmatprep.subr.mxu0 0.0
  %207 = vmatpush1.msra.mxu0 0.0
  %208 = vmatprep.subr.mxu0 0.0
  %209 = vmatpush1.msra.mxu0 0.0
  %210 = vmatprep.subr.mxu0 0.0
  %211 = vmatpush1.msra.mxu0 0.0
  %212 = vmatprep.subr.mxu0 0.0
  %213 = vmatpush1.msra.mxu0 0.0
  %214 = vmatprep.subr.mxu0 0.0
  %215 = vmatpush1.msra.mxu0 0.0
  %216 = vmatprep.mubr.f32.mxu0 0.0
  %217 = vmatmul.mubr.f32.gmra.mrb[0].mxu0 %v138
  %v218 = vpop.f32.mrb[0].mxu0
  %v219 = vadd.f32 %v135, %v218
  %v220 = vpop.f32.mrb[0].mxu0
  %221 = vmatprep.mubr.f32.mxu0 0.0
  %222 = vmatmul.mubr.f32.gmra.mrb[0].mxu0 %v141
  %v223 = vpop.f32.mrb[0].mxu0
  %v224 = vadd.f32 %v135, %v223
  %v225 = vpop.f32.mrb[0].mxu0
  %226 = vmatprep.mubr.f32.mxu0 0.0
  %227 = vmatmul.mubr.f32.gmra.mrb[0].mxu0 %v144
  %v228 = vpop.f32.mrb[0].mxu0
  %v229 = vadd.f32 %v135, %v228
  %v230 = vpop.f32.mrb[0].mxu0
  %231 = vmatprep.mubr.f32.mxu0 0.0
  %232 = vmatmul.mubr.f32.gmra.mrb[0].mxu0 %v147
  %v233 = vpop.f32.mrb[0].mxu0
  %v234 = vadd.f32 %v135, %v233
  %v235 = vpop.f32.mrb[0].mxu0
  %236 = vmatprep.mubr.f32.mxu0 0.0
  %237 = vmatmul.mubr.f32.gmra.mrb[0].mxu0 %v150
  %v238 = vpop.f32.mrb[0].mxu0
  %v239 = vadd.f32 %v135, %v238
  %v240 = vpop.f32.mrb[0].mxu0
  %241 = vdwg.mxu0
  %v242 = vld [vmem:[%s1] sm:$0xff]
  %v243 = vld [vmem:[%s1 + $0x8] sm:$0xff]
  %v244 = vld [vmem:[%s1 + $0x10] sm:$0xff]
  %v245 = vld [vmem:[%s1 + $0x18] sm:$0xff]
  %v246 = vld [vmem:[%s1 + $0x20] sm:$0xf]
  %v247 = vld [vmem:[%s6] sm:$0x1]
  %v249 = vlaneseq
  %v250 = vshrl.u32 %v249, 7
  %v251 = vsub.s32 0, %v250
  %v252 = vrot.slane %v247, %v251
  %v254 = vmul.f32 %v219, %v252
  %v255 = vmul.f32 %v224, %v252
  %v256 = vmul.f32 %v229, %v252
  %v257 = vmul.f32 %v234, %v252
  %v258 = vmul.f32 %v239, %v252
  %v259 = vadd.f32 %v242, %v254
  %v260 = vadd.f32 %v243, %v255
  %v261 = vadd.f32 %v244, %v256
  %v262 = vadd.f32 %v245, %v257
  %v263 = vadd.f32 %v246, %v258
  %vm264 = vcmask 392448
  %v265 = vsel %vm264, %v219, -inf
  %266 = vmax.xlane.f32.xlu0 %v265
  %v267 = vpop.xlane.xlu0 %266
  %v268 = vsel %vm264, %v224, -inf
  %269 = vmax.xlane.f32.xlu0 %v268
  %v270 = vpop.xlane.xlu0 %269
  %v271 = vsel %vm264, %v229, -inf
  %272 = vmax.xlane.f32.xlu0 %v271
  %v273 = vpop.xlane.xlu0 %272
  %v274 = vsel %vm264, %v234, -inf
  %275 = vmax.xlane.f32.xlu0 %v274
  %v276 = vpop.xlane.xlu0 %275
  %vm277 = vcmask 388352
  %v278 = vsel %vm277, %v239, -inf
  %279 = vmax.xlane.f32.xlu0 %v278
  %v280 = vpop.xlane.xlu0 %279
  %v281 = vsub.f32 %v219, %v267
  %v282 = vsub.f32 %v224, %v270
  %v283 = vsub.f32 %v229, %v273
  %v284 = vsub.f32 %v234, %v276
  %v285 = vsub.f32 %v239, %v280
  %v286 = vmul.f32 %v281, 1.442695
  %v287 = vpow.pop %v286
  %v288 = vmul.f32 %v282, 1.442695
  %v289 = vpow.pop %v288
  %v290 = vmul.f32 %v283, 1.442695
  %v291 = vpow.pop %v290
  %v292 = vmul.f32 %v284, 1.442695
  %v293 = vpow.pop %v292
  %v294 = vmul.f32 %v285, 1.442695
  %v295 = vpow.pop %v294
  %v296 = vld [vmem:[%s7] sm:$0xff]
  %v297 = vld [vmem:[%s7 + $0x8] sm:$0xff]
  %303 = vrot.lane.b32.xlu0 %v287, 96
  %v304 = vpop.permute.xlu0 %303
  %305 = vrot.lane.b32.xlu0 %v289, 96
  %v306 = vpop.permute.xlu0 %305
  %307 = vrot.lane.b32.xlu0 %v291, 96
  %v308 = vpop.permute.xlu0 %307
  %309 = vrot.lane.b32.xlu0 %v293, 96
  %v310 = vpop.permute.xlu0 %309
  %311 = vrot.lane.b32.xlu0 %v295, 96
  %v312 = vpop.permute.xlu0 %311
  %vm313 = vcmask 130048
  %v314 = vsel %vm313, %v304, 0
  %v316 = vsel %vm313, %v306, 0
  %v318 = vsel %vm313, %v308, 0
  %v320 = vsel %vm313, %v310, 0
  %v322 = vsel %vm313, %v312, 0
  %324 = vmatprep.subr.mxu0 0.0
  %325 = vmatpush1.msra.mxu0 %v296
  %326 = vmatprep.subr.mxu0 0.0
  %327 = vmatpush1.msra.mxu0 %v297
  %328 = vmatprep.subr.mxu0 0.0
  %329 = vmatpush1.msra.mxu0 0.0
  %330 = vmatprep.subr.mxu0 0.0
  %331 = vmatpush1.msra.mxu0 0.0
  %332 = vmatprep.subr.mxu0 0.0
  %333 = vmatpush1.msra.mxu0 0.0
  %334 = vmatprep.subr.mxu0 0.0
  %335 = vmatpush1.msra.mxu0 0.0
  %336 = vmatprep.subr.mxu0 0.0
  %337 = vmatpush1.msra.mxu0 0.0
  %338 = vmatprep.subr.mxu0 0.0
  %339 = vmatpush1.msra.mxu0 0.0
  %340 = vmatprep.subr.mxu0 0.0
  %341 = vmatpush1.msra.mxu0 0.0
  %342 = vmatprep.subr.mxu0 0.0
  %343 = vmatpush1.msra.mxu0 0.0
  %344 = vmatprep.subr.mxu0 0.0
  %345 = vmatpush1.msra.mxu0 0.0
  %346 = vmatprep.subr.mxu0 0.0
  %347 = vmatpush1.msra.mxu0 0.0
  %348 = vmatprep.subr.mxu0 0.0
  %349 = vmatpush1.msra.mxu0 0.0
  %350 = vmatprep.subr.mxu0 0.0
  %351 = vmatpush1.msra.mxu0 0.0
  %352 = vmatprep.subr.mxu0 0.0
  %353 = vmatpush1.msra.mxu0 0.0
  %354 = vmatprep.subr.mxu0 0.0
  %355 = vmatpush1.msra.mxu0 0.0
  %356 = vmatprep.subr.mxu0 0.0
  %357 = vmatpush1.msra.mxu0 0.0
  %358 = vmatprep.subr.mxu0 0.0
  %359 = vmatpush1.msra.mxu0 0.0
  %360 = vmatprep.subr.mxu0 0.0
  %361 = vmatpush1.msra.mxu0 0.0
  %362 = vmatprep.subr.mxu0 0.0
  %363 = vmatpush1.msra.mxu0 0.0
  %364 = vmatprep.subr.mxu0 0.0
  %365 = vmatpush1.msra.mxu0 0.0
  %366 = vmatprep.subr.mxu0 0.0
  %367 = vmatpush1.msra.mxu0 0.0
  %368 = vmatprep.subr.mxu0 0.0
  %369 = vmatpush1.msra.mxu0 0.0
  %370 = vmatprep.subr.mxu0 0.0
  %371 = vmatpush1.msra.mxu0 0.0
  %372 = vmatprep.subr.mxu0 0.0
  %373 = vmatpush1.msra.mxu0 0.0
  %374 = vmatprep.subr.mxu0 0.0
  %375 = vmatpush1.msra.mxu0 0.0
  %376 = vmatprep.subr.mxu0 0.0
  %377 = vmatpush1.msra.mxu0 0.0
  %378 = vmatprep.subr.mxu0 0.0
  %379 = vmatpush1.msra.mxu0 0.0
  %380 = vmatprep.subr.mxu0 0.0
  %381 = vmatpush1.msra.mxu0 0.0
  %382 = vmatprep.subr.mxu0 0.0
  %383 = vmatpush1.msra.mxu0 0.0
  %384 = vmatprep.subr.mxu0 0.0
  %385 = vmatpush1.msra.mxu0 0.0
  %386 = vmatprep.subr.mxu0 0.0
  %387 = vmatpush1.msra.mxu0 0.0
  %388 = vmatprep.mubr.f32.mxu0 0.0
  %389 = vmatmul.mubr.f32.gmra.mrb[0].mxu0 %v314
  %v390 = vpop.f32.mrb[0].mxu0
  %v391 = vadd.f32 0.0, %v390
  %v392 = vpop.f32.mrb[0].mxu0
  %393 = vmatprep.mubr.f32.mxu0 0.0
  %394 = vmatmul.mubr.f32.gmra.mrb[0].mxu0 %v316
  %v395 = vpop.f32.mrb[0].mxu0
  %v396 = vadd.f32 0.0, %v395
  %v397 = vpop.f32.mrb[0].mxu0
  %398 = vmatprep.mubr.f32.mxu0 0.0
  %399 = vmatmul.mubr.f32.gmra.mrb[0].mxu0 %v318
  %v400 = vpop.f32.mrb[0].mxu0
  %v401 = vadd.f32 0.0, %v400
  %v402 = vpop.f32.mrb[0].mxu0
  %403 = vmatprep.mubr.f32.mxu0 0.0
  %404 = vmatmul.mubr.f32.gmra.mrb[0].mxu0 %v320
  %v405 = vpop.f32.mrb[0].mxu0
  %v406 = vadd.f32 0.0, %v405
  %v407 = vpop.f32.mrb[0].mxu0
  %408 = vmatprep.mubr.f32.mxu0 0.0
  %409 = vmatmul.mubr.f32.gmra.mrb[0].mxu0 %v322
  %v410 = vpop.f32.mrb[0].mxu0
  %v411 = vadd.f32 0.0, %v410
  %v412 = vpop.f32.mrb[0].mxu0
  %413 = vdwg.mxu0
  %v414 = vrcp.pop %v391
  %v415 = vrcp.pop %v396
  %v416 = vrcp.pop %v401
  %v417 = vrcp.pop %v406
  %v418 = vrcp.pop %v411
  %424 = vrot.lane.b32.xlu0 %v414, 32
  %v425 = vpop.permute.xlu0 %424
  %426 = vrot.lane.b32.xlu0 %v415, 32
  %v427 = vpop.permute.xlu0 %426
  %428 = vrot.lane.b32.xlu0 %v416, 32
  %v429 = vpop.permute.xlu0 %428
  %430 = vrot.lane.b32.xlu0 %v417, 32
  %v431 = vpop.permute.xlu0 %430
  %432 = vrot.lane.b32.xlu0 %v418, 32
  %v433 = vpop.permute.xlu0 %432
  %v439 = vmul.f32 %v287, %v425
  %v440 = vmul.f32 %v289, %v427
  %v441 = vmul.f32 %v291, %v429
  %v442 = vmul.f32 %v293, %v431
  %v443 = vmul.f32 %v295, %v433
  %v444 = vsel %vm34, %v259, %v439
  %v445 = vsel %vm34, %v260, %v440
  %v446 = vsel %vm34, %v261, %v441
  %v447 = vsel %vm34, %v262, %v442
  %v448 = vsel %vm34, %v263, %v443
  %vm449 = vcmask 392192
  %450 = vst.msk [vmem:[%s8] sm:$0xff] %vm449, %v444
  %451 = vst.msk [vmem:[%s8 + $0x8] sm:$0xff] %vm449, %v445
  %452 = vst.msk [vmem:[%s8 + $0x10] sm:$0xff] %vm449, %v446
  %453 = vst.msk [vmem:[%s8 + $0x18] sm:$0xff] %vm449, %v447
  %vm454 = vcmask 388096
  %455 = vst.msk [vmem:[%s8 + $0x20] sm:$0xf] %vm454, %v448
  // Predicated region
  $region34: #{encoder_forward.7} parent=0 // pred_check
    _
  $region35: #{encoder_forward.7} parent=0 // pred_check_branch
    %457 = sbr.rel (0) target = $region37
  $region36: #{encoder_forward.7} parent=0 // pred_region
    _
  $region37: #{encoder_forward.7} parent=0 // pred_fallthru
    _
  // Predicated region
  $region38: #{encoder_forward.7} parent=0 // pred_check
    _
  $region39: #{encoder_forward.7} parent=0 // pred_check_branch
    %459 = sbr.rel (0) target = $region41
  $region40: #{encoder_forward.7} parent=0 // pred_region
    _
  $region41: #{encoder_forward.7} parent=0 // pred_fallthru
    _

// kernel: encoder_forward.8
$region0: #{encoder_forward.8}
  #allocation0 [shape = 'u32[]', space=smem, size = 0x4, offset = 0x4, fixed_abs, tag = 'smem constant byte address 0x4 - core index']
  #allocation1 [shape = 'u32[144,128]{1,0:T(1,128)}', space=vmem, size = 0x12000, scoped, tag = 'internal scratch']
  %s0 = inlined_call_operand.vmem [shape: f32[36,512], index: 0, kind: input, shape index: {}]
  %s1 = inlined_call_operand.vmem [shape: f32[36,32], index: 1, kind: input, shape index: {}]
  %s2 = inlined_call_operand.vmem [shape: f32[512,32], index: 2, kind: input, shape index: {}]
  %s3 = inlined_call_operand.vmem [shape: f32[1,32], index: 3, kind: input, shape index: {}]
  %s4 = inlined_call_operand.vmem [shape: f32[1,32], index: 4, kind: input, shape index: {}]
  %s5 = inlined_call_operand.vmem [shape: f32[32,64], index: 5, kind: input, shape index: {}]
  %s6 = inlined_call_operand.vmem [shape: f32[1,64], index: 6, kind: input, shape index: {}]
  %s7 = inlined_call_operand.vmem [shape: f32[64,32], index: 7, kind: input, shape index: {}]
  %s8 = inlined_call_operand.vmem [shape: f32[1,32], index: 8, kind: input, shape index: {}]
  %s9 = inlined_call_operand.vmem [shape: f32[36,32], index: 9, kind: output, shape index: {}]
  %s10 = sld [smem:[#allocation0]]
  $region46: #{encoder_forward.8} parent=0
    _
  %s12 = ssub.s32 1, %s10
  %s13 = scalar_select 0, %s12, %s10
  // Predicated region
  $region2: #{encoder_forward.8} parent=0 // pred_check
    _
  $region3: #{encoder_forward.8} parent=0 // pred_check_branch
    %15 = sbr.rel (0) target = $region5
  $region4: #{encoder_forward.8} parent=0 // pred_region
    _
  $region5: #{encoder_forward.8} parent=0 // pred_fallthru
    _
  // Predicated region
  $region6: #{encoder_forward.8} parent=0 // pred_check
    _
  $region7: #{encoder_forward.8} parent=0 // pred_check_branch
    %17 = sbr.rel (0) target = $region9
  $region8: #{encoder_forward.8} parent=0 // pred_region
    _
  $region9: #{encoder_forward.8} parent=0 // pred_fallthru
    _
  // Predicated region
  $region10: #{encoder_forward.8} parent=0 // pred_check
    _
  $region11: #{encoder_forward.8} parent=0 // pred_check_branch
    %19 = sbr.rel (0) target = $region13
  $region12: #{encoder_forward.8} parent=0 // pred_region
    _
  $region13: #{encoder_forward.8} parent=0 // pred_fallthru
    _
  // Predicated region
  $region14: #{encoder_forward.8} parent=0 // pred_check
    _
  $region15: #{encoder_forward.8} parent=0 // pred_check_branch
    %21 = sbr.rel (0) target = $region17
  $region16: #{encoder_forward.8} parent=0 // pred_region
    _
  $region17: #{encoder_forward.8} parent=0 // pred_fallthru
    _
  // Predicated region
  $region18: #{encoder_forward.8} parent=0 // pred_check
    _
  $region19: #{encoder_forward.8} parent=0 // pred_check_branch
    %23 = sbr.rel (0) target = $region21
  $region20: #{encoder_forward.8} parent=0 // pred_region
    _
  $region21: #{encoder_forward.8} parent=0 // pred_fallthru
    _
  // Predicated region
  $region22: #{encoder_forward.8} parent=0 // pred_check
    _
  $region23: #{encoder_forward.8} parent=0 // pred_check_branch
    %25 = sbr.rel (0) target = $region25
  $region24: #{encoder_forward.8} parent=0 // pred_region
    _
  $region25: #{encoder_forward.8} parent=0 // pred_fallthru
    _
  // Predicated region
  $region26: #{encoder_forward.8} parent=0 // pred_check
    _
  $region27: #{encoder_forward.8} parent=0 // pred_check_branch
    %27 = sbr.rel (0) target = $region29
  $region28: #{encoder_forward.8} parent=0 // pred_region
    _
  $region29: #{encoder_forward.8} parent=0 // pred_fallthru
    _
  // Predicated region
  $region30: #{encoder_forward.8} parent=0 // pred_check
    _
  $region31: #{encoder_forward.8} parent=0 // pred_check_branch
    %29 = sbr.rel (0) target = $region33
  $region32: #{encoder_forward.8} parent=0 // pred_region
    _
  $region33: #{encoder_forward.8} parent=0 // pred_fallthru
    _
  // Predicated region
  $region34: #{encoder_forward.8} parent=0 // pred_check
    _
  $region35: #{encoder_forward.8} parent=0 // pred_check_branch
    %31 = sbr.rel (0) target = $region37
  $region36: #{encoder_forward.8} parent=0 // pred_region
    _
  $region37: #{encoder_forward.8} parent=0 // pred_fallthru
    _
  %v32 = vld [vmem:[%s1] sm:$0xff]
  %v33 = vld [vmem:[%s1 + $0x8] sm:$0xff]
  %v34 = vld [vmem:[%s1 + $0x10] sm:$0xff]
  %v35 = vld [vmem:[%s1 + $0x18] sm:$0xff]
  %v36 = vld [vmem:[%s1 + $0x20] sm:$0xf]
  %v37 = vld [vmem:[%s0] sm:$0xff]
  %v38 = vld [vmem:[%s0 + $0x8] sm:$0xff]
  %v39 = vld [vmem:[%s0 + $0x10] sm:$0xff]
  %v40 = vld [vmem:[%s0 + $0x18] sm:$0xff]
  %v41 = vld [vmem:[%s0 + $0x20] sm:$0xff]
  %v42 = vld [vmem:[%s0 + $0x28] sm:$0xff]
  %v43 = vld [vmem:[%s0 + $0x30] sm:$0xff]
  %v44 = vld [vmem:[%s0 + $0x38] sm:$0xff]
  %v45 = vld [vmem:[%s0 + $0x40] sm:$0xff]
  %v46 = vld [vmem:[%s0 + $0x48] sm:$0xff]
  %v47 = vld [vmem:[%s0 + $0x50] sm:$0xff]
  %v48 = vld [vmem:[%s0 + $0x58] sm:$0xff]
  %v49 = vld [vmem:[%s0 + $0x60] sm:$0xff]
  %v50 = vld [vmem:[%s0 + $0x68] sm:$0xff]
  %v51 = vld [vmem:[%s0 + $0x70] sm:$0xff]
  %v52 = vld [vmem:[%s0 + $0x78] sm:$0xff]
  %v53 = vld [vmem:[%s0 + $0x80] sm:$0xf]
  %v54 = vld [vmem:[%s0 + $0x88] sm:$0xf]
  %v55 = vld [vmem:[%s0 + $0x90] sm:$0xf]
  %v56 = vld [vmem:[%s0 + $0x98] sm:$0xf]
  %v57 = vld [vmem:[%s2] sm:$0xff]
  %v58 = vld [vmem:[%s2 + $0x8] sm:$0xff]
  %v59 = vld [vmem:[%s2 + $0x10] sm:$0xff]
  %v60 = vld [vmem:[%s2 + $0x18] sm:$0xff]
  %v61 = vld [vmem:[%s2 + $0x20] sm:$0xff]
  %v62 = vld [vmem:[%s2 + $0x28] sm:$0xff]
  %v63 = vld [vmem:[%s2 + $0x30] sm:$0xff]
  %v64 = vld [vmem:[%s2 + $0x38] sm:$0xff]
  %v65 = vld [vmem:[%s2 + $0x40] sm:$0xff]
  %v66 = vld [vmem:[%s2 + $0x48] sm:$0xff]
  %v67 = vld [vmem:[%s2 + $0x50] sm:$0xff]
  %v68 = vld [vmem:[%s2 + $0x58] sm:$0xff]
  %v69 = vld [vmem:[%s2 + $0x60] sm:$0xff]
  %v70 = vld [vmem:[%s2 + $0x68] sm:$0xff]
  %v71 = vld [vmem:[%s2 + $0x70] sm:$0xff]
  %v72 = vld [vmem:[%s2 + $0x78] sm:$0xff]
  %v73 = vld [vmem:[%s2 + $0x80] sm:$0xff]
  %v74 = vld [vmem:[%s2 + $0x88] sm:$0xff]
  %v75 = vld [vmem:[%s2 + $0x90] sm:$0xff]
  %v76 = vld [vmem:[%s2 + $0x98] sm:$0xff]
  %v77 = vld [vmem:[%s2 + $0xa0] sm:$0xff]
  %v78 = vld [vmem:[%s2 + $0xa8] sm:$0xff]
  %v79 = vld [vmem:[%s2 + $0xb0] sm:$0xff]
  %v80 = vld [vmem:[%s2 + $0xb8] sm:$0xff]
  %v81 = vld [vmem:[%s2 + $0xc0] sm:$0xff]
  %v82 = vld [vmem:[%s2 + $0xc8] sm:$0xff]
  %v83 = vld [vmem:[%s2 + $0xd0] sm:$0xff]
  %v84 = vld [vmem:[%s2 + $0xd8] sm:$0xff]
  %v85 = vld [vmem:[%s2 + $0xe0] sm:$0xff]
  %v86 = vld [vmem:[%s2 + $0xe8] sm:$0xff]
  %v87 = vld [vmem:[%s2 + $0xf0] sm:$0xff]
  %v88 = vld [vmem:[%s2 + $0xf8] sm:$0xff]
  %v89 = vld [vmem:[%s2 + $0x100] sm:$0xff]
  %v90 = vld [vmem:[%s2 + $0x108] sm:$0xff]
  %v91 = vld [vmem:[%s2 + $0x110] sm:$0xff]
  %v92 = vld [vmem:[%s2 + $0x118] sm:$0xff]
  %v93 = vld [vmem:[%s2 + $0x120] sm:$0xff]
  %v94 = vld [vmem:[%s2 + $0x128] sm:$0xff]
  %v95 = vld [vmem:[%s2 + $0x130] sm:$0xff]
  %v96 = vld [vmem:[%s2 + $0x138] sm:$0xff]
  %v97 = vld [vmem:[%s2 + $0x140] sm:$0xff]
  %v98 = vld [vmem:[%s2 + $0x148] sm:$0xff]
  %v99 = vld [vmem:[%s2 + $0x150] sm:$0xff]
  %v100 = vld [vmem:[%s2 + $0x158] sm:$0xff]
  %v101 = vld [vmem:[%s2 + $0x160] sm:$0xff]
  %v102 = vld [vmem:[%s2 + $0x168] sm:$0xff]
  %v103 = vld [vmem:[%s2 + $0x170] sm:$0xff]
  %v104 = vld [vmem:[%s2 + $0x178] sm:$0xff]
  %v105 = vld [vmem:[%s2 + $0x180] sm:$0xff]
  %v106 = vld [vmem:[%s2 + $0x188] sm:$0xff]
  %v107 = vld [vmem:[%s2 + $0x190] sm:$0xff]
  %v108 = vld [vmem:[%s2 + $0x198] sm:$0xff]
  %v109 = vld [vmem:[%s2 + $0x1a0] sm:$0xff]
  %v110 = vld [vmem:[%s2 + $0x1a8] sm:$0xff]
  %v111 = vld [vmem:[%s2 + $0x1b0] sm:$0xff]
  %v112 = vld [vmem:[%s2 + $0x1b8] sm:$0xff]
  %v113 = vld [vmem:[%s2 + $0x1c0] sm:$0xff]
  %v114 = vld [vmem:[%s2 + $0x1c8] sm:$0xff]
  %v115 = vld [vmem:[%s2 + $0x1d0] sm:$0xff]
  %v116 = vld [vmem:[%s2 + $0x1d8] sm:$0xff]
  %v117 = vld [vmem:[%s2 + $0x1e0] sm:$0xff]
  %v118 = vld [vmem:[%s2 + $0x1e8] sm:$0xff]
  %v119 = vld [vmem:[%s2 + $0x1f0] sm:$0xff]
  %v120 = vld [vmem:[%s2 + $0x1f8] sm:$0xff]
  %121 = vmatprep.subr.mxu0 0.0
  %122 = vmatpush1.msra.mxu0 %v57
  %123 = vmatprep.subr.mxu0 0.0
  %124 = vmatpush1.msra.mxu0 %v58
  %125 = vmatprep.subr.mxu0 0.0
  %126 = vmatpush1.msra.mxu0 %v59
  %127 = vmatprep.subr.mxu0 0.0
  %128 = vmatpush1.msra.mxu0 %v60
  %129 = vmatprep.subr.mxu0 0.0
  %130 = vmatpush1.msra.mxu0 %v61
  %131 = vmatprep.subr.mxu0 0.0
  %132 = vmatpush1.msra.mxu0 %v62
  %133 = vmatprep.subr.mxu0 0.0
  %134 = vmatpush1.msra.mxu0 %v63
  %135 = vmatprep.subr.mxu0 0.0
  %136 = vmatpush1.msra.mxu0 %v64
  %137 = vmatprep.subr.mxu0 0.0
  %138 = vmatpush1.msra.mxu0 %v65
  %139 = vmatprep.subr.mxu0 0.0
  %140 = vmatpush1.msra.mxu0 %v66
  %141 = vmatprep.subr.mxu0 0.0
  %142 = vmatpush1.msra.mxu0 %v67
  %143 = vmatprep.subr.mxu0 0.0
  %144 = vmatpush1.msra.mxu0 %v68
  %145 = vmatprep.subr.mxu0 0.0
  %146 = vmatpush1.msra.mxu0 %v69
  %147 = vmatprep.subr.mxu0 0.0
  %148 = vmatpush1.msra.mxu0 %v70
  %149 = vmatprep.subr.mxu0 0.0
  %150 = vmatpush1.msra.mxu0 %v71
  %151 = vmatprep.subr.mxu0 0.0
  %152 = vmatpush1.msra.mxu0 %v72
  %153 = vmatprep.subr.mxu0 0.0
  %154 = vmatpush1.msra.mxu0 %v73
  %155 = vmatprep.subr.mxu0 0.0
  %156 = vmatpush1.msra.mxu0 %v74
  %157 = vmatprep.subr.mxu0 0.0
  %158 = vmatpush1.msra.mxu0 %v75
  %159 = vmatprep.subr.mxu0 0.0
  %160 = vmatpush1.msra.mxu0 %v76
  %161 = vmatprep.subr.mxu0 0.0
  %162 = vmatpush1.msra.mxu0 %v77
  %163 = vmatprep.subr.mxu0 0.0
  %164 = vmatpush1.msra.mxu0 %v78
  %165 = vmatprep.subr.mxu0 0.0
  %166 = vmatpush1.msra.mxu0 %v79
  %167 = vmatprep.subr.mxu0 0.0
  %168 = vmatpush1.msra.mxu0 %v80
  %169 = vmatprep.subr.mxu0 0.0
  %170 = vmatpush1.msra.mxu0 %v81
  %171 = vmatprep.subr.mxu0 0.0
  %172 = vmatpush1.msra.mxu0 %v82
  %173 = vmatprep.subr.mxu0 0.0
  %174 = vmatpush1.msra.mxu0 %v83
  %175 = vmatprep.subr.mxu0 0.0
  %176 = vmatpush1.msra.mxu0 %v84
  %177 = vmatprep.subr.mxu0 0.0
  %178 = vmatpush1.msra.mxu0 %v85
  %179 = vmatprep.subr.mxu0 0.0
  %180 = vmatpush1.msra.mxu0 %v86
  %181 = vmatprep.subr.mxu0 0.0
  %182 = vmatpush1.msra.mxu0 %v87
  %183 = vmatprep.subr.mxu0 0.0
  %184 = vmatpush1.msra.mxu0 %v88
  %185 = vmatprep.mubr.f32.mxu0 %v38
  %186 = vmatmul.mubr.f32.gmra.mrb[0].mxu0 %v37
  %v187 = vpop.f32.mrb[0].mxu0
  %v188 = vadd.f32 0.0, %v187
  %v189 = vpop.f32.mrb[0].mxu0
  %190 = vmatprep.mubr.f32.mxu0 %v42
  %191 = vmatmul.mubr.f32.gmra.mrb[0].mxu0 %v41
  %v192 = vpop.f32.mrb[0].mxu0
  %v193 = vadd.f32 0.0, %v192
  %v194 = vpop.f32.mrb[0].mxu0
  %195 = vmatprep.mubr.f32.mxu0 %v46
  %196 = vmatmul.mubr.f32.gmra.mrb[0].mxu0 %v45
  %v197 = vpop.f32.mrb[0].mxu0
  %v198 = vadd.f32 0.0, %v197
  %v199 = vpop.f32.mrb[0].mxu0
  %200 = vmatprep.mubr.f32.mxu0 %v50
  %201 = vmatmul.mubr.f32.gmra.mrb[0].mxu0 %v49
  %v202 = vpop.f32.mrb[0].mxu0
  %v203 = vadd.f32 0.0, %v202
  %v204 = vpop.f32.mrb[0].mxu0
  %205 = vmatprep.mubr.f32.mxu0 %v54
  %206 = vmatmul.mubr.f32.gmra.mrb[0].mxu0 %v53
  %v207 = vpop.f32.mrb[0].mxu0
  %v208 = vadd.f32 0.0, %v207
  %v209 = vpop.f32.mrb[0].mxu0
  %210 = vdwg.mxu0
  %211 = vmatprep.subr.mxu0 0.0
  %212 = vmatpush1.msra.mxu0 %v89
  %213 = vmatprep.subr.mxu0 0.0
  %214 = vmatpush1.msra.mxu0 %v90
  %215 = vmatprep.subr.mxu0 0.0
  %216 = vmatpush1.msra.mxu0 %v91
  %217 = vmatprep.subr.mxu0 0.0
  %218 = vmatpush1.msra.mxu0 %v92
  %219 = vmatprep.subr.mxu0 0.0
  %220 = vmatpush1.msra.mxu0 %v93
  %221 = vmatprep.subr.mxu0 0.0
  %222 = vmatpush1.msra.mxu0 %v94
  %223 = vmatprep.subr.mxu0 0.0
  %224 = vmatpush1.msra.mxu0 %v95
  %225 = vmatprep.subr.mxu0 0.0
  %226 = vmatpush1.msra.mxu0 %v96
  %227 = vmatprep.subr.mxu0 0.0
  %228 = vmatpush1.msra.mxu0 %v97
  %229 = vmatprep.subr.mxu0 0.0
  %230 = vmatpush1.msra.mxu0 %v98
  %231 = vmatprep.subr.mxu0 0.0
  %232 = vmatpush1.msra.mxu0 %v99
  %233 = vmatprep.subr.mxu0 0.0
  %234 = vmatpush1.msra.mxu0 %v100
  %235 = vmatprep.subr.mxu0 0.0
  %236 = vmatpush1.msra.mxu0 %v101
  %237 = vmatprep.subr.mxu0 0.0
  %238 = vmatpush1.msra.mxu0 %v102
  %239 = vmatprep.subr.mxu0 0.0
  %240 = vmatpush1.msra.mxu0 %v103
  %241 = vmatprep.subr.mxu0 0.0
  %242 = vmatpush1.msra.mxu0 %v104
  %243 = vmatprep.subr.mxu0 0.0
  %244 = vmatpush1.msra.mxu0 %v105
  %245 = vmatprep.subr.mxu0 0.0
  %246 = vmatpush1.msra.mxu0 %v106
  %247 = vmatprep.subr.mxu0 0.0
  %248 = vmatpush1.msra.mxu0 %v107
  %249 = vmatprep.subr.mxu0 0.0
  %250 = vmatpush1.msra.mxu0 %v108
  %251 = vmatprep.subr.mxu0 0.0
  %252 = vmatpush1.msra.mxu0 %v109
  %253 = vmatprep.subr.mxu0 0.0
  %254 = vmatpush1.msra.mxu0 %v110
  %255 = vmatprep.subr.mxu0 0.0
  %256 = vmatpush1.msra.mxu0 %v111
  %257 = vmatprep.subr.mxu0 0.0
  %258 = vmatpush1.msra.mxu0 %v112
  %259 = vmatprep.subr.mxu0 0.0
  %260 = vmatpush1.msra.mxu0 %v113
  %261 = vmatprep.subr.mxu0 0.0
  %262 = vmatpush1.msra.mxu0 %v114
  %263 = vmatprep.subr.mxu0 0.0
  %264 = vmatpush1.msra.mxu0 %v115
  %265 = vmatprep.subr.mxu0 0.0
  %266 = vmatpush1.msra.mxu0 %v116
  %267 = vmatprep.subr.mxu0 0.0
  %268 = vmatpush1.msra.mxu0 %v117
  %269 = vmatprep.subr.mxu0 0.0
  %270 = vmatpush1.msra.mxu0 %v118
  %271 = vmatprep.subr.mxu0 0.0
  %272 = vmatpush1.msra.mxu0 %v119
  %273 = vmatprep.subr.mxu0 0.0
  %274 = vmatpush1.msra.mxu0 %v120
  %275 = vmatprep.mubr.f32.mxu0 %v40
  %276 = vmatmul.mubr.f32.gmra.mrb[0].mxu0 %v39
  %v277 = vpop.f32.mrb[0].mxu0
  %v278 = vadd.f32 %v188, %v277
  %v279 = vpop.f32.mrb[0].mxu0
  %280 = vmatprep.mubr.f32.mxu0 %v44
  %281 = vmatmul.mubr.f32.gmra.mrb[0].mxu0 %v43
  %v282 = vpop.f32.mrb[0].mxu0
  %v283 = vadd.f32 %v193, %v282
  %v284 = vpop.f32.mrb[0].mxu0
  %285 = vmatprep.mubr.f32.mxu0 %v48
  %286 = vmatmul.mubr.f32.gmra.mrb[0].mxu0 %v47
  %v287 = vpop.f32.mrb[0].mxu0
  %v288 = vadd.f32 %v198, %v287
  %v289 = vpop.f32.mrb[0].mxu0
  %290 = vmatprep.mubr.f32.mxu0 %v52
  %291 = vmatmul.mubr.f32.gmra.mrb[0].mxu0 %v51
  %v292 = vpop.f32.mrb[0].mxu0
  %v293 = vadd.f32 %v203, %v292
  %v294 = vpop.f32.mrb[0].mxu0
  %295 = vmatprep.mubr.f32.mxu0 %v56
  %296 = vmatmul.mubr.f32.gmra.mrb[0].mxu0 %v55
  %v297 = vpop.f32.mrb[0].mxu0
  %v298 = vadd.f32 %v208, %v297
  %v299 = vpop.f32.mrb[0].mxu0
  %300 = vdwg.mxu0
  %v301 = vadd.f32 %v32, %v278
  %v302 = vadd.f32 %v33, %v283
  %v303 = vadd.f32 %v34, %v288
  %v304 = vadd.f32 %v35, %v293
  %v305 = vadd.f32 %v36, %v298
  %vm306 = vcmask 261120
  %v307 = vsel %vm306, %v301, 0.0
  %308 = vadd.xlane.f32.xlu0 %v307
  %v309 = vpop.xlane.xlu0 %308
  %v310 = vsel %vm306, %v302, 0.0
  %311 = vadd.xlane.f32.xlu0 %v310
  %v312 = vpop.xlane.xlu0 %311
  %v313 = vsel %vm306, %v303, 0.0
  %314 = vadd.xlane.f32.xlu0 %v313
  %v315 = vpop.xlane.xlu0 %314
  %v316 = vsel %vm306, %v304, 0.0
  %317 = vadd.xlane.f32.xlu0 %v316
  %v318 = vpop.xlane.xlu0 %317
  %vm319 = vcmask 257024
  %v320 = vsel %vm319, %v305, 0.0
  %321 = vadd.xlane.f32.xlu0 %v320
  %v322 = vpop.xlane.xlu0 %321
  %v323 = vrcp.pop 32.0
  %v324 = vmul.f32 %v309, %v323
  %v325 = vmul.f32 %v312, %v323
  %v326 = vmul.f32 %v315, %v323
  %v327 = vmul.f32 %v318, %v323
  %v328 = vmul.f32 %v322, %v323
  %v329 = vsub.f32 %v301, %v324
  %v330 = vsub.f32 %v302, %v325
  %v331 = vsub.f32 %v303, %v326
  %v332 = vsub.f32 %v304, %v327
  %v333 = vsub.f32 %v305, %v328
  %v334 = vmul.f32 %v329, %v329
  %v335 = vmul.f32 %v330, %v330
  %v336 = vmul.f32 %v331, %v331
  %v337 = vmul.f32 %v332, %v332
  %v338 = vmul.f32 %v333, %v333
  %v339 = vsel %vm306, %v334, 0.0
  %340 = vadd.xlane.f32.xlu0 %v339
  %v341 = vpop.xlane.xlu0 %340
  %v342 = vsel %vm306, %v335, 0.0
  %343 = vadd.xlane.f32.xlu0 %v342
  %v344 = vpop.xlane.xlu0 %343
  %v345 = vsel %vm306, %v336, 0.0
  %346 = vadd.xlane.f32.xlu0 %v345
  %v347 = vpop.xlane.xlu0 %346
  %v348 = vsel %vm306, %v337, 0.0
  %349 = vadd.xlane.f32.xlu0 %v348
  %v350 = vpop.xlane.xlu0 %349
  %v351 = vsel %vm319, %v338, 0.0
  %352 = vadd.xlane.f32.xlu0 %v351
  %v353 = vpop.xlane.xlu0 %352
  %v354 = vmul.f32 %v341, %v323
  %v355 = vmul.f32 %v344, %v323
  %v356 = vmul.f32 %v347, %v323
  %v357 = vmul.f32 %v350, %v323
  %v358 = vmul.f32 %v353, %v323
  %v359 = vadd.f32 %v354, 1e-05
  %v360 = vadd.f32 %v355, 1e-05
  %v361 = vadd.f32 %v356, 1e-05
  %v362 = vadd.f32 %v357, 1e-05
  %v363 = vadd.f32 %v358, 1e-05
  %v364 = vrsqrt.pop %v359
  %v365 = vrsqrt.pop %v360
  %v366 = vrsqrt.pop %v361
  %v367 = vrsqrt.pop %v362
  %v368 = vrsqrt.pop %v363
  %v369 = vmul.f32 %v329, %v364
  %v370 = vmul.f32 %v330, %v365
  %v371 = vmul.f32 %v331, %v366
  %v372 = vmul.f32 %v332, %v367
  %v373 = vmul.f32 %v333, %v368
  %v374 = vld [vmem:[%s3] sm:$0x1]
  %v376 = vlaneseq
  %v377 = vshrl.u32 %v376, 7
  %v378 = vsub.s32 0, %v377
  %v379 = vrot.slane %v374, %v378
  %v381 = vmul.f32 %v369, %v379
  %v382 = vmul.f32 %v370, %v379
  %v383 = vmul.f32 %v371, %v379
  %v384 = vmul.f32 %v372, %v379
  %v385 = vmul.f32 %v373, %v379
  %v386 = vld [vmem:[%s4] sm:$0x1]
  %v388 = vlaneseq
  %v389 = vshrl.u32 %v388, 7
  %v390 = vsub.s32 0, %v389
  %v391 = vrot.slane %v386, %v390
  %v393 = vadd.f32 %v381, %v391
  %v394 = vadd.f32 %v382, %v391
  %v395 = vadd.f32 %v383, %v391
  %v396 = vadd.f32 %v384, %v391
  %v397 = vadd.f32 %v385, %v391
  %v398 = vld [vmem:[%s5] sm:$0xff]
  %v399 = vld [vmem:[%s5 + $0x8] sm:$0xff]
  %v400 = vld [vmem:[%s5 + $0x10] sm:$0xff]
  %v401 = vld [vmem:[%s5 + $0x18] sm:$0xff]
  %v402 = vld [vmem:[%s6] sm:$0x1]
  %v404 = vlaneseq
  %v405 = vshrl.u32 %v404, 7
  %v406 = vsub.s32 0, %v405
  %v407 = vrot.slane %v402, %v406
  %v410 = vsel %vm306, %v393, 0
  %v413 = vsel %vm306, %v394, 0
  %v416 = vsel %vm306, %v395, 0
  %v419 = vsel %vm306, %v396, 0
  %v422 = vsel %vm306, %v397, 0
  %424 = vmatprep.subr.mxu0 0.0
  %425 = vmatpush1.msra.mxu0 %v398
  %426 = vmatprep.subr.mxu0 0.0
  %427 = vmatpush1.msra.mxu0 %v399
  %428 = vmatprep.subr.mxu0 0.0
  %429 = vmatpush1.msra.mxu0 %v400
  %430 = vmatprep.subr.mxu0 0.0
  %431 = vmatpush1.msra.mxu0 %v401
  %432 = vmatprep.subr.mxu0 0.0
  %433 = vmatpush1.msra.mxu0 0.0
  %434 = vmatprep.subr.mxu0 0.0
  %435 = vmatpush1.msra.mxu0 0.0
  %436 = vmatprep.subr.mxu0 0.0
  %437 = vmatpush1.msra.mxu0 0.0
  %438 = vmatprep.subr.mxu0 0.0
  %439 = vmatpush1.msra.mxu0 0.0
  %440 = vmatprep.subr.mxu0 0.0
  %441 = vmatpush1.msra.mxu0 0.0
  %442 = vmatprep.subr.mxu0 0.0
  %443 = vmatpush1.msra.mxu0 0.0
  %444 = vmatprep.subr.mxu0 0.0
  %445 = vmatpush1.msra.mxu0 0.0
  %446 = vmatprep.subr.mxu0 0.0
  %447 = vmatpush1.msra.mxu0 0.0
  %448 = vmatprep.subr.mxu0 0.0
  %449 = vmatpush1.msra.mxu0 0.0
  %450 = vmatprep.subr.mxu0 0.0
  %451 = vmatpush1.msra.mxu0 0.0
  %452 = vmatprep.subr.mxu0 0.0
  %453 = vmatpush1.msra.mxu0 0.0
  %454 = vmatprep.subr.mxu0 0.0
  %455 = vmatpush1.msra.mxu0 0.0
  %456 = vmatprep.subr.mxu0 0.0
  %457 = vmatpush1.msra.mxu0 0.0
  %458 = vmatprep.subr.mxu0 0.0
  %459 = vmatpush1.msra.mxu0 0.0
  %460 = vmatprep.subr.mxu0 0.0
  %461 = vmatpush1.msra.mxu0 0.0
  %462 = vmatprep.subr.mxu0 0.0
  %463 = vmatpush1.msra.mxu0 0.0
  %464 = vmatprep.subr.mxu0 0.0
  %465 = vmatpush1.msra.mxu0 0.0
  %466 = vmatprep.subr.mxu0 0.0
  %467 = vmatpush1.msra.mxu0 0.0
  %468 = vmatprep.subr.mxu0 0.0
  %469 = vmatpush1.msra.mxu0 0.0
  %470 = vmatprep.subr.mxu0 0.0
  %471 = vmatpush1.msra.mxu0 0.0
  %472 = vmatprep.subr.mxu0 0.0
  %473 = vmatpush1.msra.mxu0 0.0
  %474 = vmatprep.subr.mxu0 0.0
  %475 = vmatpush1.msra.mxu0 0.0
  %476 = vmatprep.subr.mxu0 0.0
  %477 = vmatpush1.msra.mxu0 0.0
  %478 = vmatprep.subr.mxu0 0.0
  %479 = vmatpush1.msra.mxu0 0.0
  %480 = vmatprep.subr.mxu0 0.0
  %481 = vmatpush1.msra.mxu0 0.0
  %482 = vmatprep.subr.mxu0 0.0
  %483 = vmatpush1.msra.mxu0 0.0
  %484 = vmatprep.subr.mxu0 0.0
  %485 = vmatpush1.msra.mxu0 0.0
  %486 = vmatprep.subr.mxu0 0.0
  %487 = vmatpush1.msra.mxu0 0.0
  %488 = vmatprep.mubr.f32.mxu0 0.0
  %489 = vmatmul.mubr.f32.gmra.mrb[0].mxu0 %v410
  %v490 = vpop.f32.mrb[0].mxu0
  %v491 = vadd.f32 %v407, %v490
  %v492 = vpop.f32.mrb[0].mxu0
  %493 = vmatprep.mubr.f32.mxu0 0.0
  %494 = vmatmul.mubr.f32.gmra.mrb[0].mxu0 %v413
  %v495 = vpop.f32.mrb[0].mxu0
  %v496 = vadd.f32 %v407, %v495
  %v497 = vpop.f32.mrb[0].mxu0
  %498 = vmatprep.mubr.f32.mxu0 0.0
  %499 = vmatmul.mubr.f32.gmra.mrb[0].mxu0 %v416
  %v500 = vpop.f32.mrb[0].mxu0
  %v501 = vadd.f32 %v407, %v500
  %v502 = vpop.f32.mrb[0].mxu0
  %503 = vmatprep.mubr.f32.mxu0 0.0
  %504 = vmatmul.mubr.f32.gmra.mrb[0].mxu0 %v419
  %v505 = vpop.f32.mrb[0].mxu0
  %v506 = vadd.f32 %v407, %v505
  %v507 = vpop.f32.mrb[0].mxu0
  %508 = vmatprep.mubr.f32.mxu0 0.0
  %509 = vmatmul.mubr.f32.gmra.mrb[0].mxu0 %v422
  %v510 = vpop.f32.mrb[0].mxu0
  %v511 = vadd.f32 %v407, %v510
  %v512 = vpop.f32.mrb[0].mxu0
  %513 = vdwg.mxu0
  %v514 = vmul.f32 %v491, 0.5
  %v515 = vmul.f32 %v496, 0.5
  %v516 = vmul.f32 %v501, 0.5
  %v517 = vmul.f32 %v506, 0.5
  %v518 = vmul.f32 %v511, 0.5
  %v519 = vmul.f32 %v491, 0.044715
  %v520 = vmul.f32 %v496, 0.044715
  %v521 = vmul.f32 %v501, 0.044715
  %v522 = vmul.f32 %v506, 0.044715
  %v523 = vmul.f32 %v511, 0.044715
  %v524 = vmul.f32 %v519, %v491
  %v525 = vmul.f32 %v520, %v496
  %v526 = vmul.f32 %v521, %v501
  %v527 = vmul.f32 %v522, %v506
  %v528 = vmul.f32 %v523, %v511
  %v529 = vmul.f32 %v524, %v491
  %v530 = vmul.f32 %v525, %v496
  %v531 = vmul.f32 %v526, %v501
  %v532 = vmul.f32 %v527, %v506
  %v533 = vmul.f32 %v528, %v511
  %v534 = vadd.f32 %v491, %v529
  %v535 = vadd.f32 %v496, %v530
  %v536 = vadd.f32 %v501, %v531
  %v537 = vadd.f32 %v506, %v532
  %v538 = vadd.f32 %v511, %v533
  %v539 = vmul.f32 %v534, 0.7978846
  %v540 = vmul.f32 %v535, 0.7978846
  %v541 = vmul.f32 %v536, 0.7978846
  %v542 = vmul.f32 %v537, 0.7978846
  %v543 = vmul.f32 %v538, 0.7978846
  %v544 = vtanh.pop %v539
  %v545 = vtanh.pop %v540
  %v546 = vtanh.pop %v541
  %v547 = vtanh.pop %v542
  %v548 = vtanh.pop %v543
  %v549 = vadd.f32 %v544, 1.0
  %v550 = vadd.f32 %v545, 1.0
  %v551 = vadd.f32 %v546, 1.0
  %v552 = vadd.f32 %v547, 1.0
  %v553 = vadd.f32 %v548, 1.0
  %v554 = vmul.f32 %v514, %v549
  %v555 = vmul.f32 %v515, %v550
  %v556 = vmul.f32 %v516, %v551
  %v557 = vmul.f32 %v517, %v552
  %v558 = vmul.f32 %v518, %v553
  %v559 = vld [vmem:[%s7] sm:$0xff]
  %v560 = vld [vmem:[%s7 + $0x8] sm:$0xff]
  %v561 = vld [vmem:[%s7 + $0x10] sm:$0xff]
  %v562 = vld [vmem:[%s7 + $0x18] sm:$0xff]
  %v563 = vld [vmem:[%s7 + $0x20] sm:$0xff]
  %v564 = vld [vmem:[%s7 + $0x28] sm:$0xff]
  %v565 = vld [vmem:[%s7 + $0x30] sm:$0xff]
  %v566 = vld [vmem:[%s7 + $0x38] sm:$0xff]
  %vm567 = vcmask 523264
  %v569 = vsel %vm567, %v554, 0
  %v572 = vsel %vm567, %v555, 0
  %v575 = vsel %vm567, %v556, 0
  %v578 = vsel %vm567, %v557, 0
  %v581 = vsel %vm567, %v558, 0
  %583 = vmatprep.subr.mxu0 0.0
  %584 = vmatpush1.msra.mxu0 %v559
  %585 = vmatprep.subr.mxu0 0.0
  %586 = vmatpush1.msra.mxu0 %v560
  %587 = vmatprep.subr.mxu0 0.0
  %588 = vmatpush1.msra.mxu0 %v561
  %589 = vmatprep.subr.mxu0 0.0
  %590 = vmatpush1.msra.mxu0 %v562
  %591 = vmatprep.subr.mxu0 0.0
  %592 = vmatpush1.msra.mxu0 %v563
  %593 = vmatprep.subr.mxu0 0.0
  %594 = vmatpush1.msra.mxu0 %v564
  %595 = vmatprep.subr.mxu0 0.0
  %596 = vmatpush1.msra.mxu0 %v565
  %597 = vmatprep.subr.mxu0 0.0
  %598 = vmatpush1.msra.mxu0 %v566
  %599 = vmatprep.subr.mxu0 0.0
  %600 = vmatpush1.msra.mxu0 0.0
  %601 = vmatprep.subr.mxu0 0.0
  %602 = vmatpush1.msra.mxu0 0.0
  %603 = vmatprep.subr.mxu0 0.0
  %604 = vmatpush1.msra.mxu0 0.0
  %605 = vmatprep.subr.mxu0 0.0
  %606 = vmatpush1.msra.mxu0 0.0
  %607 = vmatprep.subr.mxu0 0.0
  %608 = vmatpush1.msra.mxu0 0.0
  %609 = vmatprep.subr.mxu0 0.0
  %610 = vmatpush1.msra.mxu0 0.0
  %611 = vmatprep.subr.mxu0 0.0
  %612 = vmatpush1.msra.mxu0 0.0
  %613 = vmatprep.subr.mxu0 0.0
  %614 = vmatpush1.msra.mxu0 0.0
  %615 = vmatprep.subr.mxu0 0.0
  %616 = vmatpush1.msra.mxu0 0.0
  %617 = vmatprep.subr.mxu0 0.0
  %618 = vmatpush1.msra.mxu0 0.0
  %619 = vmatprep.subr.mxu0 0.0
  %620 = vmatpush1.msra.mxu0 0.0
  %621 = vmatprep.subr.mxu0 0.0
  %622 = vmatpush1.msra.mxu0 0.0
  %623 = vmatprep.subr.mxu0 0.0
  %624 = vmatpush1.msra.mxu0 0.0
  %625 = vmatprep.subr.mxu0 0.0
  %626 = vmatpush1.msra.mxu0 0.0
  %627 = vmatprep.subr.mxu0 0.0
  %628 = vmatpush1.msra.mxu0 0.0
  %629 = vmatprep.subr.mxu0 0.0
  %630 = vmatpush1.msra.mxu0 0.0
  %631 = vmatprep.subr.mxu0 0.0
  %632 = vmatpush1.msra.mxu0 0.0
  %633 = vmatprep.subr.mxu0 0.0
  %634 = vmatpush1.msra.mxu0 0.0
  %635 = vmatprep.subr.mxu0 0.0
  %636 = vmatpush1.msra.mxu0 0.0
  %637 = vmatprep.subr.mxu0 0.0
  %638 = vmatpush1.msra.mxu0 0.0
  %639 = vmatprep.subr.mxu0 0.0
  %640 = vmatpush1.msra.mxu0 0.0
  %641 = vmatprep.subr.mxu0 0.0
  %642 = vmatpush1.msra.mxu0 0.0
  %643 = vmatprep.subr.mxu0 0.0
  %644 = vmatpush1.msra.mxu0 0.0
  %645 = vmatprep.subr.mxu0 0.0
  %646 = vmatpush1.msra.mxu0 0.0
  %647 = vmatprep.mubr.f32.mxu0 0.0
  %648 = vmatmul.mubr.f32.gmra.mrb[0].mxu0 %v569
  %v649 = vpop.f32.mrb[0].mxu0
  %v650 = vadd.f32 0.0, %v649
  %v651 = vpop.f32.mrb[0].mxu0
  %652 = vmatprep.mubr.f32.mxu0 0.0
  %653 = vmatmul.mubr.f32.gmra.mrb[0].mxu0 %v572
  %v654 = vpop.f32.mrb[0].mxu0
  %v655 = vadd.f32 0.0, %v654
  %v656 = vpop.f32.mrb[0].mxu0
  %657 = vmatprep.mubr.f32.mxu0 0.0
  %658 = vmatmul.mubr.f32.gmra.mrb[0].mxu0 %v575
  %v659 = vpop.f32.mrb[0].mxu0
  %v660 = vadd.f32 0.0, %v659
  %v661 = vpop.f32.mrb[0].mxu0
  %662 = vmatprep.mubr.f32.mxu0 0.0
  %663 = vmatmul.mubr.f32.gmra.mrb[0].mxu0 %v578
  %v664 = vpop.f32.mrb[0].mxu0
  %v665 = vadd.f32 0.0, %v664
  %v666 = vpop.f32.mrb[0].mxu0
  %667 = vmatprep.mubr.f32.mxu0 0.0
  %668 = vmatmul.mubr.f32.gmra.mrb[0].mxu0 %v581
  %v669 = vpop.f32.mrb[0].mxu0
  %v670 = vadd.f32 0.0, %v669
  %v671 = vpop.f32.mrb[0].mxu0
  %672 = vdwg.mxu0
  %v673 = vadd.f32 %v301, %v650
  %v674 = vadd.f32 %v302, %v655
  %v675 = vadd.f32 %v303, %v660
  %v676 = vadd.f32 %v304, %v665
  %v677 = vadd.f32 %v305, %v670
  %v678 = vld [vmem:[%s8] sm:$0x1]
  %v680 = vlaneseq
  %v681 = vshrl.u32 %v680, 7
  %v682 = vsub.s32 0, %v681
  %v683 = vrot.slane %v678, %v682
  %v685 = vadd.f32 %v673, %v683
  %v686 = vadd.f32 %v674, %v683
  %v687 = vadd.f32 %v675, %v683
  %v688 = vadd.f32 %v676, %v683
  %v689 = vadd.f32 %v677, %v683
  %690 = vst.msk [vmem:[%s9] sm:$0xff] %vm306, %v685
  %691 = vst.msk [vmem:[%s9 + $0x8] sm:$0xff] %vm306, %v686
  %692 = vst.msk [vmem:[%s9 + $0x10] sm:$0xff] %vm306, %v687
  %693 = vst.msk [vmem:[%s9 + $0x18] sm:$0xff] %vm306, %v688
  %694 = vst.msk [vmem:[%s9 + $0x20] sm:$0xf] %vm319, %v689
  // Predicated region
  $region38: #{encoder_forward.8} parent=0 // pred_check
    _
  $region39: #{encoder_forward.8} parent=0 // pred_check_branch
    %696 = sbr.rel (0) target = $region41
  $region40: #{encoder_forward.8} parent=0 // pred_region
    _
  $region41: #{encoder_forward.8} parent=0 // pred_fallthru
    _
  // Predicated region
  $region42: #{encoder_forward.8} parent=0 // pred_check
    _
  $region43: #{encoder_forward.8} parent=0 // pred_check_branch
    %698 = sbr.rel (0) target = $region45
  $region44: #{encoder_forward.8} parent=0 // pred_region
    _
  $region45: #{encoder_forward.8} parent=0 // pred_fallthru
    _

// kernel: encoder_forward.10
$region0: #{encoder_forward.10}
  #allocation0 [shape = 'u32[]', space=smem, size = 0x4, offset = 0x4, fixed_abs, tag = 'smem constant byte address 0x4 - core index']
  #allocation1 [shape = 'u32[144,128]{1,0:T(1,128)}', space=vmem, size = 0x12000, scoped, tag = 'internal scratch']
  %s0 = inlined_call_operand.vmem [shape: f32[30,32], index: 0, kind: input, shape index: {}]
  %s1 = inlined_call_operand.vmem [shape: f32[30,32], index: 1, kind: input, shape index: {}]
  %s2 = inlined_call_operand.vmem [shape: f32[1,32], index: 2, kind: input, shape index: {}]
  %s3 = inlined_call_operand.vmem [shape: f32[1,32], index: 3, kind: input, shape index: {}]
  %s4 = inlined_call_operand.vmem [shape: f32[32,48], index: 4, kind: input, shape index: {}]
  %s5 = inlined_call_operand.vmem [shape: f32[1,48], index: 5, kind: input, shape index: {}]
  %s6 = inlined_call_operand.vmem [shape: f32[1,32], index: 6, kind: input, shape index: {}]
  %s7 = inlined_call_operand.vmem [shape: f32[16,16], index: 7, kind: input, shape index: {}]
  %s8 = inlined_call_operand.vmem [shape: f32[30,48], index: 8, kind: output, shape index: {}]
  %s9 = sld [smem:[#allocation0]]
  $region42: #{encoder_forward.10} parent=0
    _
  %s11 = ssub.s32 1, %s9
  %s12 = scalar_select 0, %s11, %s9
  // Predicated region
  $region2: #{encoder_forward.10} parent=0 // pred_check
    _
  $region3: #{encoder_forward.10} parent=0 // pred_check_branch
    %14 = sbr.rel (0) target = $region5
  $region4: #{encoder_forward.10} parent=0 // pred_region
    _
  $region5: #{encoder_forward.10} parent=0 // pred_fallthru
    _
  // Predicated region
  $region6: #{encoder_forward.10} parent=0 // pred_check
    _
  $region7: #{encoder_forward.10} parent=0 // pred_check_branch
    %16 = sbr.rel (0) target = $region9
  $region8: #{encoder_forward.10} parent=0 // pred_region
    _
  $region9: #{encoder_forward.10} parent=0 // pred_fallthru
    _
  // Predicated region
  $region10: #{encoder_forward.10} parent=0 // pred_check
    _
  $region11: #{encoder_forward.10} parent=0 // pred_check_branch
    %18 = sbr.rel (0) target = $region13
  $region12: #{encoder_forward.10} parent=0 // pred_region
    _
  $region13: #{encoder_forward.10} parent=0 // pred_fallthru
    _
  // Predicated region
  $region14: #{encoder_forward.10} parent=0 // pred_check
    _
  $region15: #{encoder_forward.10} parent=0 // pred_check_branch
    %20 = sbr.rel (0) target = $region17
  $region16: #{encoder_forward.10} parent=0 // pred_region
    _
  $region17: #{encoder_forward.10} parent=0 // pred_fallthru
    _
  // Predicated region
  $region18: #{encoder_forward.10} parent=0 // pred_check
    _
  $region19: #{encoder_forward.10} parent=0 // pred_check_branch
    %22 = sbr.rel (0) target = $region21
  $region20: #{encoder_forward.10} parent=0 // pred_region
    _
  $region21: #{encoder_forward.10} parent=0 // pred_fallthru
    _
  // Predicated region
  $region22: #{encoder_forward.10} parent=0 // pred_check
    _
  $region23: #{encoder_forward.10} parent=0 // pred_check_branch
    %24 = sbr.rel (0) target = $region25
  $region24: #{encoder_forward.10} parent=0 // pred_region
    _
  $region25: #{encoder_forward.10} parent=0 // pred_fallthru
    _
  // Predicated region
  $region26: #{encoder_forward.10} parent=0 // pred_check
    _
  $region27: #{encoder_forward.10} parent=0 // pred_check_branch
    %26 = sbr.rel (0) target = $region29
  $region28: #{encoder_forward.10} parent=0 // pred_region
    _
  $region29: #{encoder_forward.10} parent=0 // pred_fallthru
    _
  // Predicated region
  $region30: #{encoder_forward.10} parent=0 // pred_check
    _
  $region31: #{encoder_forward.10} parent=0 // pred_check_branch
    %28 = sbr.rel (0) target = $region33
  $region32: #{encoder_forward.10} parent=0 // pred_region
    _
  $region33: #{encoder_forward.10} parent=0 // pred_fallthru
    _
  %v29 = vld [vmem:[%s0] sm:$0xff]
  %v30 = vld [vmem:[%s0 + $0x8] sm:$0xff]
  %v31 = vld [vmem:[%s0 + $0x10] sm:$0xff]
  %v32 = vld [vmem:[%s0 + $0x18] sm:$0x3f]
  %vm33 = vcmask 261120
  %v34 = vsel %vm33, %v29, 0.0
  %35 = vadd.xlane.f32.xlu0 %v34
  %v36 = vpop.xlane.xlu0 %35
  %v37 = vsel %vm33, %v30, 0.0
  %38 = vadd.xlane.f32.xlu0 %v37
  %v39 = vpop.xlane.xlu0 %38
  %v40 = vsel %vm33, %v31, 0.0
  %41 = vadd.xlane.f32.xlu0 %v40
  %v42 = vpop.xlane.xlu0 %41
  %vm43 = vcmask 259072
  %v44 = vsel %vm43, %v32, 0.0
  %45 = vadd.xlane.f32.xlu0 %v44
  %v46 = vpop.xlane.xlu0 %45
  %v47 = vrcp.pop 32.0
  %v48 = vmul.f32 %v36, %v47
  %v49 = vmul.f32 %v39, %v47
  %v50 = vmul.f32 %v42, %v47
  %v51 = vmul.f32 %v46, %v47
  %v52 = vsub.f32 %v29, %v48
  %v53 = vsub.f32 %v30, %v49
  %v54 = vsub.f32 %v31, %v50
  %v55 = vsub.f32 %v32, %v51
  %v56 = vmul.f32 %v52, %v52
  %v57 = vmul.f32 %v53, %v53
  %v58 = vmul.f32 %v54, %v54
  %v59 = vmul.f32 %v55, %v55
  %v60 = vsel %vm33, %v56, 0.0
  %61 = vadd.xlane.f32.xlu0 %v60
  %v62 = vpop.xlane.xlu0 %61
  %v63 = vsel %vm33, %v57, 0.0
  %64 = vadd.xlane.f32.xlu0 %v63
  %v65 = vpop.xlane.xlu0 %64
  %v66 = vsel %vm33, %v58, 0.0
  %67 = vadd.xlane.f32.xlu0 %v66
  %v68 = vpop.xlane.xlu0 %67
  %v69 = vsel %vm43, %v59, 0.0
  %70 = vadd.xlane.f32.xlu0 %v69
  %v71 = vpop.xlane.xlu0 %70
  %v72 = vmul.f32 %v62, %v47
  %v73 = vmul.f32 %v65, %v47
  %v74 = vmul.f32 %v68, %v47
  %v75 = vmul.f32 %v71, %v47
  %v76 = vadd.f32 %v72, 1e-05
  %v77 = vadd.f32 %v73, 1e-05
  %v78 = vadd.f32 %v74, 1e-05
  %v79 = vadd.f32 %v75, 1e-05
  %v80 = vrsqrt.pop %v76
  %v81 = vrsqrt.pop %v77
  %v82 = vrsqrt.pop %v78
  %v83 = vrsqrt.pop %v79
  %v84 = vmul.f32 %v52, %v80
  %v85 = vmul.f32 %v53, %v81
  %v86 = vmul.f32 %v54, %v82
  %v87 = vmul.f32 %v55, %v83
  %v88 = vld [vmem:[%s2] sm:$0x1]
  %v90 = vlaneseq
  %v91 = vshrl.u32 %v90, 7
  %v92 = vsub.s32 0, %v91
  %v93 = vrot.slane %v88, %v92
  %v95 = vmul.f32 %v84, %v93
  %v96 = vmul.f32 %v85, %v93
  %v97 = vmul.f32 %v86, %v93
  %v98 = vmul.f32 %v87, %v93
  %v99 = vld [vmem:[%s3] sm:$0x1]
  %v101 = vlaneseq
  %v102 = vshrl.u32 %v101, 7
  %v103 = vsub.s32 0, %v102
  %v104 = vrot.slane %v99, %v103
  %v106 = vadd.f32 %v95, %v104
  %v107 = vadd.f32 %v96, %v104
  %v108 = vadd.f32 %v97, %v104
  %v109 = vadd.f32 %v98, %v104
  %v110 = vld [vmem:[%s4] sm:$0xff]
  %v111 = vld [vmem:[%s4 + $0x8] sm:$0xff]
  %v112 = vld [vmem:[%s4 + $0x10] sm:$0xff]
  %v113 = vld [vmem:[%s4 + $0x18] sm:$0xff]
  %v114 = vld [vmem:[%s5] sm:$0x1]
  %v116 = vlaneseq
  %v117 = vshrl.u32 %v116, 7
  %v118 = vsub.s32 0, %v117
  %v119 = vrot.slane %v114, %v118
  %v122 = vsel %vm33, %v106, 0
  %v125 = vsel %vm33, %v107, 0
  %v128 = vsel %vm33, %v108, 0
  %v131 = vsel %vm33, %v109, 0
  %133 = vmatprep.subr.mxu0 0.0
  %134 = vmatpush1.msra.mxu0 %v110
  %135 = vmatprep.subr.mxu0 0.0
  %136 = vmatpush1.msra.mxu0 %v111
  %137 = vmatprep.subr.mxu0 0.0
  %138 = vmatpush1.msra.mxu0 %v112
  %139 = vmatprep.subr.mxu0 0.0
  %140 = vmatpush1.msra.mxu0 %v113
  %141 = vmatprep.subr.mxu0 0.0
  %142 = vmatpush1.msra.mxu0 0.0
  %143 = vmatprep.subr.mxu0 0.0
  %144 = vmatpush1.msra.mxu0 0.0
  %145 = vmatprep.subr.mxu0 0.0
  %146 = vmatpush1.msra.mxu0 0.0
  %147 = vmatprep.subr.mxu0 0.0
  %148 = vmatpush1.msra.mxu0 0.0
  %149 = vmatprep.subr.mxu0 0.0
  %150 = vmatpush1.msra.mxu0 0.0
  %151 = vmatprep.subr.mxu0 0.0
  %152 = vmatpush1.msra.mxu0 0.0
  %153 = vmatprep.subr.mxu0 0.0
  %154 = vmatpush1.msra.mxu0 0.0
  %155 = vmatprep.subr.mxu0 0.0
  %156 = vmatpush1.msra.mxu0 0.0
  %157 = vmatprep.subr.mxu0 0.0
  %158 = vmatpush1.msra.mxu0 0.0
  %159 = vmatprep.subr.mxu0 0.0
  %160 = vmatpush1.msra.mxu0 0.0
  %161 = vmatprep.subr.mxu0 0.0
  %162 = vmatpush1.msra.mxu0 0.0
  %163 = vmatprep.subr.mxu0 0.0
  %164 = vmatpush1.msra.mxu0 0.0
  %165 = vmatprep.subr.mxu0 0.0
  %166 = vmatpush1.msra.mxu0 0.0
  %167 = vmatprep.subr.mxu0 0.0
  %168 = vmatpush1.msra.mxu0 0.0
  %169 = vmatprep.subr.mxu0 0.0
  %170 = vmatpush1.msra.mxu0 0.0
  %171 = vmatprep.subr.mxu0 0.0
  %172 = vmatpush1.msra.mxu0 0.0
  %173 = vmatprep.subr.mxu0 0.0
  %174 = vmatpush1.msra.mxu0 0.0
  %175 = vmatprep.subr.mxu0 0.0
  %176 = vmatpush1.msra.mxu0 0.0
  %177 = vmatprep.subr.mxu0 0.0
  %178 = vmatpush1.msra.mxu0 0.0
  %179 = vmatprep.subr.mxu0 0.0
  %180 = vmatpush1.msra.mxu0 0.0
  %181 = vmatprep.subr.mxu0 0.0
  %182 = vmatpush1.msra.mxu0 0.0
  %183 = vmatprep.subr.mxu0 0.0
  %184 = vmatpush1.msra.mxu0 0.0
  %185 = vmatprep.subr.mxu0 0.0
  %186 = vmatpush1.msra.mxu0 0.0
  %187 = vmatprep.subr.mxu0 0.0
  %188 = vmatpush1.msra.mxu0 0.0
  %189 = vmatprep.subr.mxu0 0.0
  %190 = vmatpush1.msra.mxu0 0.0
  %191 = vmatprep.subr.mxu0 0.0
  %192 = vmatpush1.msra.mxu0 0.0
  %193 = vmatprep.subr.mxu0 0.0
  %194 = vmatpush1.msra.mxu0 0.0
  %195 = vmatprep.subr.mxu0 0.0
  %196 = vmatpush1.msra.mxu0 0.0
  %197 = vmatprep.mubr.f32.mxu0 0.0
  %198 = vmatmul.mubr.f32.gmra.mrb[0].mxu0 %v122
  %v199 = vpop.f32.mrb[0].mxu0
  %v200 = vadd.f32 %v119, %v199
  %v201 = vpop.f32.mrb[0].mxu0
  %202 = vmatprep.mubr.f32.mxu0 0.0
  %203 = vmatmul.mubr.f32.gmra.mrb[0].mxu0 %v125
  %v204 = vpop.f32.mrb[0].mxu0
  %v205 = vadd.f32 %v119, %v204
  %v206 = vpop.f32.mrb[0].mxu0
  %207 = vmatprep.mubr.f32.mxu0 0.0
  %208 = vmatmul.mubr.f32.gmra.mrb[0].mxu0 %v128
  %v209 = vpop.f32.mrb[0].mxu0
  %v210 = vadd.f32 %v119, %v209
  %v211 = vpop.f32.mrb[0].mxu0
  %212 = vmatprep.mubr.f32.mxu0 0.0
  %213 = vmatmul.mubr.f32.gmra.mrb[0].mxu0 %v131
  %v214 = vpop.f32.mrb[0].mxu0
  %v215 = vadd.f32 %v119, %v214
  %v216 = vpop.f32.mrb[0].mxu0
  %217 = vdwg.mxu0
  %v218 = vld [vmem:[%s1] sm:$0xff]
  %v219 = vld [vmem:[%s1 + $0x8] sm:$0xff]
  %v220 = vld [vmem:[%s1 + $0x10] sm:$0xff]
  %v221 = vld [vmem:[%s1 + $0x18] sm:$0x3f]
  %v222 = vld [vmem:[%s6] sm:$0x1]
  %v224 = vlaneseq
  %v225 = vshrl.u32 %v224, 7
  %v226 = vsub.s32 0, %v225
  %v227 = vrot.slane %v222, %v226
  %v229 = vmul.f32 %v200, %v227
  %v230 = vmul.f32 %v205, %v227
  %v231 = vmul.f32 %v210, %v227
  %v232 = vmul.f32 %v215, %v227
  %v233 = vadd.f32 %v218, %v229
  %v234 = vadd.f32 %v219, %v230
  %v235 = vadd.f32 %v220, %v231
  %v236 = vadd.f32 %v221, %v232
  %vm237 = vcmask 392448
  %v238 = vsel %vm237, %v200, -inf
  %239 = vmax.xlane.f32.xlu0 %v238
  %v240 = vpop.xlane.xlu0 %239
  %v241 = vsel %vm237, %v205, -inf
  %242 = vmax.xlane.f32.xlu0 %v241
  %v243 = vpop.xlane.xlu0 %242
  %v244 = vsel %vm237, %v210, -inf
  %245 = vmax.xlane.f32.xlu0 %v244
  %v246 = vpop.xlane.xlu0 %245
  %vm247 = vcmask 390400
  %v248 = vsel %vm247, %v215, -inf
  %249 = vmax.xlane.f32.xlu0 %v248
  %v250 = vpop.xlane.xlu0 %249
  %v251 = vsub.f32 %v200, %v240
  %v252 = vsub.f32 %v205, %v243
  %v253 = vsub.f32 %v210, %v246
  %v254 = vsub.f32 %v215, %v250
  %v255 = vmul.f32 %v251, 1.442695
  %v256 = vpow.pop %v255
  %v257 = vmul.f32 %v252, 1.442695
  %v258 = vpow.pop %v257
  %v259 = vmul.f32 %v253, 1.442695
  %v260 = vpow.pop %v259
  %v261 = vmul.f32 %v254, 1.442695
  %v262 = vpow.pop %v261
  %v263 = vld [vmem:[%s7] sm:$0xff]
  %v264 = vld [vmem:[%s7 + $0x8] sm:$0xff]
  %269 = vrot.lane.b32.xlu0 %v256, 96
  %v270 = vpop.permute.xlu0 %269
  %271 = vrot.lane.b32.xlu0 %v258, 96
  %v272 = vpop.permute.xlu0 %271
  %273 = vrot.lane.b32.xlu0 %v260, 96
  %v274 = vpop.permute.xlu0 %273
  %275 = vrot.lane.b32.xlu0 %v262, 96
  %v276 = vpop.permute.xlu0 %275
  %vm277 = vcmask 130048
  %v278 = vsel %vm277, %v270, 0
  %v280 = vsel %vm277, %v272, 0
  %v282 = vsel %vm277, %v274, 0
  %v284 = vsel %vm277, %v276, 0
  %286 = vmatprep.subr.mxu0 0.0
  %287 = vmatpush1.msra.mxu0 %v263
  %288 = vmatprep.subr.mxu0 0.0
  %289 = vmatpush1.msra.mxu0 %v264
  %290 = vmatprep.subr.mxu0 0.0
  %291 = vmatpush1.msra.mxu0 0.0
  %292 = vmatprep.subr.mxu0 0.0
  %293 = vmatpush1.msra.mxu0 0.0
  %294 = vmatprep.subr.mxu0 0.0
  %295 = vmatpush1.msra.mxu0 0.0
  %296 = vmatprep.subr.mxu0 0.0
  %297 = vmatpush1.msra.mxu0 0.0
  %298 = vmatprep.subr.mxu0 0.0
  %299 = vmatpush1.msra.mxu0 0.0
  %300 = vmatprep.subr.mxu0 0.0
  %301 = vmatpush1.msra.mxu0 0.0
  %302 = vmatprep.subr.mxu0 0.0
  %303 = vmatpush1.msra.mxu0 0.0
  %304 = vmatprep.subr.mxu0 0.0
  %305 = vmatpush1.msra.mxu0 0.0
  %306 = vmatprep.subr.mxu0 0.0
  %307 = vmatpush1.msra.mxu0 0.0
  %308 = vmatprep.subr.mxu0 0.0
  %309 = vmatpush1.msra.mxu0 0.0
  %310 = vmatprep.subr.mxu0 0.0
  %311 = vmatpush1.msra.mxu0 0.0
  %312 = vmatprep.subr.mxu0 0.0
  %313 = vmatpush1.msra.mxu0 0.0
  %314 = vmatprep.subr.mxu0 0.0
  %315 = vmatpush1.msra.mxu0 0.0
  %316 = vmatprep.subr.mxu0 0.0
  %317 = vmatpush1.msra.mxu0 0.0
  %318 = vmatprep.subr.mxu0 0.0
  %319 = vmatpush1.msra.mxu0 0.0
  %320 = vmatprep.subr.mxu0 0.0
  %321 = vmatpush1.msra.mxu0 0.0
  %322 = vmatprep.subr.mxu0 0.0
  %323 = vmatpush1.msra.mxu0 0.0
  %324 = vmatprep.subr.mxu0 0.0
  %325 = vmatpush1.msra.mxu0 0.0
  %326 = vmatprep.subr.mxu0 0.0
  %327 = vmatpush1.msra.mxu0 0.0
  %328 = vmatprep.subr.mxu0 0.0
  %329 = vmatpush1.msra.mxu0 0.0
  %330 = vmatprep.subr.mxu0 0.0
  %331 = vmatpush1.msra.mxu0 0.0
  %332 = vmatprep.subr.mxu0 0.0
  %333 = vmatpush1.msra.mxu0 0.0
  %334 = vmatprep.subr.mxu0 0.0
  %335 = vmatpush1.msra.mxu0 0.0
  %336 = vmatprep.subr.mxu0 0.0
  %337 = vmatpush1.msra.mxu0 0.0
  %338 = vmatprep.subr.mxu0 0.0
  %339 = vmatpush1.msra.mxu0 0.0
  %340 = vmatprep.subr.mxu0 0.0
  %341 = vmatpush1.msra.mxu0 0.0
  %342 = vmatprep.subr.mxu0 0.0
  %343 = vmatpush1.msra.mxu0 0.0
  %344 = vmatprep.subr.mxu0 0.0
  %345 = vmatpush1.msra.mxu0 0.0
  %346 = vmatprep.subr.mxu0 0.0
  %347 = vmatpush1.msra.mxu0 0.0
  %348 = vmatprep.subr.mxu0 0.0
  %349 = vmatpush1.msra.mxu0 0.0
  %350 = vmatprep.mubr.f32.mxu0 0.0
  %351 = vmatmul.mubr.f32.gmra.mrb[0].mxu0 %v278
  %v352 = vpop.f32.mrb[0].mxu0
  %v353 = vadd.f32 0.0, %v352
  %v354 = vpop.f32.mrb[0].mxu0
  %355 = vmatprep.mubr.f32.mxu0 0.0
  %356 = vmatmul.mubr.f32.gmra.mrb[0].mxu0 %v280
  %v357 = vpop.f32.mrb[0].mxu0
  %v358 = vadd.f32 0.0, %v357
  %v359 = vpop.f32.mrb[0].mxu0
  %360 = vmatprep.mubr.f32.mxu0 0.0
  %361 = vmatmul.mubr.f32.gmra.mrb[0].mxu0 %v282
  %v362 = vpop.f32.mrb[0].mxu0
  %v363 = vadd.f32 0.0, %v362
  %v364 = vpop.f32.mrb[0].mxu0
  %365 = vmatprep.mubr.f32.mxu0 0.0
  %366 = vmatmul.mubr.f32.gmra.mrb[0].mxu0 %v284
  %v367 = vpop.f32.mrb[0].mxu0
  %v368 = vadd.f32 0.0, %v367
  %v369 = vpop.f32.mrb[0].mxu0
  %370 = vdwg.mxu0
  %v371 = vrcp.pop %v353
  %v372 = vrcp.pop %v358
  %v373 = vrcp.pop %v363
  %v374 = vrcp.pop %v368
  %379 = vrot.lane.b32.xlu0 %v371, 32
  %v380 = vpop.permute.xlu0 %379
  %381 = vrot.lane.b32.xlu0 %v372, 32
  %v382 = vpop.permute.xlu0 %381
  %383 = vrot.lane.b32.xlu0 %v373, 32
  %v384 = vpop.permute.xlu0 %383
  %385 = vrot.lane.b32.xlu0 %v374, 32
  %v386 = vpop.permute.xlu0 %385
  %v391 = vmul.f32 %v256, %v380
  %v392 = vmul.f32 %v258, %v382
  %v393 = vmul.f32 %v260, %v384
  %v394 = vmul.f32 %v262, %v386
  %v395 = vsel %vm33, %v233, %v391
  %v396 = vsel %vm33, %v234, %v392
  %v397 = vsel %vm33, %v235, %v393
  %v398 = vsel %vm33, %v236, %v394
  %vm399 = vcmask 392192
  %400 = vst.msk [vmem:[%s8] sm:$0xff] %vm399, %v395
  %401 = vst.msk [vmem:[%s8 + $0x8] sm:$0xff] %vm399, %v396
  %402 = vst.msk [vmem:[%s8 + $0x10] sm:$0xff] %vm399, %v397
  %vm403 = vcmask 390144
  %404 = vst.msk [vmem:[%s8 + $0x18] sm:$0x3f] %vm403, %v398
  // Predicated region
  $region34: #{encoder_forward.10} parent=0 // pred_check
    _
  $region35: #{encoder_forward.10} parent=0 // pred_check_branch
    %406 = sbr.rel (0) target = $region37
  $region36: #{encoder_forward.10} parent=0 // pred_region
    _
  $region37: #{encoder_forward.10} parent=0 // pred_fallthru
    _
  // Predicated region
  $region38: #{encoder_forward.10} parent=0 // pred_check
    _
  $region39: #{encoder_forward.10} parent=0 // pred_check_branch
    %408 = sbr.rel (0) target = $region41
  $region40: #{encoder_forward.10} parent=0 // pred_region
    _
  $region41: #{encoder_forward.10} parent=0 // pred_fallthru
    _

// kernel: encoder_forward.11
$region0: #{encoder_forward.11}
  #allocation0 [shape = 'u32[]', space=smem, size = 0x4, offset = 0x4, fixed_abs, tag = 'smem constant byte address 0x4 - core index']
  #allocation1 [shape = 'u32[144,128]{1,0:T(1,128)}', space=vmem, size = 0x12000, scoped, tag = 'internal scratch']
  %s0 = inlined_call_operand.vmem [shape: f32[30,512], index: 0, kind: input, shape index: {}]
  %s1 = inlined_call_operand.vmem [shape: f32[30,32], index: 1, kind: input, shape index: {}]
  %s2 = inlined_call_operand.vmem [shape: f32[512,32], index: 2, kind: input, shape index: {}]
  %s3 = inlined_call_operand.vmem [shape: f32[1,32], index: 3, kind: input, shape index: {}]
  %s4 = inlined_call_operand.vmem [shape: f32[1,32], index: 4, kind: input, shape index: {}]
  %s5 = inlined_call_operand.vmem [shape: f32[32,64], index: 5, kind: input, shape index: {}]
  %s6 = inlined_call_operand.vmem [shape: f32[1,64], index: 6, kind: input, shape index: {}]
  %s7 = inlined_call_operand.vmem [shape: f32[64,32], index: 7, kind: input, shape index: {}]
  %s8 = inlined_call_operand.vmem [shape: f32[1,32], index: 8, kind: input, shape index: {}]
  %s9 = inlined_call_operand.vmem [shape: f32[30,32], index: 9, kind: output, shape index: {}]
  %s10 = sld [smem:[#allocation0]]
  $region46: #{encoder_forward.11} parent=0
    _
  %s12 = ssub.s32 1, %s10
  %s13 = scalar_select 0, %s12, %s10
  // Predicated region
  $region2: #{encoder_forward.11} parent=0 // pred_check
    _
  $region3: #{encoder_forward.11} parent=0 // pred_check_branch
    %15 = sbr.rel (0) target = $region5
  $region4: #{encoder_forward.11} parent=0 // pred_region
    _
  $region5: #{encoder_forward.11} parent=0 // pred_fallthru
    _
  // Predicated region
  $region6: #{encoder_forward.11} parent=0 // pred_check
    _
  $region7: #{encoder_forward.11} parent=0 // pred_check_branch
    %17 = sbr.rel (0) target = $region9
  $region8: #{encoder_forward.11} parent=0 // pred_region
    _
  $region9: #{encoder_forward.11} parent=0 // pred_fallthru
    _
  // Predicated region
  $region10: #{encoder_forward.11} parent=0 // pred_check
    _
  $region11: #{encoder_forward.11} parent=0 // pred_check_branch
    %19 = sbr.rel (0) target = $region13
  $region12: #{encoder_forward.11} parent=0 // pred_region
    _
  $region13: #{encoder_forward.11} parent=0 // pred_fallthru
    _
  // Predicated region
  $region14: #{encoder_forward.11} parent=0 // pred_check
    _
  $region15: #{encoder_forward.11} parent=0 // pred_check_branch
    %21 = sbr.rel (0) target = $region17
  $region16: #{encoder_forward.11} parent=0 // pred_region
    _
  $region17: #{encoder_forward.11} parent=0 // pred_fallthru
    _
  // Predicated region
  $region18: #{encoder_forward.11} parent=0 // pred_check
    _
  $region19: #{encoder_forward.11} parent=0 // pred_check_branch
    %23 = sbr.rel (0) target = $region21
  $region20: #{encoder_forward.11} parent=0 // pred_region
    _
  $region21: #{encoder_forward.11} parent=0 // pred_fallthru
    _
  // Predicated region
  $region22: #{encoder_forward.11} parent=0 // pred_check
    _
  $region23: #{encoder_forward.11} parent=0 // pred_check_branch
    %25 = sbr.rel (0) target = $region25
  $region24: #{encoder_forward.11} parent=0 // pred_region
    _
  $region25: #{encoder_forward.11} parent=0 // pred_fallthru
    _
  // Predicated region
  $region26: #{encoder_forward.11} parent=0 // pred_check
    _
  $region27: #{encoder_forward.11} parent=0 // pred_check_branch
    %27 = sbr.rel (0) target = $region29
  $region28: #{encoder_forward.11} parent=0 // pred_region
    _
  $region29: #{encoder_forward.11} parent=0 // pred_fallthru
    _
  // Predicated region
  $region30: #{encoder_forward.11} parent=0 // pred_check
    _
  $region31: #{encoder_forward.11} parent=0 // pred_check_branch
    %29 = sbr.rel (0) target = $region33
  $region32: #{encoder_forward.11} parent=0 // pred_region
    _
  $region33: #{encoder_forward.11} parent=0 // pred_fallthru
    _
  // Predicated region
  $region34: #{encoder_forward.11} parent=0 // pred_check
    _
  $region35: #{encoder_forward.11} parent=0 // pred_check_branch
    %31 = sbr.rel (0) target = $region37
  $region36: #{encoder_forward.11} parent=0 // pred_region
    _
  $region37: #{encoder_forward.11} parent=0 // pred_fallthru
    _
  %v32 = vld [vmem:[%s1] sm:$0xff]
  %v33 = vld [vmem:[%s1 + $0x8] sm:$0xff]
  %v34 = vld [vmem:[%s1 + $0x10] sm:$0xff]
  %v35 = vld [vmem:[%s1 + $0x18] sm:$0x3f]
  %v36 = vld [vmem:[%s0] sm:$0xff]
  %v37 = vld [vmem:[%s0 + $0x8] sm:$0xff]
  %v38 = vld [vmem:[%s0 + $0x10] sm:$0xff]
  %v39 = vld [vmem:[%s0 + $0x18] sm:$0xff]
  %v40 = vld [vmem:[%s0 + $0x20] sm:$0xff]
  %v41 = vld [vmem:[%s0 + $0x28] sm:$0xff]
  %v42 = vld [vmem:[%s0 + $0x30] sm:$0xff]
  %v43 = vld [vmem:[%s0 + $0x38] sm:$0xff]
  %v44 = vld [vmem:[%s0 + $0x40] sm:$0xff]
  %v45 = vld [vmem:[%s0 + $0x48] sm:$0xff]
  %v46 = vld [vmem:[%s0 + $0x50] sm:$0xff]
  %v47 = vld [vmem:[%s0 + $0x58] sm:$0xff]
  %v48 = vld [vmem:[%s0 + $0x60] sm:$0x3f]
  %v49 = vld [vmem:[%s0 + $0x68] sm:$0x3f]
  %v50 = vld [vmem:[%s0 + $0x70] sm:$0x3f]
  %v51 = vld [vmem:[%s0 + $0x78] sm:$0x3f]
  %v52 = vld [vmem:[%s2] sm:$0xff]
  %v53 = vld [vmem:[%s2 + $0x8] sm:$0xff]
  %v54 = vld [vmem:[%s2 + $0x10] sm:$0xff]
  %v55 = vld [vmem:[%s2 + $0x18] sm:$0xff]
  %v56 = vld [vmem:[%s2 + $0x20] sm:$0xff]
  %v57 = vld [vmem:[%s2 + $0x28] sm:$0xff]
  %v58 = vld [vmem:[%s2 + $0x30] sm:$0xff]
  %v59 = vld [vmem:[%s2 + $0x38] sm:$0xff]
  %v60 = vld [vmem:[%s2 + $0x40] sm:$0xff]
  %v61 = vld [vmem:[%s2 + $0x48] sm:$0xff]
  %v62 = vld [vmem:[%s2 + $0x50] sm:$0xff]
  %v63 = vld [vmem:[%s2 + $0x58] sm:$0xff]
  %v64 = vld [vmem:[%s2 + $0x60] sm:$0xff]
  %v65 = vld [vmem:[%s2 + $0x68] sm:$0xff]
  %v66 = vld [vmem:[%s2 + $0x70] sm:$0xff]
  %v67 = vld [vmem:[%s2 + $0x78] sm:$0xff]
  %v68 = vld [vmem:[%s2 + $0x80] sm:$0xff]
  %v69 = vld [vmem:[%s2 + $0x88] sm:$0xff]
  %v70 = vld [vmem:[%s2 + $0x90] sm:$0xff]
  %v71 = vld [vmem:[%s2 + $0x98] sm:$0xff]
  %v72 = vld [vmem:[%s2 + $0xa0] sm:$0xff]
  %v73 = vld [vmem:[%s2 + $0xa8] sm:$0xff]
  %v74 = vld [vmem:[%s2 + $0xb0] sm:$0xff]
  %v75 = vld [vmem:[%s2 + $0xb8] sm:$0xff]
  %v76 = vld [vmem:[%s2 + $0xc0] sm:$0xff]
  %v77 = vld [vmem:[%s2 + $0xc8] sm:$0xff]
  %v78 = vld [vmem:[%s2 + $0xd0] sm:$0xff]
  %v79 = vld [vmem:[%s2 + $0xd8] sm:$0xff]
  %v80 = vld [vmem:[%s2 + $0xe0] sm:$0xff]
  %v81 = vld [vmem:[%s2 + $0xe8] sm:$0xff]
  %v82 = vld [vmem:[%s2 + $0xf0] sm:$0xff]
  %v83 = vld [vmem:[%s2 + $0xf8] sm:$0xff]
  %v84 = vld [vmem:[%s2 + $0x100] sm:$0xff]
  %v85 = vld [vmem:[%s2 + $0x108] sm:$0xff]
  %v86 = vld [vmem:[%s2 + $0x110] sm:$0xff]
  %v87 = vld [vmem:[%s2 + $0x118] sm:$0xff]
  %v88 = vld [vmem:[%s2 + $0x120] sm:$0xff]
  %v89 = vld [vmem:[%s2 + $0x128] sm:$0xff]
  %v90 = vld [vmem:[%s2 + $0x130] sm:$0xff]
  %v91 = vld [vmem:[%s2 + $0x138] sm:$0xff]
  %v92 = vld [vmem:[%s2 + $0x140] sm:$0xff]
  %v93 = vld [vmem:[%s2 + $0x148] sm:$0xff]
  %v94 = vld [vmem:[%s2 + $0x150] sm:$0xff]
  %v95 = vld [vmem:[%s2 + $0x158] sm:$0xff]
  %v96 = vld [vmem:[%s2 + $0x160] sm:$0xff]
  %v97 = vld [vmem:[%s2 + $0x168] sm:$0xff]
  %v98 = vld [vmem:[%s2 + $0x170] sm:$0xff]
  %v99 = vld [vmem:[%s2 + $0x178] sm:$0xff]
  %v100 = vld [vmem:[%s2 + $0x180] sm:$0xff]
  %v101 = vld [vmem:[%s2 + $0x188] sm:$0xff]
  %v102 = vld [vmem:[%s2 + $0x190] sm:$0xff]
  %v103 = vld [vmem:[%s2 + $0x198] sm:$0xff]
  %v104 = vld [vmem:[%s2 + $0x1a0] sm:$0xff]
  %v105 = vld [vmem:[%s2 + $0x1a8] sm:$0xff]
  %v106 = vld [vmem:[%s2 + $0x1b0] sm:$0xff]
  %v107 = vld [vmem:[%s2 + $0x1b8] sm:$0xff]
  %v108 = vld [vmem:[%s2 + $0x1c0] sm:$0xff]
  %v109 = vld [vmem:[%s2 + $0x1c8] sm:$0xff]
  %v110 = vld [vmem:[%s2 + $0x1d0] sm:$0xff]
  %v111 = vld [vmem:[%s2 + $0x1d8] sm:$0xff]
  %v112 = vld [vmem:[%s2 + $0x1e0] sm:$0xff]
  %v113 = vld [vmem:[%s2 + $0x1e8] sm:$0xff]
  %v114 = vld [vmem:[%s2 + $0x1f0] sm:$0xff]
  %v115 = vld [vmem:[%s2 + $0x1f8] sm:$0xff]
  %116 = vmatprep.subr.mxu0 0.0
  %117 = vmatpush1.msra.mxu0 %v52
  %118 = vmatprep.subr.mxu0 0.0
  %119 = vmatpush1.msra.mxu0 %v53
  %120 = vmatprep.subr.mxu0 0.0
  %121 = vmatpush1.msra.mxu0 %v54
  %122 = vmatprep.subr.mxu0 0.0
  %123 = vmatpush1.msra.mxu0 %v55
  %124 = vmatprep.subr.mxu0 0.0
  %125 = vmatpush1.msra.mxu0 %v56
  %126 = vmatprep.subr.mxu0 0.0
  %127 = vmatpush1.msra.mxu0 %v57
  %128 = vmatprep.subr.mxu0 0.0
  %129 = vmatpush1.msra.mxu0 %v58
  %130 = vmatprep.subr.mxu0 0.0
  %131 = vmatpush1.msra.mxu0 %v59
  %132 = vmatprep.subr.mxu0 0.0
  %133 = vmatpush1.msra.mxu0 %v60
  %134 = vmatprep.subr.mxu0 0.0
  %135 = vmatpush1.msra.mxu0 %v61
  %136 = vmatprep.subr.mxu0 0.0
  %137 = vmatpush1.msra.mxu0 %v62
  %138 = vmatprep.subr.mxu0 0.0
  %139 = vmatpush1.msra.mxu0 %v63
  %140 = vmatprep.subr.mxu0 0.0
  %141 = vmatpush1.msra.mxu0 %v64
  %142 = vmatprep.subr.mxu0 0.0
  %143 = vmatpush1.msra.mxu0 %v65
  %144 = vmatprep.subr.mxu0 0.0
  %145 = vmatpush1.msra.mxu0 %v66
  %146 = vmatprep.subr.mxu0 0.0
  %147 = vmatpush1.msra.mxu0 %v67
  %148 = vmatprep.subr.mxu0 0.0
  %149 = vmatpush1.msra.mxu0 %v68
  %150 = vmatprep.subr.mxu0 0.0
  %151 = vmatpush1.msra.mxu0 %v69
  %152 = vmatprep.subr.mxu0 0.0
  %153 = vmatpush1.msra.mxu0 %v70
  %154 = vmatprep.subr.mxu0 0.0
  %155 = vmatpush1.msra.mxu0 %v71
  %156 = vmatprep.subr.mxu0 0.0
  %157 = vmatpush1.msra.mxu0 %v72
  %158 = vmatprep.subr.mxu0 0.0
  %159 = vmatpush1.msra.mxu0 %v73
  %160 = vmatprep.subr.mxu0 0.0
  %161 = vmatpush1.msra.mxu0 %v74
  %162 = vmatprep.subr.mxu0 0.0
  %163 = vmatpush1.msra.mxu0 %v75
  %164 = vmatprep.subr.mxu0 0.0
  %165 = vmatpush1.msra.mxu0 %v76
  %166 = vmatprep.subr.mxu0 0.0
  %167 = vmatpush1.msra.mxu0 %v77
  %168 = vmatprep.subr.mxu0 0.0
  %169 = vmatpush1.msra.mxu0 %v78
  %170 = vmatprep.subr.mxu0 0.0
  %171 = vmatpush1.msra.mxu0 %v79
  %172 = vmatprep.subr.mxu0 0.0
  %173 = vmatpush1.msra.mxu0 %v80
  %174 = vmatprep.subr.mxu0 0.0
  %175 = vmatpush1.msra.mxu0 %v81
  %176 = vmatprep.subr.mxu0 0.0
  %177 = vmatpush1.msra.mxu0 %v82
  %178 = vmatprep.subr.mxu0 0.0
  %179 = vmatpush1.msra.mxu0 %v83
  %180 = vmatprep.mubr.f32.mxu0 %v37
  %181 = vmatmul.mubr.f32.gmra.mrb[0].mxu0 %v36
  %v182 = vpop.f32.mrb[0].mxu0
  %v183 = vadd.f32 0.0, %v182
  %v184 = vpop.f32.mrb[0].mxu0
  %185 = vmatprep.mubr.f32.mxu0 %v41
  %186 = vmatmul.mubr.f32.gmra.mrb[0].mxu0 %v40
  %v187 = vpop.f32.mrb[0].mxu0
  %v188 = vadd.f32 0.0, %v187
  %v189 = vpop.f32.mrb[0].mxu0
  %190 = vmatprep.mubr.f32.mxu0 %v45
  %191 = vmatmul.mubr.f32.gmra.mrb[0].mxu0 %v44
  %v192 = vpop.f32.mrb[0].mxu0
  %v193 = vadd.f32 0.0, %v192
  %v194 = vpop.f32.mrb[0].mxu0
  %195 = vmatprep.mubr.f32.mxu0 %v49
  %196 = vmatmul.mubr.f32.gmra.mrb[0].mxu0 %v48
  %v197 = vpop.f32.mrb[0].mxu0
  %v198 = vadd.f32 0.0, %v197
  %v199 = vpop.f32.mrb[0].mxu0
  %200 = vdwg.mxu0
  %201 = vmatprep.subr.mxu0 0.0
  %202 = vmatpush1.msra.mxu0 %v84
  %203 = vmatprep.subr.mxu0 0.0
  %204 = vmatpush1.msra.mxu0 %v85
  %205 = vmatprep.subr.mxu0 0.0
  %206 = vmatpush1.msra.mxu0 %v86
  %207 = vmatprep.subr.mxu0 0.0
  %208 = vmatpush1.msra.mxu0 %v87
  %209 = vmatprep.subr.mxu0 0.0
  %210 = vmatpush1.msra.mxu0 %v88
  %211 = vmatprep.subr.mxu0 0.0
  %212 = vmatpush1.msra.mxu0 %v89
  %213 = vmatprep.subr.mxu0 0.0
  %214 = vmatpush1.msra.mxu0 %v90
  %215 = vmatprep.subr.mxu0 0.0
  %216 = vmatpush1.msra.mxu0 %v91
  %217 = vmatprep.subr.mxu0 0.0
  %218 = vmatpush1.msra.mxu0 %v92
  %219 = vmatprep.subr.mxu0 0.0
  %220 = vmatpush1.msra.mxu0 %v93
  %221 = vmatprep.subr.mxu0 0.0
  %222 = vmatpush1.msra.mxu0 %v94
  %223 = vmatprep.subr.mxu0 0.0
  %224 = vmatpush1.msra.mxu0 %v95
  %225 = vmatprep.subr.mxu0 0.0
  %226 = vmatpush1.msra.mxu0 %v96
  %227 = vmatprep.subr.mxu0 0.0
  %228 = vmatpush1.msra.mxu0 %v97
  %229 = vmatprep.subr.mxu0 0.0
  %230 = vmatpush1.msra.mxu0 %v98
  %231 = vmatprep.subr.mxu0 0.0
  %232 = vmatpush1.msra.mxu0 %v99
  %233 = vmatprep.subr.mxu0 0.0
  %234 = vmatpush1.msra.mxu0 %v100
  %235 = vmatprep.subr.mxu0 0.0
  %236 = vmatpush1.msra.mxu0 %v101
  %237 = vmatprep.subr.mxu0 0.0
  %238 = vmatpush1.msra.mxu0 %v102
  %239 = vmatprep.subr.mxu0 0.0
  %240 = vmatpush1.msra.mxu0 %v103
  %241 = vmatprep.subr.mxu0 0.0
  %242 = vmatpush1.msra.mxu0 %v104
  %243 = vmatprep.subr.mxu0 0.0
  %244 = vmatpush1.msra.mxu0 %v105
  %245 = vmatprep.subr.mxu0 0.0
  %246 = vmatpush1.msra.mxu0 %v106
  %247 = vmatprep.subr.mxu0 0.0
  %248 = vmatpush1.msra.mxu0 %v107
  %249 = vmatprep.subr.mxu0 0.0
  %250 = vmatpush1.msra.mxu0 %v108
  %251 = vmatprep.subr.mxu0 0.0
  %252 = vmatpush1.msra.mxu0 %v109
  %253 = vmatprep.subr.mxu0 0.0
  %254 = vmatpush1.msra.mxu0 %v110
  %255 = vmatprep.subr.mxu0 0.0
  %256 = vmatpush1.msra.mxu0 %v111
  %257 = vmatprep.subr.mxu0 0.0
  %258 = vmatpush1.msra.mxu0 %v112
  %259 = vmatprep.subr.mxu0 0.0
  %260 = vmatpush1.msra.mxu0 %v113
  %261 = vmatprep.subr.mxu0 0.0
  %262 = vmatpush1.msra.mxu0 %v114
  %263 = vmatprep.subr.mxu0 0.0
  %264 = vmatpush1.msra.mxu0 %v115
  %265 = vmatprep.mubr.f32.mxu0 %v39
  %266 = vmatmul.mubr.f32.gmra.mrb[0].mxu0 %v38
  %v267 = vpop.f32.mrb[0].mxu0
  %v268 = vadd.f32 %v183, %v267
  %v269 = vpop.f32.mrb[0].mxu0
  %270 = vmatprep.mubr.f32.mxu0 %v43
  %271 = vmatmul.mubr.f32.gmra.mrb[0].mxu0 %v42
  %v272 = vpop.f32.mrb[0].mxu0
  %v273 = vadd.f32 %v188, %v272
  %v274 = vpop.f32.mrb[0].mxu0
  %275 = vmatprep.mubr.f32.mxu0 %v47
  %276 = vmatmul.mubr.f32.gmra.mrb[0].mxu0 %v46
  %v277 = vpop.f32.mrb[0].mxu0
  %v278 = vadd.f32 %v193, %v277
  %v279 = vpop.f32.mrb[0].mxu0
  %280 = vmatprep.mubr.f32.mxu0 %v51
  %281 = vmatmul.mubr.f32.gmra.mrb[0].mxu0 %v50
  %v282 = vpop.f32.mrb[0].mxu0
  %v283 = vadd.f32 %v198, %v282
  %v284 = vpop.f32.mrb[0].mxu0
  %285 = vdwg.mxu0
  %v286 = vadd.f32 %v32, %v268
  %v287 = vadd.f32 %v33, %v273
  %v288 = vadd.f32 %v34, %v278
  %v289 = vadd.f32 %v35, %v283
  %vm290 = vcmask 261120
  %v291 = vsel %vm290, %v286, 0.0
  %292 = vadd.xlane.f32.xlu0 %v291
  %v293 = vpop.xlane.xlu0 %292
  %v294 = vsel %vm290, %v287, 0.0
  %295 = vadd.xlane.f32.xlu0 %v294
  %v296 = vpop.xlane.xlu0 %295
  %v297 = vsel %vm290, %v288, 0.0
  %298 = vadd.xlane.f32.xlu0 %v297
  %v299 = vpop.xlane.xlu0 %298
  %vm300 = vcmask 259072
  %v301 = vsel %vm300, %v289, 0.0
  %302 = vadd.xlane.f32.xlu0 %v301
  %v303 = vpop.xlane.xlu0 %302
  %v304 = vrcp.pop 32.0
  %v305 = vmul.f32 %v293, %v304
  %v306 = vmul.f32 %v296, %v304
  %v307 = vmul.f32 %v299, %v304
  %v308 = vmul.f32 %v303, %v304
  %v309 = vsub.f32 %v286, %v305
  %v310 = vsub.f32 %v287, %v306
  %v311 = vsub.f32 %v288, %v307
  %v312 = vsub.f32 %v289, %v308
  %v313 = vmul.f32 %v309, %v309
  %v314 = vmul.f32 %v310, %v310
  %v315 = vmul.f32 %v311, %v311
  %v316 = vmul.f32 %v312, %v312
  %v317 = vsel %vm290, %v313, 0.0
  %318 = vadd.xlane.f32.xlu0 %v317
  %v319 = vpop.xlane.xlu0 %318
  %v320 = vsel %vm290, %v314, 0.0
  %321 = vadd.xlane.f32.xlu0 %v320
  %v322 = vpop.xlane.xlu0 %321
  %v323 = vsel %vm290, %v315, 0.0
  %324 = vadd.xlane.f32.xlu0 %v323
  %v325 = vpop.xlane.xlu0 %324
  %v326 = vsel %vm300, %v316, 0.0
  %327 = vadd.xlane.f32.xlu0 %v326
  %v328 = vpop.xlane.xlu0 %327
  %v329 = vmul.f32 %v319, %v304
  %v330 = vmul.f32 %v322, %v304
  %v331 = vmul.f32 %v325, %v304
  %v332 = vmul.f32 %v328, %v304
  %v333 = vadd.f32 %v329, 1e-05
  %v334 = vadd.f32 %v330, 1e-05
  %v335 = vadd.f32 %v331, 1e-05
  %v336 = vadd.f32 %v332, 1e-05
  %v337 = vrsqrt.pop %v333
  %v338 = vrsqrt.pop %v334
  %v339 = vrsqrt.pop %v335
  %v340 = vrsqrt.pop %v336
  %v341 = vmul.f32 %v309, %v337
  %v342 = vmul.f32 %v310, %v338
  %v343 = vmul.f32 %v311, %v339
  %v344 = vmul.f32 %v312, %v340
  %v345 = vld [vmem:[%s3] sm:$0x1]
  %v347 = vlaneseq
  %v348 = vshrl.u32 %v347, 7
  %v349 = vsub.s32 0, %v348
  %v350 = vrot.slane %v345, %v349
  %v352 = vmul.f32 %v341, %v350
  %v353 = vmul.f32 %v342, %v350
  %v354 = vmul.f32 %v343, %v350
  %v355 = vmul.f32 %v344, %v350
  %v356 = vld [vmem:[%s4] sm:$0x1]
  %v358 = vlaneseq
  %v359 = vshrl.u32 %v358, 7
  %v360 = vsub.s32 0, %v359
  %v361 = vrot.slane %v356, %v360
  %v363 = vadd.f32 %v352, %v361
  %v364 = vadd.f32 %v353, %v361
  %v365 = vadd.f32 %v354, %v361
  %v366 = vadd.f32 %v355, %v361
  %v367 = vld [vmem:[%s5] sm:$0xff]
  %v368 = vld [vmem:[%s5 + $0x8] sm:$0xff]
  %v369 = vld [vmem:[%s5 + $0x10] sm:$0xff]
  %v370 = vld [vmem:[%s5 + $0x18] sm:$0xff]
  %v371 = vld [vmem:[%s6] sm:$0x1]
  %v373 = vlaneseq
  %v374 = vshrl.u32 %v373, 7
  %v375 = vsub.s32 0, %v374
  %v376 = vrot.slane %v371, %v375
  %v379 = vsel %vm290, %v363, 0
  %v382 = vsel %vm290, %v364, 0
  %v385 = vsel %vm290, %v365, 0
  %v388 = vsel %vm290, %v366, 0
  %390 = vmatprep.subr.mxu0 0.0
  %391 = vmatpush1.msra.mxu0 %v367
  %392 = vmatprep.subr.mxu0 0.0
  %393 = vmatpush1.msra.mxu0 %v368
  %394 = vmatprep.subr.mxu0 0.0
  %395 = vmatpush1.msra.mxu0 %v369
  %396 = vmatprep.subr.mxu0 0.0
  %397 = vmatpush1.msra.mxu0 %v370
  %398 = vmatprep.subr.mxu0 0.0
  %399 = vmatpush1.msra.mxu0 0.0
  %400 = vmatprep.subr.mxu0 0.0
  %401 = vmatpush1.msra.mxu0 0.0
  %402 = vmatprep.subr.mxu0 0.0
  %403 = vmatpush1.msra.mxu0 0.0
  %404 = vmatprep.subr.mxu0 0.0
  %405 = vmatpush1.msra.mxu0 0.0
  %406 = vmatprep.subr.mxu0 0.0
  %407 = vmatpush1.msra.mxu0 0.0
  %408 = vmatprep.subr.mxu0 0.0
  %409 = vmatpush1.msra.mxu0 0.0
  %410 = vmatprep.subr.mxu0 0.0
  %411 = vmatpush1.msra.mxu0 0.0
  %412 = vmatprep.subr.mxu0 0.0
  %413 = vmatpush1.msra.mxu0 0.0
  %414 = vmatprep.subr.mxu0 0.0
  %415 = vmatpush1.msra.mxu0 0.0
  %416 = vmatprep.subr.mxu0 0.0
  %417 = vmatpush1.msra.mxu0 0.0
  %418 = vmatprep.subr.mxu0 0.0
  %419 = vmatpush1.msra.mxu0 0.0
  %420 = vmatprep.subr.mxu0 0.0
  %421 = vmatpush1.msra.mxu0 0.0
  %422 = vmatprep.subr.mxu0 0.0
  %423 = vmatpush1.msra.mxu0 0.0
  %424 = vmatprep.subr.mxu0 0.0
  %425 = vmatpush1.msra.mxu0 0.0
  %426 = vmatprep.subr.mxu0 0.0
  %427 = vmatpush1.msra.mxu0 0.0
  %428 = vmatprep.subr.mxu0 0.0
  %429 = vmatpush1.msra.mxu0 0.0
  %430 = vmatprep.subr.mxu0 0.0
  %431 = vmatpush1.msra.mxu0 0.0
  %432 = vmatprep.subr.mxu0 0.0
  %433 = vmatpush1.msra.mxu0 0.0
  %434 = vmatprep.subr.mxu0 0.0
  %435 = vmatpush1.msra.mxu0 0.0
  %436 = vmatprep.subr.mxu0 0.0
  %437 = vmatpush1.msra.mxu0 0.0
  %438 = vmatprep.subr.mxu0 0.0
  %439 = vmatpush1.msra.mxu0 0.0
  %440 = vmatprep.subr.mxu0 0.0
  %441 = vmatpush1.msra.mxu0 0.0
  %442 = vmatprep.subr.mxu0 0.0
  %443 = vmatpush1.msra.mxu0 0.0
  %444 = vmatprep.subr.mxu0 0.0
  %445 = vmatpush1.msra.mxu0 0.0
  %446 = vmatprep.subr.mxu0 0.0
  %447 = vmatpush1.msra.mxu0 0.0
  %448 = vmatprep.subr.mxu0 0.0
  %449 = vmatpush1.msra.mxu0 0.0
  %450 = vmatprep.subr.mxu0 0.0
  %451 = vmatpush1.msra.mxu0 0.0
  %452 = vmatprep.subr.mxu0 0.0
  %453 = vmatpush1.msra.mxu0 0.0
  %454 = vmatprep.mubr.f32.mxu0 0.0
  %455 = vmatmul.mubr.f32.gmra.mrb[0].mxu0 %v379
  %v456 = vpop.f32.mrb[0].mxu0
  %v457 = vadd.f32 %v376, %v456
  %v458 = vpop.f32.mrb[0].mxu0
  %459 = vmatprep.mubr.f32.mxu0 0.0
  %460 = vmatmul.mubr.f32.gmra.mrb[0].mxu0 %v382
  %v461 = vpop.f32.mrb[0].mxu0
  %v462 = vadd.f32 %v376, %v461
  %v463 = vpop.f32.mrb[0].mxu0
  %464 = vmatprep.mubr.f32.mxu0 0.0
  %465 = vmatmul.mubr.f32.gmra.mrb[0].mxu0 %v385
  %v466 = vpop.f32.mrb[0].mxu0
  %v467 = vadd.f32 %v376, %v466
  %v468 = vpop.f32.mrb[0].mxu0
  %469 = vmatprep.mubr.f32.mxu0 0.0
  %470 = vmatmul.mubr.f32.gmra.mrb[0].mxu0 %v388
  %v471 = vpop.f32.mrb[0].mxu0
  %v472 = vadd.f32 %v376, %v471
  %v473 = vpop.f32.mrb[0].mxu0
  %474 = vdwg.mxu0
  %v475 = vmul.f32 %v457, 0.5
  %v476 = vmul.f32 %v462, 0.5
  %v477 = vmul.f32 %v467, 0.5
  %v478 = vmul.f32 %v472, 0.5
  %v479 = vmul.f32 %v457, 0.044715
  %v480 = vmul.f32 %v462, 0.044715
  %v481 = vmul.f32 %v467, 0.044715
  %v482 = vmul.f32 %v472, 0.044715
  %v483 = vmul.f32 %v479, %v457
  %v484 = vmul.f32 %v480, %v462
  %v485 = vmul.f32 %v481, %v467
  %v486 = vmul.f32 %v482, %v472
  %v487 = vmul.f32 %v483, %v457
  %v488 = vmul.f32 %v484, %v462
  %v489 = vmul.f32 %v485, %v467
  %v490 = vmul.f32 %v486, %v472
  %v491 = vadd.f32 %v457, %v487
  %v492 = vadd.f32 %v462, %v488
  %v493 = vadd.f32 %v467, %v489
  %v494 = vadd.f32 %v472, %v490
  %v495 = vmul.f32 %v491, 0.7978846
  %v496 = vmul.f32 %v492, 0.7978846
  %v497 = vmul.f32 %v493, 0.7978846
  %v498 = vmul.f32 %v494, 0.7978846
  %v499 = vtanh.pop %v495
  %v500 = vtanh.pop %v496
  %v501 = vtanh.pop %v497
  %v502 = vtanh.pop %v498
  %v503 = vadd.f32 %v499, 1.0
  %v504 = vadd.f32 %v500, 1.0
  %v505 = vadd.f32 %v501, 1.0
  %v506 = vadd.f32 %v502, 1.0
  %v507 = vmul.f32 %v475, %v503
  %v508 = vmul.f32 %v476, %v504
  %v509 = vmul.f32 %v477, %v505
  %v510 = vmul.f32 %v478, %v506
  %v511 = vld [vmem:[%s7] sm:$0xff]
  %v512 = vld [vmem:[%s7 + $0x8] sm:$0xff]
  %v513 = vld [vmem:[%s7 + $0x10] sm:$0xff]
  %v514 = vld [vmem:[%s7 + $0x18] sm:$0xff]
  %v515 = vld [vmem:[%s7 + $0x20] sm:$0xff]
  %v516 = vld [vmem:[%s7 + $0x28] sm:$0xff]
  %v517 = vld [vmem:[%s7 + $0x30] sm:$0xff]
  %v518 = vld [vmem:[%s7 + $0x38] sm:$0xff]
  %vm519 = vcmask 523264
  %v521 = vsel %vm519, %v507, 0
  %v524 = vsel %vm519, %v508, 0
  %v527 = vsel %vm519, %v509, 0
  %v530 = vsel %vm519, %v510, 0
  %532 = vmatprep.subr.mxu0 0.0
  %533 = vmatpush1.msra.mxu0 %v511
  %534 = vmatprep.subr.mxu0 0.0
  %535 = vmatpush1.msra.mxu0 %v512
  %536 = vmatprep.subr.mxu0 0.0
  %537 = vmatpush1.msra.mxu0 %v513
  %538 = vmatprep.subr.mxu0 0.0
  %539 = vmatpush1.msra.mxu0 %v514
  %540 = vmatprep.subr.mxu0 0.0
  %541 = vmatpush1.msra.mxu0 %v515
  %542 = vmatprep.subr.mxu0 0.0
  %543 = vmatpush1.msra.mxu0 %v516
  %544 = vmatprep.subr.mxu0 0.0
  %545 = vmatpush1.msra.mxu0 %v517
  %546 = vmatprep.subr.mxu0 0.0
  %547 = vmatpush1.msra.mxu0 %v518
  %548 = vmatprep.subr.mxu0 0.0
  %549 = vmatpush1.msra.mxu0 0.0
  %550 = vmatprep.subr.mxu0 0.0
  %551 = vmatpush1.msra.mxu0 0.0
  %552 = vmatprep.subr.mxu0 0.0
  %553 = vmatpush1.msra.mxu0 0.0
  %554 = vmatprep.subr.mxu0 0.0
  %555 = vmatpush1.msra.mxu0 0.0
  %556 = vmatprep.subr.mxu0 0.0
  %557 = vmatpush1.msra.mxu0 0.0
  %558 = vmatprep.subr.mxu0 0.0
  %559 = vmatpush1.msra.mxu0 0.0
  %560 = vmatprep.subr.mxu0 0.0
  %561 = vmatpush1.msra.mxu0 0.0
  %562 = vmatprep.subr.mxu0 0.0
  %563 = vmatpush1.msra.mxu0 0.0
  %564 = vmatprep.subr.mxu0 0.0
  %565 = vmatpush1.msra.mxu0 0.0
  %566 = vmatprep.subr.mxu0 0.0
  %567 = vmatpush1.msra.mxu0 0.0
  %568 = vmatprep.subr.mxu0 0.0
  %569 = vmatpush1.msra.mxu0 0.0
  %570 = vmatprep.subr.mxu0 0.0
  %571 = vmatpush1.msra.mxu0 0.0
  %572 = vmatprep.subr.mxu0 0.0
  %573 = vmatpush1.msra.mxu0 0.0
  %574 = vmatprep.subr.mxu0 0.0
  %575 = vmatpush1.msra.mxu0 0.0
  %576 = vmatprep.subr.mxu0 0.0
  %577 = vmatpush1.msra.mxu0 0.0
  %578 = vmatprep.subr.mxu0 0.0
  %579 = vmatpush1.msra.mxu0 0.0
  %580 = vmatprep.subr.mxu0 0.0
  %581 = vmatpush1.msra.mxu0 0.0
  %582 = vmatprep.subr.mxu0 0.0
  %583 = vmatpush1.msra.mxu0 0.0
  %584 = vmatprep.subr.mxu0 0.0
  %585 = vmatpush1.msra.mxu0 0.0
  %586 = vmatprep.subr.mxu0 0.0
  %587 = vmatpush1.msra.mxu0 0.0
  %588 = vmatprep.subr.mxu0 0.0
  %589 = vmatpush1.msra.mxu0 0.0
  %590 = vmatprep.subr.mxu0 0.0
  %591 = vmatpush1.msra.mxu0 0.0
  %592 = vmatprep.subr.mxu0 0.0
  %593 = vmatpush1.msra.mxu0 0.0
  %594 = vmatprep.subr.mxu0 0.0
  %595 = vmatpush1.msra.mxu0 0.0
  %596 = vmatprep.mubr.f32.mxu0 0.0
  %597 = vmatmul.mubr.f32.gmra.mrb[0].mxu0 %v521
  %v598 = vpop.f32.mrb[0].mxu0
  %v599 = vadd.f32 0.0, %v598
  %v600 = vpop.f32.mrb[0].mxu0
  %601 = vmatprep.mubr.f32.mxu0 0.0
  %602 = vmatmul.mubr.f32.gmra.mrb[0].mxu0 %v524
  %v603 = vpop.f32.mrb[0].mxu0
  %v604 = vadd.f32 0.0, %v603
  %v605 = vpop.f32.mrb[0].mxu0
  %606 = vmatprep.mubr.f32.mxu0 0.0
  %607 = vmatmul.mubr.f32.gmra.mrb[0].mxu0 %v527
  %v608 = vpop.f32.mrb[0].mxu0
  %v609 = vadd.f32 0.0, %v608
  %v610 = vpop.f32.mrb[0].mxu0
  %611 = vmatprep.mubr.f32.mxu0 0.0
  %612 = vmatmul.mubr.f32.gmra.mrb[0].mxu0 %v530
  %v613 = vpop.f32.mrb[0].mxu0
  %v614 = vadd.f32 0.0, %v613
  %v615 = vpop.f32.mrb[0].mxu0
  %616 = vdwg.mxu0
  %v617 = vadd.f32 %v286, %v599
  %v618 = vadd.f32 %v287, %v604
  %v619 = vadd.f32 %v288, %v609
  %v620 = vadd.f32 %v289, %v614
  %v621 = vld [vmem:[%s8] sm:$0x1]
  %v623 = vlaneseq
  %v624 = vshrl.u32 %v623, 7
  %v625 = vsub.s32 0, %v624
  %v626 = vrot.slane %v621, %v625
  %v628 = vadd.f32 %v617, %v626
  %v629 = vadd.f32 %v618, %v626
  %v630 = vadd.f32 %v619, %v626
  %v631 = vadd.f32 %v620, %v626
  %632 = vst.msk [vmem:[%s9] sm:$0xff] %vm290, %v628
  %633 = vst.msk [vmem:[%s9 + $0x8] sm:$0xff] %vm290, %v629
  %634 = vst.msk [vmem:[%s9 + $0x10] sm:$0xff] %vm290, %v630
  %635 = vst.msk [vmem:[%s9 + $0x18] sm:$0x3f] %vm300, %v631
  // Predicated region
  $region38: #{encoder_forward.11} parent=0 // pred_check
    _
  $region39: #{encoder_forward.11} parent=0 // pred_check_branch
    %637 = sbr.rel (0) target = $region41
  $region40: #{encoder_forward.11} parent=0 // pred_region
    _
  $region41: #{encoder_forward.11} parent=0 // pred_fallthru
    _
  // Predicated region
  $region42: #{encoder_forward.11} parent=0 // pred_check
    _
  $region43: #{encoder_forward.11} parent=0 // pred_check_branch
    %639 = sbr.rel (0) target = $region45
  $region44: #{encoder_forward.11} parent=0 // pred_region
    _
  $region45: #{encoder_forward.11} parent=0 // pred_fallthru
    _

</llo_original>
